<compile_context>
chip_gen: v5e
topology: v5e:2x2
jax: 0.10.0
libtpu: 0.0.40
codegen_flags: <defaults>
</compile_context>

<pallas_src>
import jax
import jax.numpy as jnp
from jax import lax
from jax.experimental import pallas as pl
from jax.experimental.pallas import tpu as pltpu

# ---- small, mt5-style config ----
B = 2            # batch
S = 8            # sequence length
D = 32           # d_model
H = 4            # attention heads
DH = D // H      # d_kv per head
DFF = 64         # d_ff
L = 2            # encoder layers
VOCAB = 128
NUM_BUCKETS = 8
MAX_DISTANCE = 16


# ----------------------------------------------------------------------------
# Single fused kernel: embedding lookup + encoder stack (x3 sequences stacked
# on batch) + final RMSNorm + unmasked mean-pool + fused Linear(3D -> 1).
# ----------------------------------------------------------------------------
def fused_preference_kernel(ids_ref, mask_ref, posb_ref, emb_ref,
                            attnw_ref, ffnw_ref, small_ref, out_ref):
    nb = mask_ref.shape[1]            # 3B
    s = mask_ref.shape[3]             # S
    vocab, d = emb_ref.shape
    n_heads = posb_ref.shape[0]
    dh = d // n_heads
    n_layers = attnw_ref.shape[0]
    dff2 = ffnw_ref.shape[2]          # 2 * DFF
    n = nb * s
    b = nb // 3

    # --- in-kernel embedding lookup: one-hot (iota) + lane-dense MXU matmul ---
    ids = ids_ref[...]                                              # (3B*S, 1) i32
    iota = lax.broadcasted_iota(jnp.int32, (n, vocab), 1)
    onehot = jnp.where(iota == ids, 1.0, 0.0)                       # (3B*S, VOCAB) f32
    x2 = jnp.dot(onehot, emb_ref[...],
                 preferred_element_type=jnp.float32)                # (3B*S, D)

    # --- layer-invariant additive attention bias as ONE (H, 3B, S, S) slab ---
    neg = (1.0 - mask_ref[...]) * (-1e9)                            # (1, 3B, 1, S)
    bias4 = posb_ref[...][:, None, :, :] + neg                      # (H, 3B, S, S)

    def rmsnorm(h, w):                                              # h:(N,D), w:(1,D)
        var = jnp.mean(h * h, axis=-1, keepdims=True)
        return h * lax.rsqrt(var + 1e-6) * w

    for l in range(n_layers):                                       # static unroll
        aw = attnw_ref[l]                                           # (D, 4D) = [wq|wk|wv|wo]
        fw = ffnw_ref[l]                                            # (D+2DFF, 2DFF)

        # --- self-attention block (pre-norm, T5: no 1/sqrt(dh) scaling) ---
        h2 = rmsnorm(x2, small_ref[l:l + 1, :])
        # One lane-dense (N,D)x(D,4D) MXU pass gives q|k|v (last D lanes unused).
        proj = jnp.dot(h2, aw, preferred_element_type=jnp.float32)  # (N, 4D)
        proj3 = proj.reshape(nb, s, 4 * d)

        heads = []
        for hh in range(n_heads):                                   # static unroll
            lo = hh * dh
            qh = proj3[:, :, lo:lo + dh]
            kh = proj3[:, :, d + lo:d + lo + dh]
            vh = proj3[:, :, 2 * d + lo:2 * d + lo + dh]
            scores = jnp.einsum('bqd,bkd->bqk', qh, kh,
                                preferred_element_type=jnp.float32)
            scores = scores + bias4[hh]
            scores = scores - jnp.max(scores, axis=-1, keepdims=True)
            p = jnp.exp(scores)
            p = p * pl.reciprocal(jnp.sum(p, axis=-1, keepdims=True),
                                  approx=True)
            heads.append(jnp.einsum('bqk,bkd->bqd', p, vh,
                                    preferred_element_type=jnp.float32))
        ctx = jnp.concatenate(heads, axis=-1).reshape(n, d)         # (N, D)
        x2 = x2 + jnp.dot(ctx, aw[:, 3 * d:],
                          preferred_element_type=jnp.float32)

        # --- gated-GeLU FFN (pre-norm, mt5 / T5 v1.1 style), fused wi_0|wi_1 ---
        h2 = rmsnorm(x2, small_ref[n_layers + l:n_layers + l + 1, :])
        up = jnp.dot(h2, fw[:d, :],
                     preferred_element_type=jnp.float32)            # (N, 2DFF) = [g|u]
        # roll by DFF (XLU) puts u under g; the garbage half is killed by the
        # zero rows [DFF:2DFF] of the packed down-projection weight.
        act = jax.nn.gelu(up, approximate=True) * pltpu.roll(
            up, shift=dff2 // 2, axis=1)
        x2 = x2 + jnp.dot(act, fw[d:, :d],
                          preferred_element_type=jnp.float32)

    x2 = rmsnorm(x2, small_ref[2 * n_layers:2 * n_layers + 1, :])
    # .mean(dim=1) in the reference is an UNMASKED mean over the sequence axis.
    pooled = jnp.mean(x2.reshape(nb, s, d), axis=1)                 # (3B, D)

    # --- fc: concat(source, good, bad) @ W + b as VPU mul + lane reductions ---
    r = 2 * n_layers + 1
    s0 = jnp.sum(pooled[:b] * small_ref[r:r + 1, :], axis=-1, keepdims=True)
    s1 = jnp.sum(pooled[b:2 * b] * small_ref[r + 1:r + 2, :], axis=-1, keepdims=True)
    s2 = jnp.sum(pooled[2 * b:] * small_ref[r + 2:r + 3, :], axis=-1, keepdims=True)
    out_ref[...] = s0 + s1 + s2 + small_ref[r + 3:r + 4, 0:1]       # (B, 1)


# ----------------------------------------------------------------------------
# Glue (plain JAX): packed parameter init, T5 relative-position bias.
# ----------------------------------------------------------------------------
def init_params(key):
    ks = jax.random.split(key, 10)

    def nrm(k, shape):
        return (0.02 * jax.random.normal(k, shape)).astype(jnp.float32)

    emb = nrm(ks[0], (VOCAB, D))
    relb = nrm(ks[1], (NUM_BUCKETS, H))

    # attention slab: [wq | wk | wv | wo] on the lane axis -> (L, D, 4D)
    wq, wk = nrm(ks[2], (L, D, D)), nrm(ks[3], (L, D, D))
    wv, wo = nrm(ks[4], (L, D, D)), nrm(ks[5], (L, D, D))
    attn_w = jnp.concatenate([wq, wk, wv, wo], axis=-1)

    # FFN slab: rows [0:D] = [wi_0 | wi_1]  (D, 2DFF)
    #           rows [D:D+2DFF] = wff zero-padded to (2DFF, 2DFF) (bottom half 0)
    wi0, wi1 = nrm(ks[6], (L, D, DFF)), nrm(ks[7], (L, D, DFF))
    wff = nrm(ks[8], (L, DFF, D))
    assert 2 * DFF >= D
    wi01 = jnp.concatenate([wi0, wi1], axis=-1)                     # (L, D, 2DFF)
    wff_rows = jnp.concatenate([wff, jnp.zeros_like(wff)], axis=1)  # (L, 2DFF, D)
    wff_blk = jnp.pad(wff_rows, ((0, 0), (0, 0), (0, 2 * DFF - D))) # (L, 2DFF, 2DFF)
    ffn_w = jnp.concatenate([wi01, wff_blk], axis=1)                # (L, D+2DFF, 2DFF)

    # norms + fc slab: [ln1(L) | ln2(L) | ln_final(1) | fc_w(3) | fc_b(1)] x D
    ln1 = jnp.ones((L, D), jnp.float32)
    ln2 = jnp.ones((L, D), jnp.float32)
    lnf = jnp.ones((1, D), jnp.float32)
    fc_w = nrm(ks[9], (3, D))            # nn.Linear(3D,1).weight reshaped to (3, D)
    fc_b = jnp.zeros((1, D), jnp.float32)  # only element [0,0] is the fc bias
    small_w = jnp.concatenate([ln1, ln2, lnf, fc_w, fc_b], axis=0)  # (2L+5, D)

    return dict(emb=emb, relb=relb, attn_w=attn_w, ffn_w=ffn_w, small_w=small_w)


def t5_rel_pos_bias(rel_emb, seq_len, num_buckets, max_distance):
    ctx = jnp.arange(seq_len)[:, None]
    mem = jnp.arange(seq_len)[None, :]
    rel = mem - ctx                                  # (S, S)
    nb = num_buckets // 2                            # bidirectional
    buckets = (rel > 0).astype(jnp.int32) * nb
    n = jnp.abs(rel)
    max_exact = nb // 2
    is_small = n < max_exact
    n_safe = jnp.maximum(n, 1)                       # avoid log(0); branch discarded below
    val_large = max_exact + (
        jnp.log(n_safe.astype(jnp.float32) / max_exact)
        / jnp.log(max_distance / max_exact) * (nb - max_exact)
    ).astype(jnp.int32)
    val_large = jnp.minimum(val_large, nb - 1)
    buckets = buckets + jnp.where(is_small, n, val_large)
    bias = rel_emb[buckets]                          # (S, S, H)
    return jnp.transpose(bias, (2, 0, 1)).astype(jnp.float32)   # (H, S, S)


@jax.jit
def preference_model(p, source, good_mt, bad_mt,
                     source_mask, good_mt_mask, bad_mt_mask):
    bsz, seq = source.shape
    pos_bias = t5_rel_pos_bias(p['relb'], seq, NUM_BUCKETS, MAX_DISTANCE)   # (H,S,S)
    # Stack the three sequences along the batch axis -> ONE fused kernel call.
    ids = jnp.concatenate([source, good_mt, bad_mt], axis=0).astype(jnp.int32)
    ids = ids.reshape(3 * bsz * seq, 1)                                      # (3B*S, 1)
    mask = jnp.concatenate([source_mask, good_mt_mask, bad_mt_mask], axis=0)
    mask = mask.astype(jnp.float32).reshape(1, 3 * bsz, 1, seq)              # (1,3B,1,S)

    vmem = pl.BlockSpec(memory_space=pltpu.MemorySpace.VMEM)
    return pl.pallas_call(
        fused_preference_kernel,
        out_shape=jax.ShapeDtypeStruct((bsz, 1), jnp.float32),
        in_specs=[vmem] * 7,
        out_specs=vmem,
    )(ids, mask, pos_bias, p['emb'], p['attn_w'], p['ffn_w'], p['small_w'])


if __name__ == "__main__":
    key = jax.random.PRNGKey(0)
    k_param, k_s, k_g, k_b = jax.random.split(key, 4)
    params = init_params(k_param)

    source = jax.random.randint(k_s, (B, S), 0, VOCAB, dtype=jnp.int32)
    good_mt = jax.random.randint(k_g, (B, S), 0, VOCAB, dtype=jnp.int32)
    bad_mt = jax.random.randint(k_b, (B, S), 0, VOCAB, dtype=jnp.int32)

    # attention masks: 1 for real tokens, 0 for padding (pad the tail).
    src_mask = (jnp.arange(S)[None, :] < jnp.array([[S], [S - 2]])).astype(jnp.float32)
    good_mask = (jnp.arange(S)[None, :] < jnp.array([[S - 1], [S]])).astype(jnp.float32)
    bad_mask = (jnp.arange(S)[None, :] < jnp.array([[S], [S - 3]])).astype(jnp.float32)

    logits = preference_model(params, source, good_mt, bad_mt,
                              src_mask, good_mask, bad_mask)
    logits = jax.block_until_ready(logits)
    assert logits.shape == (B, 1) and logits.dtype == jnp.float32
    assert bool(jnp.all(jnp.isfinite(logits)))
    print("KERNEL_OK")
</pallas_src>

<mosaic_0001>
module attributes {stable_mosaic.version = 11 : i64} {
  func.func @fused_preference_kernel(%arg0: memref<48x1xi32, #tpu.memory_space<vmem>>, %arg1: memref<1x6x1x8xf32, #tpu.memory_space<vmem>>, %arg2: memref<4x8x8xf32, #tpu.memory_space<vmem>>, %arg3: memref<128x32xf32, #tpu.memory_space<vmem>>, %arg4: memref<2x32x128xf32, #tpu.memory_space<vmem>>, %arg5: memref<2x160x128xf32, #tpu.memory_space<vmem>>, %arg6: memref<9x32xf32, #tpu.memory_space<vmem>>, %arg7: memref<2x1xf32, #tpu.memory_space<vmem>>) attributes {dimension_semantics = [], scalar_prefetch = 0 : i64, scratch_operands = 0 : i64, tpu.core_type = #tpu.core_type<tc>} {
    %c0 = arith.constant 0 : index
    %c0_0 = arith.constant 0 : index
    %0 = vector.load %arg0[%c0, %c0_0] : memref<48x1xi32, #tpu.memory_space<vmem>>, vector<48x1xi32>
    %1 = tpu.iota {dimensions = array<i32: 1>} : vector<48x128xi32>
    %2 = vector.broadcast %0 : vector<48x1xi32> to vector<48x128xi32>
    %3 = arith.cmpi eq, %1, %2 : vector<48x128xi32>
    %cst = arith.constant 1.000000e+00 : f32
    %cst_1 = arith.constant 0.000000e+00 : f32
    %4 = vector.broadcast %cst : f32 to vector<48x128xf32>
    %5 = vector.broadcast %cst_1 : f32 to vector<48x128xf32>
    %6 = arith.select %3, %4, %5 : vector<48x128xi1>, vector<48x128xf32>
    %c0_2 = arith.constant 0 : index
    %c0_3 = arith.constant 0 : index
    %7 = vector.load %arg3[%c0_2, %c0_3] : memref<128x32xf32, #tpu.memory_space<vmem>>, vector<128x32xf32>
    %cst_4 = arith.constant dense<0.000000e+00> : vector<48x32xf32>
    %8 = tpu.matmul %6, %7, %cst_4 {dimension_numbers = #tpu.dot_dimension_numbers<[1], [0], [0], [1], [0, 0, 1, 1], [], []>} : vector<48x128xf32>, vector<128x32xf32>, vector<48x32xf32> -> vector<48x32xf32>
    %c0_5 = arith.constant 0 : index
    %c0_6 = arith.constant 0 : index
    %c0_7 = arith.constant 0 : index
    %c0_8 = arith.constant 0 : index
    %9 = vector.load %arg1[%c0_5, %c0_6, %c0_7, %c0_8] : memref<1x6x1x8xf32, #tpu.memory_space<vmem>>, vector<1x6x1x8xf32>
    %cst_9 = arith.constant 1.000000e+00 : f32
    %10 = vector.broadcast %cst_9 : f32 to vector<1x6x1x8xf32>
    %11 = arith.subf %10, %9 : vector<1x6x1x8xf32>
    %cst_10 = arith.constant -1.000000e+09 : f32
    %12 = vector.broadcast %cst_10 : f32 to vector<1x6x1x8xf32>
    %13 = arith.mulf %11, %12 : vector<1x6x1x8xf32>
    %c0_11 = arith.constant 0 : index
    %c0_12 = arith.constant 0 : index
    %c0_13 = arith.constant 0 : index
    %14 = vector.load %arg2[%c0_11, %c0_12, %c0_13] : memref<4x8x8xf32, #tpu.memory_space<vmem>>, vector<4x8x8xf32>
    %15 = vector.shape_cast %14 : vector<4x8x8xf32> to vector<4x1x8x8xf32>
    %16 = vector.broadcast %15 : vector<4x1x8x8xf32> to vector<4x6x8x8xf32>
    %17 = vector.broadcast %13 : vector<1x6x1x8xf32> to vector<4x6x8x8xf32>
    %18 = arith.addf %16, %17 : vector<4x6x8x8xf32>
    %c0_14 = arith.constant 0 : index
    %c0_15 = arith.constant 0 : index
    %c0_16 = arith.constant 0 : index
    %19 = vector.load %arg4[%c0_14, %c0_15, %c0_16] : memref<2x32x128xf32, #tpu.memory_space<vmem>>, vector<1x32x128xf32>
    %20 = vector.shape_cast %19 : vector<1x32x128xf32> to vector<32x128xf32>
    %c0_17 = arith.constant 0 : index
    %c0_18 = arith.constant 0 : index
    %c0_19 = arith.constant 0 : index
    %21 = vector.load %arg5[%c0_17, %c0_18, %c0_19] : memref<2x160x128xf32, #tpu.memory_space<vmem>>, vector<1x160x128xf32>
    %22 = vector.shape_cast %21 : vector<1x160x128xf32> to vector<160x128xf32>
    %c0_20 = arith.constant 0 : index
    %c0_21 = arith.constant 0 : index
    %23 = vector.load %arg6[%c0_20, %c0_21] : memref<9x32xf32, #tpu.memory_space<vmem>>, vector<1x32xf32>
    %24 = arith.mulf %8, %8 : vector<48x32xf32>
    %cst_22 = arith.constant dense<0.000000e+00> : vector<48xf32>
    %25 = vector.multi_reduction <add>, %24, %cst_22 [1] : vector<48x32xf32> to vector<48xf32>
    %26 = vector.shape_cast %25 : vector<48xf32> to vector<48x1xf32>
    %cst_23 = arith.constant 3.200000e+01 : f32
    %27 = vector.broadcast %cst_23 : f32 to vector<48x1xf32>
    %28 = arith.divf %26, %27 : vector<48x1xf32>
    %cst_24 = arith.constant 9.99999997E-7 : f32
    %29 = vector.broadcast %cst_24 : f32 to vector<48x1xf32>
    %30 = arith.addf %28, %29 : vector<48x1xf32>
    %31 = math.rsqrt %30 : vector<48x1xf32>
    %32 = vector.broadcast %31 : vector<48x1xf32> to vector<48x32xf32>
    %33 = arith.mulf %8, %32 : vector<48x32xf32>
    %34 = vector.broadcast %23 : vector<1x32xf32> to vector<48x32xf32>
    %35 = arith.mulf %33, %34 : vector<48x32xf32>
    %cst_25 = arith.constant dense<0.000000e+00> : vector<48x128xf32>
    %36 = tpu.matmul %35, %20, %cst_25 {dimension_numbers = #tpu.dot_dimension_numbers<[1], [0], [0], [1], [0, 0, 1, 1], [], []>} : vector<48x32xf32>, vector<32x128xf32>, vector<48x128xf32> -> vector<48x128xf32>
    %37 = vector.shape_cast %36 : vector<48x128xf32> to vector<6x8x128xf32>
    %38 = vector.extract_strided_slice %37 {offsets = [0, 0, 0], sizes = [6, 8, 8], strides = [1, 1, 1]} : vector<6x8x128xf32> to vector<6x8x8xf32>
    %39 = vector.extract_strided_slice %37 {offsets = [0, 0, 32], sizes = [6, 8, 8], strides = [1, 1, 1]} : vector<6x8x128xf32> to vector<6x8x8xf32>
    %40 = vector.extract_strided_slice %37 {offsets = [0, 0, 64], sizes = [6, 8, 8], strides = [1, 1, 1]} : vector<6x8x128xf32> to vector<6x8x8xf32>
    "tpu.trace_start"() <{level = 10 : i32, message = "bqd,bkd->bqk"}> : () -> ()
    %cst_26 = arith.constant dense<0.000000e+00> : vector<6x8x8xf32>
    %41 = tpu.matmul %38, %39, %cst_26 {dimension_numbers = #tpu.dot_dimension_numbers<[2], [2], [1], [1], [0, 0, 0, 1, 1, 1], [0], [0]>} : vector<6x8x8xf32>, vector<6x8x8xf32>, vector<6x8x8xf32> -> vector<6x8x8xf32>
    "tpu.trace_stop"() : () -> ()
    %42 = vector.extract_strided_slice %18 {offsets = [0, 0, 0, 0], sizes = [1, 6, 8, 8], strides = [1, 1, 1, 1]} : vector<4x6x8x8xf32> to vector<1x6x8x8xf32>
    %43 = vector.shape_cast %42 : vector<1x6x8x8xf32> to vector<6x8x8xf32>
    %44 = arith.addf %41, %43 : vector<6x8x8xf32>
    %cst_27 = arith.constant dense<0xFF800000> : vector<6x8xf32>
    %45 = vector.multi_reduction <maximumf>, %44, %cst_27 [2] : vector<6x8x8xf32> to vector<6x8xf32>
    %46 = vector.shape_cast %45 : vector<6x8xf32> to vector<6x8x1xf32>
    %47 = vector.broadcast %46 : vector<6x8x1xf32> to vector<6x8x8xf32>
    %48 = arith.subf %44, %47 : vector<6x8x8xf32>
    %49 = math.exp %48 : vector<6x8x8xf32>
    %cst_28 = arith.constant dense<0.000000e+00> : vector<6x8xf32>
    %50 = vector.multi_reduction <add>, %49, %cst_28 [2] : vector<6x8x8xf32> to vector<6x8xf32>
    %51 = vector.shape_cast %50 : vector<6x8xf32> to vector<6x8x1xf32>
    %52 = tpu.reciprocal %51 {approx = true} : vector<6x8x1xf32> -> vector<6x8x1xf32>
    %53 = vector.broadcast %52 : vector<6x8x1xf32> to vector<6x8x8xf32>
    %54 = arith.mulf %49, %53 : vector<6x8x8xf32>
    "tpu.trace_start"() <{level = 10 : i32, message = "bqk,bkd->bqd"}> : () -> ()
    %cst_29 = arith.constant dense<0.000000e+00> : vector<6x8x8xf32>
    %55 = tpu.matmul %54, %40, %cst_29 {dimension_numbers = #tpu.dot_dimension_numbers<[2], [1], [1], [2], [0, 0, 0, 1, 1, 2], [0], [0]>} : vector<6x8x8xf32>, vector<6x8x8xf32>, vector<6x8x8xf32> -> vector<6x8x8xf32>
    "tpu.trace_stop"() : () -> ()
    %56 = vector.extract_strided_slice %37 {offsets = [0, 0, 8], sizes = [6, 8, 8], strides = [1, 1, 1]} : vector<6x8x128xf32> to vector<6x8x8xf32>
    %57 = vector.extract_strided_slice %37 {offsets = [0, 0, 40], sizes = [6, 8, 8], strides = [1, 1, 1]} : vector<6x8x128xf32> to vector<6x8x8xf32>
    %58 = vector.extract_strided_slice %37 {offsets = [0, 0, 72], sizes = [6, 8, 8], strides = [1, 1, 1]} : vector<6x8x128xf32> to vector<6x8x8xf32>
    "tpu.trace_start"() <{level = 10 : i32, message = "bqd,bkd->bqk"}> : () -> ()
    %cst_30 = arith.constant dense<0.000000e+00> : vector<6x8x8xf32>
    %59 = tpu.matmul %56, %57, %cst_30 {dimension_numbers = #tpu.dot_dimension_numbers<[2], [2], [1], [1], [0, 0, 0, 1, 1, 1], [0], [0]>} : vector<6x8x8xf32>, vector<6x8x8xf32>, vector<6x8x8xf32> -> vector<6x8x8xf32>
    "tpu.trace_stop"() : () -> ()
    %60 = vector.extract_strided_slice %18 {offsets = [1, 0, 0, 0], sizes = [1, 6, 8, 8], strides = [1, 1, 1, 1]} : vector<4x6x8x8xf32> to vector<1x6x8x8xf32>
    %61 = vector.shape_cast %60 : vector<1x6x8x8xf32> to vector<6x8x8xf32>
    %62 = arith.addf %59, %61 : vector<6x8x8xf32>
    %cst_31 = arith.constant dense<0xFF800000> : vector<6x8xf32>
    %63 = vector.multi_reduction <maximumf>, %62, %cst_31 [2] : vector<6x8x8xf32> to vector<6x8xf32>
    %64 = vector.shape_cast %63 : vector<6x8xf32> to vector<6x8x1xf32>
    %65 = vector.broadcast %64 : vector<6x8x1xf32> to vector<6x8x8xf32>
    %66 = arith.subf %62, %65 : vector<6x8x8xf32>
    %67 = math.exp %66 : vector<6x8x8xf32>
    %cst_32 = arith.constant dense<0.000000e+00> : vector<6x8xf32>
    %68 = vector.multi_reduction <add>, %67, %cst_32 [2] : vector<6x8x8xf32> to vector<6x8xf32>
    %69 = vector.shape_cast %68 : vector<6x8xf32> to vector<6x8x1xf32>
    %70 = tpu.reciprocal %69 {approx = true} : vector<6x8x1xf32> -> vector<6x8x1xf32>
    %71 = vector.broadcast %70 : vector<6x8x1xf32> to vector<6x8x8xf32>
    %72 = arith.mulf %67, %71 : vector<6x8x8xf32>
    "tpu.trace_start"() <{level = 10 : i32, message = "bqk,bkd->bqd"}> : () -> ()
    %cst_33 = arith.constant dense<0.000000e+00> : vector<6x8x8xf32>
    %73 = tpu.matmul %72, %58, %cst_33 {dimension_numbers = #tpu.dot_dimension_numbers<[2], [1], [1], [2], [0, 0, 0, 1, 1, 2], [0], [0]>} : vector<6x8x8xf32>, vector<6x8x8xf32>, vector<6x8x8xf32> -> vector<6x8x8xf32>
    "tpu.trace_stop"() : () -> ()
    %74 = vector.extract_strided_slice %37 {offsets = [0, 0, 16], sizes = [6, 8, 8], strides = [1, 1, 1]} : vector<6x8x128xf32> to vector<6x8x8xf32>
    %75 = vector.extract_strided_slice %37 {offsets = [0, 0, 48], sizes = [6, 8, 8], strides = [1, 1, 1]} : vector<6x8x128xf32> to vector<6x8x8xf32>
    %76 = vector.extract_strided_slice %37 {offsets = [0, 0, 80], sizes = [6, 8, 8], strides = [1, 1, 1]} : vector<6x8x128xf32> to vector<6x8x8xf32>
    "tpu.trace_start"() <{level = 10 : i32, message = "bqd,bkd->bqk"}> : () -> ()
    %cst_34 = arith.constant dense<0.000000e+00> : vector<6x8x8xf32>
    %77 = tpu.matmul %74, %75, %cst_34 {dimension_numbers = #tpu.dot_dimension_numbers<[2], [2], [1], [1], [0, 0, 0, 1, 1, 1], [0], [0]>} : vector<6x8x8xf32>, vector<6x8x8xf32>, vector<6x8x8xf32> -> vector<6x8x8xf32>
    "tpu.trace_stop"() : () -> ()
    %78 = vector.extract_strided_slice %18 {offsets = [2, 0, 0, 0], sizes = [1, 6, 8, 8], strides = [1, 1, 1, 1]} : vector<4x6x8x8xf32> to vector<1x6x8x8xf32>
    %79 = vector.shape_cast %78 : vector<1x6x8x8xf32> to vector<6x8x8xf32>
    %80 = arith.addf %77, %79 : vector<6x8x8xf32>
    %cst_35 = arith.constant dense<0xFF800000> : vector<6x8xf32>
    %81 = vector.multi_reduction <maximumf>, %80, %cst_35 [2] : vector<6x8x8xf32> to vector<6x8xf32>
    %82 = vector.shape_cast %81 : vector<6x8xf32> to vector<6x8x1xf32>
    %83 = vector.broadcast %82 : vector<6x8x1xf32> to vector<6x8x8xf32>
    %84 = arith.subf %80, %83 : vector<6x8x8xf32>
    %85 = math.exp %84 : vector<6x8x8xf32>
    %cst_36 = arith.constant dense<0.000000e+00> : vector<6x8xf32>
    %86 = vector.multi_reduction <add>, %85, %cst_36 [2] : vector<6x8x8xf32> to vector<6x8xf32>
    %87 = vector.shape_cast %86 : vector<6x8xf32> to vector<6x8x1xf32>
    %88 = tpu.reciprocal %87 {approx = true} : vector<6x8x1xf32> -> vector<6x8x1xf32>
    %89 = vector.broadcast %88 : vector<6x8x1xf32> to vector<6x8x8xf32>
    %90 = arith.mulf %85, %89 : vector<6x8x8xf32>
    "tpu.trace_start"() <{level = 10 : i32, message = "bqk,bkd->bqd"}> : () -> ()
    %cst_37 = arith.constant dense<0.000000e+00> : vector<6x8x8xf32>
    %91 = tpu.matmul %90, %76, %cst_37 {dimension_numbers = #tpu.dot_dimension_numbers<[2], [1], [1], [2], [0, 0, 0, 1, 1, 2], [0], [0]>} : vector<6x8x8xf32>, vector<6x8x8xf32>, vector<6x8x8xf32> -> vector<6x8x8xf32>
    "tpu.trace_stop"() : () -> ()
    %92 = vector.extract_strided_slice %37 {offsets = [0, 0, 24], sizes = [6, 8, 8], strides = [1, 1, 1]} : vector<6x8x128xf32> to vector<6x8x8xf32>
    %93 = vector.extract_strided_slice %37 {offsets = [0, 0, 56], sizes = [6, 8, 8], strides = [1, 1, 1]} : vector<6x8x128xf32> to vector<6x8x8xf32>
    %94 = vector.extract_strided_slice %37 {offsets = [0, 0, 88], sizes = [6, 8, 8], strides = [1, 1, 1]} : vector<6x8x128xf32> to vector<6x8x8xf32>
    "tpu.trace_start"() <{level = 10 : i32, message = "bqd,bkd->bqk"}> : () -> ()
    %cst_38 = arith.constant dense<0.000000e+00> : vector<6x8x8xf32>
    %95 = tpu.matmul %92, %93, %cst_38 {dimension_numbers = #tpu.dot_dimension_numbers<[2], [2], [1], [1], [0, 0, 0, 1, 1, 1], [0], [0]>} : vector<6x8x8xf32>, vector<6x8x8xf32>, vector<6x8x8xf32> -> vector<6x8x8xf32>
    "tpu.trace_stop"() : () -> ()
    %96 = vector.extract_strided_slice %18 {offsets = [3, 0, 0, 0], sizes = [1, 6, 8, 8], strides = [1, 1, 1, 1]} : vector<4x6x8x8xf32> to vector<1x6x8x8xf32>
    %97 = vector.shape_cast %96 : vector<1x6x8x8xf32> to vector<6x8x8xf32>
    %98 = arith.addf %95, %97 : vector<6x8x8xf32>
    %cst_39 = arith.constant dense<0xFF800000> : vector<6x8xf32>
    %99 = vector.multi_reduction <maximumf>, %98, %cst_39 [2] : vector<6x8x8xf32> to vector<6x8xf32>
    %100 = vector.shape_cast %99 : vector<6x8xf32> to vector<6x8x1xf32>
    %101 = vector.broadcast %100 : vector<6x8x1xf32> to vector<6x8x8xf32>
    %102 = arith.subf %98, %101 : vector<6x8x8xf32>
    %103 = math.exp %102 : vector<6x8x8xf32>
    %cst_40 = arith.constant dense<0.000000e+00> : vector<6x8xf32>
    %104 = vector.multi_reduction <add>, %103, %cst_40 [2] : vector<6x8x8xf32> to vector<6x8xf32>
    %105 = vector.shape_cast %104 : vector<6x8xf32> to vector<6x8x1xf32>
    %106 = tpu.reciprocal %105 {approx = true} : vector<6x8x1xf32> -> vector<6x8x1xf32>
    %107 = vector.broadcast %106 : vector<6x8x1xf32> to vector<6x8x8xf32>
    %108 = arith.mulf %103, %107 : vector<6x8x8xf32>
    "tpu.trace_start"() <{level = 10 : i32, message = "bqk,bkd->bqd"}> : () -> ()
    %cst_41 = arith.constant dense<0.000000e+00> : vector<6x8x8xf32>
    %109 = tpu.matmul %108, %94, %cst_41 {dimension_numbers = #tpu.dot_dimension_numbers<[2], [1], [1], [2], [0, 0, 0, 1, 1, 2], [0], [0]>} : vector<6x8x8xf32>, vector<6x8x8xf32>, vector<6x8x8xf32> -> vector<6x8x8xf32>
    "tpu.trace_stop"() : () -> ()
    %110 = tpu.concatenate %55, %73, %91, %109 in 2 : vector<6x8x8xf32>, vector<6x8x8xf32>, vector<6x8x8xf32>, vector<6x8x8xf32> -> vector<6x8x32xf32>
    %111 = vector.shape_cast %110 : vector<6x8x32xf32> to vector<48x32xf32>
    %112 = vector.extract_strided_slice %20 {offsets = [0, 96], sizes = [32, 32], strides = [1, 1]} : vector<32x128xf32> to vector<32x32xf32>
    %cst_42 = arith.constant dense<0.000000e+00> : vector<48x32xf32>
    %113 = tpu.matmul %111, %112, %cst_42 {dimension_numbers = #tpu.dot_dimension_numbers<[1], [0], [0], [1], [0, 0, 1, 1], [], []>} : vector<48x32xf32>, vector<32x32xf32>, vector<48x32xf32> -> vector<48x32xf32>
    %114 = arith.addf %8, %113 : vector<48x32xf32>
    %c2 = arith.constant 2 : index
    %c0_43 = arith.constant 0 : index
    %115 = vector.load %arg6[%c2, %c0_43] : memref<9x32xf32, #tpu.memory_space<vmem>>, vector<1x32xf32>
    %116 = arith.mulf %114, %114 : vector<48x32xf32>
    %cst_44 = arith.constant dense<0.000000e+00> : vector<48xf32>
    %117 = vector.multi_reduction <add>, %116, %cst_44 [1] : vector<48x32xf32> to vector<48xf32>
    %118 = vector.shape_cast %117 : vector<48xf32> to vector<48x1xf32>
    %cst_45 = arith.constant 3.200000e+01 : f32
    %119 = vector.broadcast %cst_45 : f32 to vector<48x1xf32>
    %120 = arith.divf %118, %119 : vector<48x1xf32>
    %cst_46 = arith.constant 9.99999997E-7 : f32
    %121 = vector.broadcast %cst_46 : f32 to vector<48x1xf32>
    %122 = arith.addf %120, %121 : vector<48x1xf32>
    %123 = math.rsqrt %122 : vector<48x1xf32>
    %124 = vector.broadcast %123 : vector<48x1xf32> to vector<48x32xf32>
    %125 = arith.mulf %114, %124 : vector<48x32xf32>
    %126 = vector.broadcast %115 : vector<1x32xf32> to vector<48x32xf32>
    %127 = arith.mulf %125, %126 : vector<48x32xf32>
    %128 = vector.extract_strided_slice %22 {offsets = [0, 0], sizes = [32, 128], strides = [1, 1]} : vector<160x128xf32> to vector<32x128xf32>
    %cst_47 = arith.constant dense<0.000000e+00> : vector<48x128xf32>
    %129 = tpu.matmul %127, %128, %cst_47 {dimension_numbers = #tpu.dot_dimension_numbers<[1], [0], [0], [1], [0, 0, 1, 1], [], []>} : vector<48x32xf32>, vector<32x128xf32>, vector<48x128xf32> -> vector<48x128xf32>
    %130 = arith.mulf %129, %129 : vector<48x128xf32>
    %131 = arith.mulf %129, %130 : vector<48x128xf32>
    %cst_48 = arith.constant 4.471500e-02 : f32
    %132 = vector.broadcast %cst_48 : f32 to vector<48x128xf32>
    %133 = arith.mulf %132, %131 : vector<48x128xf32>
    %134 = arith.addf %129, %133 : vector<48x128xf32>
    %cst_49 = arith.constant 0.797884583 : f32
    %135 = vector.broadcast %cst_49 : f32 to vector<48x128xf32>
    %136 = arith.mulf %135, %134 : vector<48x128xf32>
    %137 = math.tanh %136 : vector<48x128xf32>
    %cst_50 = arith.constant 1.000000e+00 : f32
    %138 = vector.broadcast %cst_50 : f32 to vector<48x128xf32>
    %139 = arith.addf %138, %137 : vector<48x128xf32>
    %cst_51 = arith.constant 5.000000e-01 : f32
    %140 = vector.broadcast %cst_51 : f32 to vector<48x128xf32>
    %141 = arith.mulf %140, %139 : vector<48x128xf32>
    %142 = arith.mulf %129, %141 : vector<48x128xf32>
    %c64_i32 = arith.constant 64 : i32
    %143 = tpu.dynamic_rotate %129 by %c64_i32 dim 1 : vector<48x128xf32>, i32 -> vector<48x128xf32>
    %144 = arith.mulf %142, %143 : vector<48x128xf32>
    %145 = vector.extract_strided_slice %22 {offsets = [32, 0], sizes = [128, 32], strides = [1, 1]} : vector<160x128xf32> to vector<128x32xf32>
    %cst_52 = arith.constant dense<0.000000e+00> : vector<48x32xf32>
    %146 = tpu.matmul %144, %145, %cst_52 {dimension_numbers = #tpu.dot_dimension_numbers<[1], [0], [0], [1], [0, 0, 1, 1], [], []>} : vector<48x128xf32>, vector<128x32xf32>, vector<48x32xf32> -> vector<48x32xf32>
    %147 = arith.addf %114, %146 : vector<48x32xf32>
    %c1 = arith.constant 1 : index
    %c0_53 = arith.constant 0 : index
    %c0_54 = arith.constant 0 : index
    %148 = vector.load %arg4[%c1, %c0_53, %c0_54] : memref<2x32x128xf32, #tpu.memory_space<vmem>>, vector<1x32x128xf32>
    %149 = vector.shape_cast %148 : vector<1x32x128xf32> to vector<32x128xf32>
    %c1_55 = arith.constant 1 : index
    %c0_56 = arith.constant 0 : index
    %c0_57 = arith.constant 0 : index
    %150 = vector.load %arg5[%c1_55, %c0_56, %c0_57] : memref<2x160x128xf32, #tpu.memory_space<vmem>>, vector<1x160x128xf32>
    %151 = vector.shape_cast %150 : vector<1x160x128xf32> to vector<160x128xf32>
    %c1_58 = arith.constant 1 : index
    %c0_59 = arith.constant 0 : index
    %152 = vector.load %arg6[%c1_58, %c0_59] : memref<9x32xf32, #tpu.memory_space<vmem>>, vector<1x32xf32>
    %153 = arith.mulf %147, %147 : vector<48x32xf32>
    %cst_60 = arith.constant dense<0.000000e+00> : vector<48xf32>
    %154 = vector.multi_reduction <add>, %153, %cst_60 [1] : vector<48x32xf32> to vector<48xf32>
    %155 = vector.shape_cast %154 : vector<48xf32> to vector<48x1xf32>
    %cst_61 = arith.constant 3.200000e+01 : f32
    %156 = vector.broadcast %cst_61 : f32 to vector<48x1xf32>
    %157 = arith.divf %155, %156 : vector<48x1xf32>
    %cst_62 = arith.constant 9.99999997E-7 : f32
    %158 = vector.broadcast %cst_62 : f32 to vector<48x1xf32>
    %159 = arith.addf %157, %158 : vector<48x1xf32>
    %160 = math.rsqrt %159 : vector<48x1xf32>
    %161 = vector.broadcast %160 : vector<48x1xf32> to vector<48x32xf32>
    %162 = arith.mulf %147, %161 : vector<48x32xf32>
    %163 = vector.broadcast %152 : vector<1x32xf32> to vector<48x32xf32>
    %164 = arith.mulf %162, %163 : vector<48x32xf32>
    %cst_63 = arith.constant dense<0.000000e+00> : vector<48x128xf32>
    %165 = tpu.matmul %164, %149, %cst_63 {dimension_numbers = #tpu.dot_dimension_numbers<[1], [0], [0], [1], [0, 0, 1, 1], [], []>} : vector<48x32xf32>, vector<32x128xf32>, vector<48x128xf32> -> vector<48x128xf32>
    %166 = vector.shape_cast %165 : vector<48x128xf32> to vector<6x8x128xf32>
    %167 = vector.extract_strided_slice %166 {offsets = [0, 0, 0], sizes = [6, 8, 8], strides = [1, 1, 1]} : vector<6x8x128xf32> to vector<6x8x8xf32>
    %168 = vector.extract_strided_slice %166 {offsets = [0, 0, 32], sizes = [6, 8, 8], strides = [1, 1, 1]} : vector<6x8x128xf32> to vector<6x8x8xf32>
    %169 = vector.extract_strided_slice %166 {offsets = [0, 0, 64], sizes = [6, 8, 8], strides = [1, 1, 1]} : vector<6x8x128xf32> to vector<6x8x8xf32>
    "tpu.trace_start"() <{level = 10 : i32, message = "bqd,bkd->bqk"}> : () -> ()
    %cst_64 = arith.constant dense<0.000000e+00> : vector<6x8x8xf32>
    %170 = tpu.matmul %167, %168, %cst_64 {dimension_numbers = #tpu.dot_dimension_numbers<[2], [2], [1], [1], [0, 0, 0, 1, 1, 1], [0], [0]>} : vector<6x8x8xf32>, vector<6x8x8xf32>, vector<6x8x8xf32> -> vector<6x8x8xf32>
    "tpu.trace_stop"() : () -> ()
    %171 = vector.extract_strided_slice %18 {offsets = [0, 0, 0, 0], sizes = [1, 6, 8, 8], strides = [1, 1, 1, 1]} : vector<4x6x8x8xf32> to vector<1x6x8x8xf32>
    %172 = vector.shape_cast %171 : vector<1x6x8x8xf32> to vector<6x8x8xf32>
    %173 = arith.addf %170, %172 : vector<6x8x8xf32>
    %cst_65 = arith.constant dense<0xFF800000> : vector<6x8xf32>
    %174 = vector.multi_reduction <maximumf>, %173, %cst_65 [2] : vector<6x8x8xf32> to vector<6x8xf32>
    %175 = vector.shape_cast %174 : vector<6x8xf32> to vector<6x8x1xf32>
    %176 = vector.broadcast %175 : vector<6x8x1xf32> to vector<6x8x8xf32>
    %177 = arith.subf %173, %176 : vector<6x8x8xf32>
    %178 = math.exp %177 : vector<6x8x8xf32>
    %cst_66 = arith.constant dense<0.000000e+00> : vector<6x8xf32>
    %179 = vector.multi_reduction <add>, %178, %cst_66 [2] : vector<6x8x8xf32> to vector<6x8xf32>
    %180 = vector.shape_cast %179 : vector<6x8xf32> to vector<6x8x1xf32>
    %181 = tpu.reciprocal %180 {approx = true} : vector<6x8x1xf32> -> vector<6x8x1xf32>
    %182 = vector.broadcast %181 : vector<6x8x1xf32> to vector<6x8x8xf32>
    %183 = arith.mulf %178, %182 : vector<6x8x8xf32>
    "tpu.trace_start"() <{level = 10 : i32, message = "bqk,bkd->bqd"}> : () -> ()
    %cst_67 = arith.constant dense<0.000000e+00> : vector<6x8x8xf32>
    %184 = tpu.matmul %183, %169, %cst_67 {dimension_numbers = #tpu.dot_dimension_numbers<[2], [1], [1], [2], [0, 0, 0, 1, 1, 2], [0], [0]>} : vector<6x8x8xf32>, vector<6x8x8xf32>, vector<6x8x8xf32> -> vector<6x8x8xf32>
    "tpu.trace_stop"() : () -> ()
    %185 = vector.extract_strided_slice %166 {offsets = [0, 0, 8], sizes = [6, 8, 8], strides = [1, 1, 1]} : vector<6x8x128xf32> to vector<6x8x8xf32>
    %186 = vector.extract_strided_slice %166 {offsets = [0, 0, 40], sizes = [6, 8, 8], strides = [1, 1, 1]} : vector<6x8x128xf32> to vector<6x8x8xf32>
    %187 = vector.extract_strided_slice %166 {offsets = [0, 0, 72], sizes = [6, 8, 8], strides = [1, 1, 1]} : vector<6x8x128xf32> to vector<6x8x8xf32>
    "tpu.trace_start"() <{level = 10 : i32, message = "bqd,bkd->bqk"}> : () -> ()
    %cst_68 = arith.constant dense<0.000000e+00> : vector<6x8x8xf32>
    %188 = tpu.matmul %185, %186, %cst_68 {dimension_numbers = #tpu.dot_dimension_numbers<[2], [2], [1], [1], [0, 0, 0, 1, 1, 1], [0], [0]>} : vector<6x8x8xf32>, vector<6x8x8xf32>, vector<6x8x8xf32> -> vector<6x8x8xf32>
    "tpu.trace_stop"() : () -> ()
    %189 = vector.extract_strided_slice %18 {offsets = [1, 0, 0, 0], sizes = [1, 6, 8, 8], strides = [1, 1, 1, 1]} : vector<4x6x8x8xf32> to vector<1x6x8x8xf32>
    %190 = vector.shape_cast %189 : vector<1x6x8x8xf32> to vector<6x8x8xf32>
    %191 = arith.addf %188, %190 : vector<6x8x8xf32>
    %cst_69 = arith.constant dense<0xFF800000> : vector<6x8xf32>
    %192 = vector.multi_reduction <maximumf>, %191, %cst_69 [2] : vector<6x8x8xf32> to vector<6x8xf32>
    %193 = vector.shape_cast %192 : vector<6x8xf32> to vector<6x8x1xf32>
    %194 = vector.broadcast %193 : vector<6x8x1xf32> to vector<6x8x8xf32>
    %195 = arith.subf %191, %194 : vector<6x8x8xf32>
    %196 = math.exp %195 : vector<6x8x8xf32>
    %cst_70 = arith.constant dense<0.000000e+00> : vector<6x8xf32>
    %197 = vector.multi_reduction <add>, %196, %cst_70 [2] : vector<6x8x8xf32> to vector<6x8xf32>
    %198 = vector.shape_cast %197 : vector<6x8xf32> to vector<6x8x1xf32>
    %199 = tpu.reciprocal %198 {approx = true} : vector<6x8x1xf32> -> vector<6x8x1xf32>
    %200 = vector.broadcast %199 : vector<6x8x1xf32> to vector<6x8x8xf32>
    %201 = arith.mulf %196, %200 : vector<6x8x8xf32>
    "tpu.trace_start"() <{level = 10 : i32, message = "bqk,bkd->bqd"}> : () -> ()
    %cst_71 = arith.constant dense<0.000000e+00> : vector<6x8x8xf32>
    %202 = tpu.matmul %201, %187, %cst_71 {dimension_numbers = #tpu.dot_dimension_numbers<[2], [1], [1], [2], [0, 0, 0, 1, 1, 2], [0], [0]>} : vector<6x8x8xf32>, vector<6x8x8xf32>, vector<6x8x8xf32> -> vector<6x8x8xf32>
    "tpu.trace_stop"() : () -> ()
    %203 = vector.extract_strided_slice %166 {offsets = [0, 0, 16], sizes = [6, 8, 8], strides = [1, 1, 1]} : vector<6x8x128xf32> to vector<6x8x8xf32>
    %204 = vector.extract_strided_slice %166 {offsets = [0, 0, 48], sizes = [6, 8, 8], strides = [1, 1, 1]} : vector<6x8x128xf32> to vector<6x8x8xf32>
    %205 = vector.extract_strided_slice %166 {offsets = [0, 0, 80], sizes = [6, 8, 8], strides = [1, 1, 1]} : vector<6x8x128xf32> to vector<6x8x8xf32>
    "tpu.trace_start"() <{level = 10 : i32, message = "bqd,bkd->bqk"}> : () -> ()
    %cst_72 = arith.constant dense<0.000000e+00> : vector<6x8x8xf32>
    %206 = tpu.matmul %203, %204, %cst_72 {dimension_numbers = #tpu.dot_dimension_numbers<[2], [2], [1], [1], [0, 0, 0, 1, 1, 1], [0], [0]>} : vector<6x8x8xf32>, vector<6x8x8xf32>, vector<6x8x8xf32> -> vector<6x8x8xf32>
    "tpu.trace_stop"() : () -> ()
    %207 = vector.extract_strided_slice %18 {offsets = [2, 0, 0, 0], sizes = [1, 6, 8, 8], strides = [1, 1, 1, 1]} : vector<4x6x8x8xf32> to vector<1x6x8x8xf32>
    %208 = vector.shape_cast %207 : vector<1x6x8x8xf32> to vector<6x8x8xf32>
    %209 = arith.addf %206, %208 : vector<6x8x8xf32>
    %cst_73 = arith.constant dense<0xFF800000> : vector<6x8xf32>
    %210 = vector.multi_reduction <maximumf>, %209, %cst_73 [2] : vector<6x8x8xf32> to vector<6x8xf32>
    %211 = vector.shape_cast %210 : vector<6x8xf32> to vector<6x8x1xf32>
    %212 = vector.broadcast %211 : vector<6x8x1xf32> to vector<6x8x8xf32>
    %213 = arith.subf %209, %212 : vector<6x8x8xf32>
    %214 = math.exp %213 : vector<6x8x8xf32>
    %cst_74 = arith.constant dense<0.000000e+00> : vector<6x8xf32>
    %215 = vector.multi_reduction <add>, %214, %cst_74 [2] : vector<6x8x8xf32> to vector<6x8xf32>
    %216 = vector.shape_cast %215 : vector<6x8xf32> to vector<6x8x1xf32>
    %217 = tpu.reciprocal %216 {approx = true} : vector<6x8x1xf32> -> vector<6x8x1xf32>
    %218 = vector.broadcast %217 : vector<6x8x1xf32> to vector<6x8x8xf32>
    %219 = arith.mulf %214, %218 : vector<6x8x8xf32>
    "tpu.trace_start"() <{level = 10 : i32, message = "bqk,bkd->bqd"}> : () -> ()
    %cst_75 = arith.constant dense<0.000000e+00> : vector<6x8x8xf32>
    %220 = tpu.matmul %219, %205, %cst_75 {dimension_numbers = #tpu.dot_dimension_numbers<[2], [1], [1], [2], [0, 0, 0, 1, 1, 2], [0], [0]>} : vector<6x8x8xf32>, vector<6x8x8xf32>, vector<6x8x8xf32> -> vector<6x8x8xf32>
    "tpu.trace_stop"() : () -> ()
    %221 = vector.extract_strided_slice %166 {offsets = [0, 0, 24], sizes = [6, 8, 8], strides = [1, 1, 1]} : vector<6x8x128xf32> to vector<6x8x8xf32>
    %222 = vector.extract_strided_slice %166 {offsets = [0, 0, 56], sizes = [6, 8, 8], strides = [1, 1, 1]} : vector<6x8x128xf32> to vector<6x8x8xf32>
    %223 = vector.extract_strided_slice %166 {offsets = [0, 0, 88], sizes = [6, 8, 8], strides = [1, 1, 1]} : vector<6x8x128xf32> to vector<6x8x8xf32>
    "tpu.trace_start"() <{level = 10 : i32, message = "bqd,bkd->bqk"}> : () -> ()
    %cst_76 = arith.constant dense<0.000000e+00> : vector<6x8x8xf32>
    %224 = tpu.matmul %221, %222, %cst_76 {dimension_numbers = #tpu.dot_dimension_numbers<[2], [2], [1], [1], [0, 0, 0, 1, 1, 1], [0], [0]>} : vector<6x8x8xf32>, vector<6x8x8xf32>, vector<6x8x8xf32> -> vector<6x8x8xf32>
    "tpu.trace_stop"() : () -> ()
    %225 = vector.extract_strided_slice %18 {offsets = [3, 0, 0, 0], sizes = [1, 6, 8, 8], strides = [1, 1, 1, 1]} : vector<4x6x8x8xf32> to vector<1x6x8x8xf32>
    %226 = vector.shape_cast %225 : vector<1x6x8x8xf32> to vector<6x8x8xf32>
    %227 = arith.addf %224, %226 : vector<6x8x8xf32>
    %cst_77 = arith.constant dense<0xFF800000> : vector<6x8xf32>
    %228 = vector.multi_reduction <maximumf>, %227, %cst_77 [2] : vector<6x8x8xf32> to vector<6x8xf32>
    %229 = vector.shape_cast %228 : vector<6x8xf32> to vector<6x8x1xf32>
    %230 = vector.broadcast %229 : vector<6x8x1xf32> to vector<6x8x8xf32>
    %231 = arith.subf %227, %230 : vector<6x8x8xf32>
    %232 = math.exp %231 : vector<6x8x8xf32>
    %cst_78 = arith.constant dense<0.000000e+00> : vector<6x8xf32>
    %233 = vector.multi_reduction <add>, %232, %cst_78 [2] : vector<6x8x8xf32> to vector<6x8xf32>
    %234 = vector.shape_cast %233 : vector<6x8xf32> to vector<6x8x1xf32>
    %235 = tpu.reciprocal %234 {approx = true} : vector<6x8x1xf32> -> vector<6x8x1xf32>
    %236 = vector.broadcast %235 : vector<6x8x1xf32> to vector<6x8x8xf32>
    %237 = arith.mulf %232, %236 : vector<6x8x8xf32>
    "tpu.trace_start"() <{level = 10 : i32, message = "bqk,bkd->bqd"}> : () -> ()
    %cst_79 = arith.constant dense<0.000000e+00> : vector<6x8x8xf32>
    %238 = tpu.matmul %237, %223, %cst_79 {dimension_numbers = #tpu.dot_dimension_numbers<[2], [1], [1], [2], [0, 0, 0, 1, 1, 2], [0], [0]>} : vector<6x8x8xf32>, vector<6x8x8xf32>, vector<6x8x8xf32> -> vector<6x8x8xf32>
    "tpu.trace_stop"() : () -> ()
    %239 = tpu.concatenate %184, %202, %220, %238 in 2 : vector<6x8x8xf32>, vector<6x8x8xf32>, vector<6x8x8xf32>, vector<6x8x8xf32> -> vector<6x8x32xf32>
    %240 = vector.shape_cast %239 : vector<6x8x32xf32> to vector<48x32xf32>
    %241 = vector.extract_strided_slice %149 {offsets = [0, 96], sizes = [32, 32], strides = [1, 1]} : vector<32x128xf32> to vector<32x32xf32>
    %cst_80 = arith.constant dense<0.000000e+00> : vector<48x32xf32>
    %242 = tpu.matmul %240, %241, %cst_80 {dimension_numbers = #tpu.dot_dimension_numbers<[1], [0], [0], [1], [0, 0, 1, 1], [], []>} : vector<48x32xf32>, vector<32x32xf32>, vector<48x32xf32> -> vector<48x32xf32>
    %243 = arith.addf %147, %242 : vector<48x32xf32>
    %c3 = arith.constant 3 : index
    %c0_81 = arith.constant 0 : index
    %244 = vector.load %arg6[%c3, %c0_81] : memref<9x32xf32, #tpu.memory_space<vmem>>, vector<1x32xf32>
    %245 = arith.mulf %243, %243 : vector<48x32xf32>
    %cst_82 = arith.constant dense<0.000000e+00> : vector<48xf32>
    %246 = vector.multi_reduction <add>, %245, %cst_82 [1] : vector<48x32xf32> to vector<48xf32>
    %247 = vector.shape_cast %246 : vector<48xf32> to vector<48x1xf32>
    %cst_83 = arith.constant 3.200000e+01 : f32
    %248 = vector.broadcast %cst_83 : f32 to vector<48x1xf32>
    %249 = arith.divf %247, %248 : vector<48x1xf32>
    %cst_84 = arith.constant 9.99999997E-7 : f32
    %250 = vector.broadcast %cst_84 : f32 to vector<48x1xf32>
    %251 = arith.addf %249, %250 : vector<48x1xf32>
    %252 = math.rsqrt %251 : vector<48x1xf32>
    %253 = vector.broadcast %252 : vector<48x1xf32> to vector<48x32xf32>
    %254 = arith.mulf %243, %253 : vector<48x32xf32>
    %255 = vector.broadcast %244 : vector<1x32xf32> to vector<48x32xf32>
    %256 = arith.mulf %254, %255 : vector<48x32xf32>
    %257 = vector.extract_strided_slice %151 {offsets = [0, 0], sizes = [32, 128], strides = [1, 1]} : vector<160x128xf32> to vector<32x128xf32>
    %cst_85 = arith.constant dense<0.000000e+00> : vector<48x128xf32>
    %258 = tpu.matmul %256, %257, %cst_85 {dimension_numbers = #tpu.dot_dimension_numbers<[1], [0], [0], [1], [0, 0, 1, 1], [], []>} : vector<48x32xf32>, vector<32x128xf32>, vector<48x128xf32> -> vector<48x128xf32>
    %259 = arith.mulf %258, %258 : vector<48x128xf32>
    %260 = arith.mulf %258, %259 : vector<48x128xf32>
    %cst_86 = arith.constant 4.471500e-02 : f32
    %261 = vector.broadcast %cst_86 : f32 to vector<48x128xf32>
    %262 = arith.mulf %261, %260 : vector<48x128xf32>
    %263 = arith.addf %258, %262 : vector<48x128xf32>
    %cst_87 = arith.constant 0.797884583 : f32
    %264 = vector.broadcast %cst_87 : f32 to vector<48x128xf32>
    %265 = arith.mulf %264, %263 : vector<48x128xf32>
    %266 = math.tanh %265 : vector<48x128xf32>
    %cst_88 = arith.constant 1.000000e+00 : f32
    %267 = vector.broadcast %cst_88 : f32 to vector<48x128xf32>
    %268 = arith.addf %267, %266 : vector<48x128xf32>
    %cst_89 = arith.constant 5.000000e-01 : f32
    %269 = vector.broadcast %cst_89 : f32 to vector<48x128xf32>
    %270 = arith.mulf %269, %268 : vector<48x128xf32>
    %271 = arith.mulf %258, %270 : vector<48x128xf32>
    %c64_i32_90 = arith.constant 64 : i32
    %272 = tpu.dynamic_rotate %258 by %c64_i32_90 dim 1 : vector<48x128xf32>, i32 -> vector<48x128xf32>
    %273 = arith.mulf %271, %272 : vector<48x128xf32>
    %274 = vector.extract_strided_slice %151 {offsets = [32, 0], sizes = [128, 32], strides = [1, 1]} : vector<160x128xf32> to vector<128x32xf32>
    %cst_91 = arith.constant dense<0.000000e+00> : vector<48x32xf32>
    %275 = tpu.matmul %273, %274, %cst_91 {dimension_numbers = #tpu.dot_dimension_numbers<[1], [0], [0], [1], [0, 0, 1, 1], [], []>} : vector<48x128xf32>, vector<128x32xf32>, vector<48x32xf32> -> vector<48x32xf32>
    %276 = arith.addf %243, %275 : vector<48x32xf32>
    %c4 = arith.constant 4 : index
    %c0_92 = arith.constant 0 : index
    %277 = vector.load %arg6[%c4, %c0_92] : memref<9x32xf32, #tpu.memory_space<vmem>>, vector<1x32xf32>
    %278 = arith.mulf %276, %276 : vector<48x32xf32>
    %cst_93 = arith.constant dense<0.000000e+00> : vector<48xf32>
    %279 = vector.multi_reduction <add>, %278, %cst_93 [1] : vector<48x32xf32> to vector<48xf32>
    %280 = vector.shape_cast %279 : vector<48xf32> to vector<48x1xf32>
    %cst_94 = arith.constant 3.200000e+01 : f32
    %281 = vector.broadcast %cst_94 : f32 to vector<48x1xf32>
    %282 = arith.divf %280, %281 : vector<48x1xf32>
    %cst_95 = arith.constant 9.99999997E-7 : f32
    %283 = vector.broadcast %cst_95 : f32 to vector<48x1xf32>
    %284 = arith.addf %282, %283 : vector<48x1xf32>
    %285 = math.rsqrt %284 : vector<48x1xf32>
    %286 = vector.broadcast %285 : vector<48x1xf32> to vector<48x32xf32>
    %287 = arith.mulf %276, %286 : vector<48x32xf32>
    %288 = vector.broadcast %277 : vector<1x32xf32> to vector<48x32xf32>
    %289 = arith.mulf %287, %288 : vector<48x32xf32>
    %290 = vector.shape_cast %289 : vector<48x32xf32> to vector<6x8x32xf32>
    %cst_96 = arith.constant dense<0.000000e+00> : vector<6x32xf32>
    %291 = vector.multi_reduction <add>, %290, %cst_96 [1] : vector<6x8x32xf32> to vector<6x32xf32>
    %cst_97 = arith.constant 8.000000e+00 : f32
    %292 = vector.broadcast %cst_97 : f32 to vector<6x32xf32>
    %293 = arith.divf %291, %292 : vector<6x32xf32>
    %294 = vector.extract_strided_slice %293 {offsets = [0, 0], sizes = [2, 32], strides = [1, 1]} : vector<6x32xf32> to vector<2x32xf32>
    %c5 = arith.constant 5 : index
    %c0_98 = arith.constant 0 : index
    %295 = vector.load %arg6[%c5, %c0_98] : memref<9x32xf32, #tpu.memory_space<vmem>>, vector<1x32xf32>
    %296 = vector.broadcast %295 : vector<1x32xf32> to vector<2x32xf32>
    %297 = arith.mulf %294, %296 : vector<2x32xf32>
    %cst_99 = arith.constant dense<0.000000e+00> : vector<2xf32>
    %298 = vector.multi_reduction <add>, %297, %cst_99 [1] : vector<2x32xf32> to vector<2xf32>
    %299 = vector.shape_cast %298 : vector<2xf32> to vector<2x1xf32>
    %300 = vector.extract_strided_slice %293 {offsets = [2, 0], sizes = [2, 32], strides = [1, 1]} : vector<6x32xf32> to vector<2x32xf32>
    %c6 = arith.constant 6 : index
    %c0_100 = arith.constant 0 : index
    %301 = vector.load %arg6[%c6, %c0_100] : memref<9x32xf32, #tpu.memory_space<vmem>>, vector<1x32xf32>
    %302 = vector.broadcast %301 : vector<1x32xf32> to vector<2x32xf32>
    %303 = arith.mulf %300, %302 : vector<2x32xf32>
    %cst_101 = arith.constant dense<0.000000e+00> : vector<2xf32>
    %304 = vector.multi_reduction <add>, %303, %cst_101 [1] : vector<2x32xf32> to vector<2xf32>
    %305 = vector.shape_cast %304 : vector<2xf32> to vector<2x1xf32>
    %306 = vector.extract_strided_slice %293 {offsets = [4, 0], sizes = [2, 32], strides = [1, 1]} : vector<6x32xf32> to vector<2x32xf32>
    %c7 = arith.constant 7 : index
    %c0_102 = arith.constant 0 : index
    %307 = vector.load %arg6[%c7, %c0_102] : memref<9x32xf32, #tpu.memory_space<vmem>>, vector<1x32xf32>
    %308 = vector.broadcast %307 : vector<1x32xf32> to vector<2x32xf32>
    %309 = arith.mulf %306, %308 : vector<2x32xf32>
    %cst_103 = arith.constant dense<0.000000e+00> : vector<2xf32>
    %310 = vector.multi_reduction <add>, %309, %cst_103 [1] : vector<2x32xf32> to vector<2xf32>
    %311 = vector.shape_cast %310 : vector<2xf32> to vector<2x1xf32>
    %312 = arith.addf %299, %305 : vector<2x1xf32>
    %313 = arith.addf %312, %311 : vector<2x1xf32>
    %c8 = arith.constant 8 : index
    %c0_104 = arith.constant 0 : index
    %314 = vector.load %arg6[%c8, %c0_104] : memref<9x32xf32, #tpu.memory_space<vmem>>, vector<1x1xf32>
    %315 = vector.broadcast %314 : vector<1x1xf32> to vector<2x1xf32>
    %316 = arith.addf %313, %315 : vector<2x1xf32>
    %c0_105 = arith.constant 0 : index
    %c0_106 = arith.constant 0 : index
    %317 = vector.load %arg7[%c0_105, %c0_106] : memref<2x1xf32, #tpu.memory_space<vmem>>, vector<2x1xf32>
    tpu.vector_store %arg7[%c0_105, %c0_106], %316 {strides = array<i32>} : memref<2x1xf32, #tpu.memory_space<vmem>>, vector<2x1xf32>,
    return
  }
}

</mosaic_0001>

<llo_original>
// kernel: preference_model.1
$region0: #{preference_model.1}
  #allocation0 [shape = 'u32[]', space=smem, size = 0x4, offset = 0x4, fixed_abs, tag = 'smem constant byte address 0x4 - core index']
  #allocation1 [shape = 'u32[72,128]{1,0:T(1,128)}', space=vmem, size = 0x9000, scoped, tag = 'internal scratch']
  %s0 = inlined_call_operand.vmem [shape: s32[48,1], index: 0, kind: input, shape index: {}]
  %s1 = inlined_call_operand.vmem [shape: f32[1,6,1,8], index: 1, kind: input, shape index: {}]
  %s2 = inlined_call_operand.vmem [shape: f32[4,8,8], index: 2, kind: input, shape index: {}]
  %s3 = inlined_call_operand.vmem [shape: f32[128,32], index: 3, kind: input, shape index: {}]
  %s4 = inlined_call_operand.vmem [shape: f32[2,32,128], index: 4, kind: input, shape index: {}]
  %s5 = inlined_call_operand.vmem [shape: f32[2,160,128], index: 5, kind: input, shape index: {}]
  %s6 = inlined_call_operand.vmem [shape: f32[9,32], index: 6, kind: input, shape index: {}]
  %s7 = inlined_call_operand.vmem [shape: f32[2,1], index: 7, kind: output, shape index: {}]
  %s8 = sld [smem:[#allocation0]]
  $region38: #{preference_model.1} parent=0
    _
  %s10 = ssub.s32 1, %s8
  %s11 = scalar_select 0, %s10, %s8
  // Predicated region
  $region2: #{preference_model.1} parent=0 // pred_check
    _
  $region3: #{preference_model.1} parent=0 // pred_check_branch
    %13 = sbr.rel (0) target = $region5
  $region4: #{preference_model.1} parent=0 // pred_region
    _
  $region5: #{preference_model.1} parent=0 // pred_fallthru
    _
  // Predicated region
  $region6: #{preference_model.1} parent=0 // pred_check
    _
  $region7: #{preference_model.1} parent=0 // pred_check_branch
    %15 = sbr.rel (0) target = $region9
  $region8: #{preference_model.1} parent=0 // pred_region
    _
  $region9: #{preference_model.1} parent=0 // pred_fallthru
    _
  // Predicated region
  $region10: #{preference_model.1} parent=0 // pred_check
    _
  $region11: #{preference_model.1} parent=0 // pred_check_branch
    %17 = sbr.rel (0) target = $region13
  $region12: #{preference_model.1} parent=0 // pred_region
    _
  $region13: #{preference_model.1} parent=0 // pred_fallthru
    _
  // Predicated region
  $region14: #{preference_model.1} parent=0 // pred_check
    _
  $region15: #{preference_model.1} parent=0 // pred_check_branch
    %19 = sbr.rel (0) target = $region17
  $region16: #{preference_model.1} parent=0 // pred_region
    _
  $region17: #{preference_model.1} parent=0 // pred_fallthru
    _
  // Predicated region
  $region18: #{preference_model.1} parent=0 // pred_check
    _
  $region19: #{preference_model.1} parent=0 // pred_check_branch
    %21 = sbr.rel (0) target = $region21
  $region20: #{preference_model.1} parent=0 // pred_region
    _
  $region21: #{preference_model.1} parent=0 // pred_fallthru
    _
  // Predicated region
  $region22: #{preference_model.1} parent=0 // pred_check
    _
  $region23: #{preference_model.1} parent=0 // pred_check_branch
    %23 = sbr.rel (0) target = $region25
  $region24: #{preference_model.1} parent=0 // pred_region
    _
  $region25: #{preference_model.1} parent=0 // pred_fallthru
    _
  // Predicated region
  $region26: #{preference_model.1} parent=0 // pred_check
    _
  $region27: #{preference_model.1} parent=0 // pred_check_branch
    %25 = sbr.rel (0) target = $region29
  $region28: #{preference_model.1} parent=0 // pred_region
    _
  $region29: #{preference_model.1} parent=0 // pred_fallthru
    _
  %v26 = vld [vmem:[%s0] sm:$0xff]
  %v27 = vld [vmem:[%s0 + $0x8] sm:$0xff]
  %v28 = vld [vmem:[%s0 + $0x10] sm:$0xff]
  %v29 = vld [vmem:[%s0 + $0x18] sm:$0xff]
  %v30 = vld [vmem:[%s0 + $0x20] sm:$0xff]
  %v31 = vld [vmem:[%s0 + $0x28] sm:$0xff]
  %v32 = vlaneseq
  %v33 = vand.u32 %v32, 127
  %34 = vset.pattern.permute.xlu0 0
  %35 = vperm.xlu0 %34, %v26
  %v36 = vpop.permute.xlu0 %35
  %37 = vset.pattern.permute.xlu0 0
  %38 = vperm.xlu0 %37, %v27
  %v39 = vpop.permute.xlu0 %38
  %40 = vset.pattern.permute.xlu0 0
  %41 = vperm.xlu0 %40, %v28
  %v42 = vpop.permute.xlu0 %41
  %43 = vset.pattern.permute.xlu0 0
  %44 = vperm.xlu0 %43, %v29
  %v45 = vpop.permute.xlu0 %44
  %46 = vset.pattern.permute.xlu0 0
  %47 = vperm.xlu0 %46, %v30
  %v48 = vpop.permute.xlu0 %47
  %49 = vset.pattern.permute.xlu0 0
  %50 = vperm.xlu0 %49, %v31
  %v51 = vpop.permute.xlu0 %50
  %vm52 = vcmp.eq.s32.totalorder %v33, %v36
  %vm53 = vcmp.eq.s32.totalorder %v33, %v39
  %vm54 = vcmp.eq.s32.totalorder %v33, %v42
  %vm55 = vcmp.eq.s32.totalorder %v33, %v45
  %vm56 = vcmp.eq.s32.totalorder %v33, %v48
  %vm57 = vcmp.eq.s32.totalorder %v33, %v51
  %v58 = vsel %vm52, 1.0, 0.0
  %v59 = vsel %vm53, 1.0, 0.0
  %v60 = vsel %vm54, 1.0, 0.0
  %v61 = vsel %vm55, 1.0, 0.0
  %v62 = vsel %vm56, 1.0, 0.0
  %v63 = vsel %vm57, 1.0, 0.0
  %v64 = vld [vmem:[%s3] sm:$0xff]
  %v65 = vld [vmem:[%s3 + $0x8] sm:$0xff]
  %v66 = vld [vmem:[%s3 + $0x10] sm:$0xff]
  %v67 = vld [vmem:[%s3 + $0x18] sm:$0xff]
  %v68 = vld [vmem:[%s3 + $0x20] sm:$0xff]
  %v69 = vld [vmem:[%s3 + $0x28] sm:$0xff]
  %v70 = vld [vmem:[%s3 + $0x30] sm:$0xff]
  %v71 = vld [vmem:[%s3 + $0x38] sm:$0xff]
  %v72 = vld [vmem:[%s3 + $0x40] sm:$0xff]
  %v73 = vld [vmem:[%s3 + $0x48] sm:$0xff]
  %v74 = vld [vmem:[%s3 + $0x50] sm:$0xff]
  %v75 = vld [vmem:[%s3 + $0x58] sm:$0xff]
  %v76 = vld [vmem:[%s3 + $0x60] sm:$0xff]
  %v77 = vld [vmem:[%s3 + $0x68] sm:$0xff]
  %v78 = vld [vmem:[%s3 + $0x70] sm:$0xff]
  %v79 = vld [vmem:[%s3 + $0x78] sm:$0xff]
  %80 = vmatpush.msra.mxu0 %v79
  %81 = vmatpush.msra.mxu0 %v78
  %82 = vmatpush.msra.mxu0 %v77
  %83 = vmatpush.msra.mxu0 %v76
  %84 = vmatpush.msra.mxu0 %v75
  %85 = vmatpush.msra.mxu0 %v74
  %86 = vmatpush.msra.mxu0 %v73
  %87 = vmatpush.msra.mxu0 %v72
  %88 = vmatpush.msra.mxu0 %v71
  %89 = vmatpush.msra.mxu0 %v70
  %90 = vmatpush.msra.mxu0 %v69
  %91 = vmatpush.msra.mxu0 %v68
  %92 = vmatpush.msra.mxu0 %v67
  %93 = vmatpush.msra.mxu0 %v66
  %94 = vmatpush.msra.mxu0 %v65
  %95 = vmatpush.msra.mxu0 %v64
  %96 = vmatmul.f32.gmra.mxu0 %v58
  %v97 = vpop.f32.mrf.mxu0
  %v98 = vadd.f32 0.0, %v97
  %99 = vmatmul.f32.gmra.mxu0 %v59
  %v100 = vpop.f32.mrf.mxu0
  %v101 = vadd.f32 0.0, %v100
  %102 = vmatmul.f32.gmra.mxu0 %v60
  %v103 = vpop.f32.mrf.mxu0
  %v104 = vadd.f32 0.0, %v103
  %105 = vmatmul.f32.gmra.mxu0 %v61
  %v106 = vpop.f32.mrf.mxu0
  %v107 = vadd.f32 0.0, %v106
  %108 = vmatmul.f32.gmra.mxu0 %v62
  %v109 = vpop.f32.mrf.mxu0
  %v110 = vadd.f32 0.0, %v109
  %111 = vmatmul.f32.gmra.mxu0 %v63
  %v112 = vpop.f32.mrf.mxu0
  %v113 = vadd.f32 0.0, %v112
  %114 = vdwg.mxu0
  %v115 = vld [vmem:[%s1] sm:$0x1]
  %v116 = vld [vmem:[%s1 + $0x1] sm:$0x1]
  %v117 = vld [vmem:[%s1 + $0x2] sm:$0x1]
  %v118 = vld [vmem:[%s1 + $0x3] sm:$0x1]
  %v119 = vld [vmem:[%s1 + $0x4] sm:$0x1]
  %v120 = vld [vmem:[%s1 + $0x5] sm:$0x1]
  %v121 = vsub.f32 1.0, %v115
  %v122 = vsub.f32 1.0, %v116
  %v123 = vsub.f32 1.0, %v117
  %v124 = vsub.f32 1.0, %v118
  %v125 = vsub.f32 1.0, %v119
  %v126 = vsub.f32 1.0, %v120
  %v127 = vmul.f32 %v121, -1e+09
  %v128 = vmul.f32 %v122, -1e+09
  %v129 = vmul.f32 %v123, -1e+09
  %v130 = vmul.f32 %v124, -1e+09
  %v131 = vmul.f32 %v125, -1e+09
  %v132 = vmul.f32 %v126, -1e+09
  %v133 = vld [vmem:[%s2] sm:$0xff]
  %v134 = vld [vmem:[%s2 + $0x8] sm:$0xff]
  %v135 = vld [vmem:[%s2 + $0x10] sm:$0xff]
  %v136 = vld [vmem:[%s2 + $0x18] sm:$0xff]
  %v143 = vperm.slane %v127, 0
  %v144 = vperm.slane %v128, 0
  %v145 = vperm.slane %v129, 0
  %v146 = vperm.slane %v130, 0
  %v147 = vperm.slane %v131, 0
  %v148 = vperm.slane %v132, 0
  %v155 = vadd.f32 %v133, %v143
  %v156 = vadd.f32 %v133, %v144
  %v157 = vadd.f32 %v133, %v145
  %v158 = vadd.f32 %v133, %v146
  %v159 = vadd.f32 %v133, %v147
  %v160 = vadd.f32 %v133, %v148
  %v161 = vadd.f32 %v134, %v143
  %v162 = vadd.f32 %v134, %v144
  %v163 = vadd.f32 %v134, %v145
  %v164 = vadd.f32 %v134, %v146
  %v165 = vadd.f32 %v134, %v147
  %v166 = vadd.f32 %v134, %v148
  %v167 = vadd.f32 %v135, %v143
  %v168 = vadd.f32 %v135, %v144
  %v169 = vadd.f32 %v135, %v145
  %v170 = vadd.f32 %v135, %v146
  %v171 = vadd.f32 %v135, %v147
  %v172 = vadd.f32 %v135, %v148
  %v173 = vadd.f32 %v136, %v143
  %v174 = vadd.f32 %v136, %v144
  %v175 = vadd.f32 %v136, %v145
  %v176 = vadd.f32 %v136, %v146
  %v177 = vadd.f32 %v136, %v147
  %v178 = vadd.f32 %v136, %v148
  %v179 = vld [vmem:[%s4] sm:$0xff]
  %v180 = vld [vmem:[%s4 + $0x8] sm:$0xff]
  %v181 = vld [vmem:[%s4 + $0x10] sm:$0xff]
  %v182 = vld [vmem:[%s4 + $0x18] sm:$0xff]
  %v183 = vld [vmem:[%s5] sm:$0xff]
  %v184 = vld [vmem:[%s5 + $0x8] sm:$0xff]
  %v185 = vld [vmem:[%s5 + $0x10] sm:$0xff]
  %v186 = vld [vmem:[%s5 + $0x18] sm:$0xff]
  %v187 = vld [vmem:[%s5 + $0x20] sm:$0xff]
  %v188 = vld [vmem:[%s5 + $0x28] sm:$0xff]
  %v189 = vld [vmem:[%s5 + $0x30] sm:$0xff]
  %v190 = vld [vmem:[%s5 + $0x38] sm:$0xff]
  %v191 = vld [vmem:[%s5 + $0x40] sm:$0xff]
  %v192 = vld [vmem:[%s5 + $0x48] sm:$0xff]
  %v193 = vld [vmem:[%s5 + $0x50] sm:$0xff]
  %v194 = vld [vmem:[%s5 + $0x58] sm:$0xff]
  %v195 = vld [vmem:[%s5 + $0x60] sm:$0xff]
  %v196 = vld [vmem:[%s5 + $0x68] sm:$0xff]
  %v197 = vld [vmem:[%s5 + $0x70] sm:$0xff]
  %v198 = vld [vmem:[%s5 + $0x78] sm:$0xff]
  %v199 = vld [vmem:[%s5 + $0x80] sm:$0xff]
  %v200 = vld [vmem:[%s5 + $0x88] sm:$0xff]
  %v201 = vld [vmem:[%s5 + $0x90] sm:$0xff]
  %v202 = vld [vmem:[%s5 + $0x98] sm:$0xff]
  %v203 = vld [vmem:[%s6] sm:$0x1]
  %v204 = vmul.f32 %v98, %v98
  %v205 = vmul.f32 %v101, %v101
  %v206 = vmul.f32 %v104, %v104
  %v207 = vmul.f32 %v107, %v107
  %v208 = vmul.f32 %v110, %v110
  %v209 = vmul.f32 %v113, %v113
  %vm210 = vcmask 261120
  %v211 = vsel %vm210, %v204, 0.0
  %212 = vadd.xlane.f32.xlu0 %v211
  %v213 = vpop.xlane.xlu0 %212
  %v214 = vsel %vm210, %v205, 0.0
  %215 = vadd.xlane.f32.xlu0 %v214
  %v216 = vpop.xlane.xlu0 %215
  %v217 = vsel %vm210, %v206, 0.0
  %218 = vadd.xlane.f32.xlu0 %v217
  %v219 = vpop.xlane.xlu0 %218
  %v220 = vsel %vm210, %v207, 0.0
  %221 = vadd.xlane.f32.xlu0 %v220
  %v222 = vpop.xlane.xlu0 %221
  %v223 = vsel %vm210, %v208, 0.0
  %224 = vadd.xlane.f32.xlu0 %v223
  %v225 = vpop.xlane.xlu0 %224
  %v226 = vsel %vm210, %v209, 0.0
  %227 = vadd.xlane.f32.xlu0 %v226
  %v228 = vpop.xlane.xlu0 %227
  %v229 = vrcp.pop 32.0
  %v230 = vmul.f32 32.0, %v229
  %v231 = vsub.f32 1.0, %v230
  %v232 = vmul.f32 %v229, %v231
  %v233 = vadd.f32 %v229, %v232
  %vm234 = vweird.f32 %v229
  %v235 = vsel %vm234, %v229, %v233
  %v236 = vmul.f32 %v213, %v235
  %v237 = vmul.f32 %v216, %v235
  %v238 = vmul.f32 %v219, %v235
  %v239 = vmul.f32 %v222, %v235
  %v240 = vmul.f32 %v225, %v235
  %v241 = vmul.f32 %v228, %v235
  %v242 = vadd.f32 %v236, 1e-06
  %v243 = vadd.f32 %v237, 1e-06
  %v244 = vadd.f32 %v238, 1e-06
  %v245 = vadd.f32 %v239, 1e-06
  %v246 = vadd.f32 %v240, 1e-06
  %v247 = vadd.f32 %v241, 1e-06
  %v248 = vrsqrt.pop %v242
  %v249 = vmul.f32 %v248, %v242
  %v250 = vmul.f32 %v249, %v248
  %v251 = vmul.f32 0.5, %v250
  %v252 = vsub.f32 1.5, %v251
  %v253 = vmul.f32 %v248, %v252
  %vm254 = vweird.f32 %v242
  %vm255 = vweird.f32 %v248
  %vm256 = vmor %vm254, %vm255
  %v257 = vsel %vm256, %v248, %v253
  %v258 = vrsqrt.pop %v243
  %v259 = vmul.f32 %v258, %v243
  %v260 = vmul.f32 %v259, %v258
  %v261 = vmul.f32 0.5, %v260
  %v262 = vsub.f32 1.5, %v261
  %v263 = vmul.f32 %v258, %v262
  %vm264 = vweird.f32 %v243
  %vm265 = vweird.f32 %v258
  %vm266 = vmor %vm264, %vm265
  %v267 = vsel %vm266, %v258, %v263
  %v268 = vrsqrt.pop %v244
  %v269 = vmul.f32 %v268, %v244
  %v270 = vmul.f32 %v269, %v268
  %v271 = vmul.f32 0.5, %v270
  %v272 = vsub.f32 1.5, %v271
  %v273 = vmul.f32 %v268, %v272
  %vm274 = vweird.f32 %v244
  %vm275 = vweird.f32 %v268
  %vm276 = vmor %vm274, %vm275
  %v277 = vsel %vm276, %v268, %v273
  %v278 = vrsqrt.pop %v245
  %v279 = vmul.f32 %v278, %v245
  %v280 = vmul.f32 %v279, %v278
  %v281 = vmul.f32 0.5, %v280
  %v282 = vsub.f32 1.5, %v281
  %v283 = vmul.f32 %v278, %v282
  %vm284 = vweird.f32 %v245
  %vm285 = vweird.f32 %v278
  %vm286 = vmor %vm284, %vm285
  %v287 = vsel %vm286, %v278, %v283
  %v288 = vrsqrt.pop %v246
  %v289 = vmul.f32 %v288, %v246
  %v290 = vmul.f32 %v289, %v288
  %v291 = vmul.f32 0.5, %v290
  %v292 = vsub.f32 1.5, %v291
  %v293 = vmul.f32 %v288, %v292
  %vm294 = vweird.f32 %v246
  %vm295 = vweird.f32 %v288
  %vm296 = vmor %vm294, %vm295
  %v297 = vsel %vm296, %v288, %v293
  %v298 = vrsqrt.pop %v247
  %v299 = vmul.f32 %v298, %v247
  %v300 = vmul.f32 %v299, %v298
  %v301 = vmul.f32 0.5, %v300
  %v302 = vsub.f32 1.5, %v301
  %v303 = vmul.f32 %v298, %v302
  %vm304 = vweird.f32 %v247
  %vm305 = vweird.f32 %v298
  %vm306 = vmor %vm304, %vm305
  %v307 = vsel %vm306, %v298, %v303
  %v308 = vmul.f32 %v98, %v257
  %v309 = vmul.f32 %v101, %v267
  %v310 = vmul.f32 %v104, %v277
  %v311 = vmul.f32 %v107, %v287
  %v312 = vmul.f32 %v110, %v297
  %v313 = vmul.f32 %v113, %v307
  %v314 = vperm.slane %v203, 0
  %v315 = vmul.f32 %v308, %v314
  %v316 = vmul.f32 %v309, %v314
  %v317 = vmul.f32 %v310, %v314
  %v318 = vmul.f32 %v311, %v314
  %v319 = vmul.f32 %v312, %v314
  %v320 = vmul.f32 %v313, %v314
  %v322 = vsel %vm210, %v315, 0
  %v325 = vsel %vm210, %v316, 0
  %v328 = vsel %vm210, %v317, 0
  %v331 = vsel %vm210, %v318, 0
  %v334 = vsel %vm210, %v319, 0
  %v337 = vsel %vm210, %v320, 0
  %339 = vmatpush.msra.mxu0 0.0
  %340 = vmatpush.msra.mxu0 0.0
  %341 = vmatpush.msra.mxu0 0.0
  %342 = vmatpush.msra.mxu0 0.0
  %343 = vmatpush.msra.mxu0 0.0
  %344 = vmatpush.msra.mxu0 0.0
  %345 = vmatpush.msra.mxu0 0.0
  %346 = vmatpush.msra.mxu0 0.0
  %347 = vmatpush.msra.mxu0 0.0
  %348 = vmatpush.msra.mxu0 0.0
  %349 = vmatpush.msra.mxu0 0.0
  %350 = vmatpush.msra.mxu0 0.0
  %351 = vmatpush.msra.mxu0 %v182
  %352 = vmatpush.msra.mxu0 %v181
  %353 = vmatpush.msra.mxu0 %v180
  %354 = vmatpush.msra.mxu0 %v179
  %355 = vmatmul.f32.gmra.mxu0 %v322
  %v356 = vpop.f32.mrf.mxu0
  %v357 = vadd.f32 0.0, %v356
  %358 = vmatmul.f32.gmra.mxu0 %v325
  %v359 = vpop.f32.mrf.mxu0
  %v360 = vadd.f32 0.0, %v359
  %361 = vmatmul.f32.gmra.mxu0 %v328
  %v362 = vpop.f32.mrf.mxu0
  %v363 = vadd.f32 0.0, %v362
  %364 = vmatmul.f32.gmra.mxu0 %v331
  %v365 = vpop.f32.mrf.mxu0
  %v366 = vadd.f32 0.0, %v365
  %367 = vmatmul.f32.gmra.mxu0 %v334
  %v368 = vpop.f32.mrf.mxu0
  %v369 = vadd.f32 0.0, %v368
  %370 = vmatmul.f32.gmra.mxu0 %v337
  %v371 = vpop.f32.mrf.mxu0
  %v372 = vadd.f32 0.0, %v371
  %373 = vdwg.mxu0
  %375 = vrot.lane.b32.xlu0 %v357, 96
  %v376 = vpop.permute.xlu0 %375
  %vm377 = vcmask 64512
  %v378 = vsel %vm377, %v357, 0
  %v380 = vsel %vm377, %v376, 0
  %382 = vmatpush.xpose.msra.mxu0 0.0
  %383 = vmatpush.xpose.msra.mxu0 0.0
  %384 = vmatpush.xpose.msra.mxu0 0.0
  %385 = vmatpush.xpose.msra.mxu0 0.0
  %386 = vmatpush.xpose.msra.mxu0 0.0
  %387 = vmatpush.xpose.msra.mxu0 0.0
  %388 = vmatpush.xpose.msra.mxu0 0.0
  %389 = vmatpush.xpose.msra.mxu0 0.0
  %390 = vmatpush.xpose.msra.mxu0 0.0
  %391 = vmatpush.xpose.msra.mxu0 0.0
  %392 = vmatpush.xpose.msra.mxu0 0.0
  %393 = vmatpush.xpose.msra.mxu0 0.0
  %394 = vmatpush.xpose.msra.mxu0 0.0
  %395 = vmatpush.xpose.msra.mxu0 0.0
  %396 = vmatpush.xpose.msra.mxu0 0.0
  %397 = vmatpush.xpose.msra.mxu0 %v380
  %398 = vmatmul.f32.gmra.mxu0 %v378
  %v399 = vpop.f32.mrf.mxu0
  %v400 = vadd.f32 %v155, %v399
  %401 = vdwg.mxu0
  %403 = vrot.lane.b32.xlu0 %v360, 96
  %v404 = vpop.permute.xlu0 %403
  %v405 = vsel %vm377, %v360, 0
  %v407 = vsel %vm377, %v404, 0
  %409 = vmatpush.xpose.msra.mxu0 0.0
  %410 = vmatpush.xpose.msra.mxu0 0.0
  %411 = vmatpush.xpose.msra.mxu0 0.0
  %412 = vmatpush.xpose.msra.mxu0 0.0
  %413 = vmatpush.xpose.msra.mxu0 0.0
  %414 = vmatpush.xpose.msra.mxu0 0.0
  %415 = vmatpush.xpose.msra.mxu0 0.0
  %416 = vmatpush.xpose.msra.mxu0 0.0
  %417 = vmatpush.xpose.msra.mxu0 0.0
  %418 = vmatpush.xpose.msra.mxu0 0.0
  %419 = vmatpush.xpose.msra.mxu0 0.0
  %420 = vmatpush.xpose.msra.mxu0 0.0
  %421 = vmatpush.xpose.msra.mxu0 0.0
  %422 = vmatpush.xpose.msra.mxu0 0.0
  %423 = vmatpush.xpose.msra.mxu0 0.0
  %424 = vmatpush.xpose.msra.mxu0 %v407
  %425 = vmatmul.f32.gmra.mxu0 %v405
  %v426 = vpop.f32.mrf.mxu0
  %v427 = vadd.f32 %v156, %v426
  %428 = vdwg.mxu0
  %430 = vrot.lane.b32.xlu0 %v363, 96
  %v431 = vpop.permute.xlu0 %430
  %v432 = vsel %vm377, %v363, 0
  %v434 = vsel %vm377, %v431, 0
  %436 = vmatpush.xpose.msra.mxu0 0.0
  %437 = vmatpush.xpose.msra.mxu0 0.0
  %438 = vmatpush.xpose.msra.mxu0 0.0
  %439 = vmatpush.xpose.msra.mxu0 0.0
  %440 = vmatpush.xpose.msra.mxu0 0.0
  %441 = vmatpush.xpose.msra.mxu0 0.0
  %442 = vmatpush.xpose.msra.mxu0 0.0
  %443 = vmatpush.xpose.msra.mxu0 0.0
  %444 = vmatpush.xpose.msra.mxu0 0.0
  %445 = vmatpush.xpose.msra.mxu0 0.0
  %446 = vmatpush.xpose.msra.mxu0 0.0
  %447 = vmatpush.xpose.msra.mxu0 0.0
  %448 = vmatpush.xpose.msra.mxu0 0.0
  %449 = vmatpush.xpose.msra.mxu0 0.0
  %450 = vmatpush.xpose.msra.mxu0 0.0
  %451 = vmatpush.xpose.msra.mxu0 %v434
  %452 = vmatmul.f32.gmra.mxu0 %v432
  %v453 = vpop.f32.mrf.mxu0
  %v454 = vadd.f32 %v157, %v453
  %455 = vdwg.mxu0
  %457 = vrot.lane.b32.xlu0 %v366, 96
  %v458 = vpop.permute.xlu0 %457
  %v459 = vsel %vm377, %v366, 0
  %v461 = vsel %vm377, %v458, 0
  %463 = vmatpush.xpose.msra.mxu0 0.0
  %464 = vmatpush.xpose.msra.mxu0 0.0
  %465 = vmatpush.xpose.msra.mxu0 0.0
  %466 = vmatpush.xpose.msra.mxu0 0.0
  %467 = vmatpush.xpose.msra.mxu0 0.0
  %468 = vmatpush.xpose.msra.mxu0 0.0
  %469 = vmatpush.xpose.msra.mxu0 0.0
  %470 = vmatpush.xpose.msra.mxu0 0.0
  %471 = vmatpush.xpose.msra.mxu0 0.0
  %472 = vmatpush.xpose.msra.mxu0 0.0
  %473 = vmatpush.xpose.msra.mxu0 0.0
  %474 = vmatpush.xpose.msra.mxu0 0.0
  %475 = vmatpush.xpose.msra.mxu0 0.0
  %476 = vmatpush.xpose.msra.mxu0 0.0
  %477 = vmatpush.xpose.msra.mxu0 0.0
  %478 = vmatpush.xpose.msra.mxu0 %v461
  %479 = vmatmul.f32.gmra.mxu0 %v459
  %v480 = vpop.f32.mrf.mxu0
  %v481 = vadd.f32 %v158, %v480
  %482 = vdwg.mxu0
  %484 = vrot.lane.b32.xlu0 %v369, 96
  %v485 = vpop.permute.xlu0 %484
  %v486 = vsel %vm377, %v369, 0
  %v488 = vsel %vm377, %v485, 0
  %490 = vmatpush.xpose.msra.mxu0 0.0
  %491 = vmatpush.xpose.msra.mxu0 0.0
  %492 = vmatpush.xpose.msra.mxu0 0.0
  %493 = vmatpush.xpose.msra.mxu0 0.0
  %494 = vmatpush.xpose.msra.mxu0 0.0
  %495 = vmatpush.xpose.msra.mxu0 0.0
  %496 = vmatpush.xpose.msra.mxu0 0.0
  %497 = vmatpush.xpose.msra.mxu0 0.0
  %498 = vmatpush.xpose.msra.mxu0 0.0
  %499 = vmatpush.xpose.msra.mxu0 0.0
  %500 = vmatpush.xpose.msra.mxu0 0.0
  %501 = vmatpush.xpose.msra.mxu0 0.0
  %502 = vmatpush.xpose.msra.mxu0 0.0
  %503 = vmatpush.xpose.msra.mxu0 0.0
  %504 = vmatpush.xpose.msra.mxu0 0.0
  %505 = vmatpush.xpose.msra.mxu0 %v488
  %506 = vmatmul.f32.gmra.mxu0 %v486
  %v507 = vpop.f32.mrf.mxu0
  %v508 = vadd.f32 %v159, %v507
  %509 = vdwg.mxu0
  %511 = vrot.lane.b32.xlu0 %v372, 96
  %v512 = vpop.permute.xlu0 %511
  %v513 = vsel %vm377, %v372, 0
  %v515 = vsel %vm377, %v512, 0
  %517 = vmatpush.xpose.msra.mxu0 0.0
  %518 = vmatpush.xpose.msra.mxu0 0.0
  %519 = vmatpush.xpose.msra.mxu0 0.0
  %520 = vmatpush.xpose.msra.mxu0 0.0
  %521 = vmatpush.xpose.msra.mxu0 0.0
  %522 = vmatpush.xpose.msra.mxu0 0.0
  %523 = vmatpush.xpose.msra.mxu0 0.0
  %524 = vmatpush.xpose.msra.mxu0 0.0
  %525 = vmatpush.xpose.msra.mxu0 0.0
  %526 = vmatpush.xpose.msra.mxu0 0.0
  %527 = vmatpush.xpose.msra.mxu0 0.0
  %528 = vmatpush.xpose.msra.mxu0 0.0
  %529 = vmatpush.xpose.msra.mxu0 0.0
  %530 = vmatpush.xpose.msra.mxu0 0.0
  %531 = vmatpush.xpose.msra.mxu0 0.0
  %532 = vmatpush.xpose.msra.mxu0 %v515
  %533 = vmatmul.f32.gmra.mxu0 %v513
  %v534 = vpop.f32.mrf.mxu0
  %v535 = vadd.f32 %v160, %v534
  %536 = vdwg.mxu0
  %v537 = vsel %vm377, %v400, -inf
  %538 = vmax.xlane.f32.xlu0 %v537
  %v539 = vpop.xlane.xlu0 %538
  %v540 = vsel %vm377, %v427, -inf
  %541 = vmax.xlane.f32.xlu0 %v540
  %v542 = vpop.xlane.xlu0 %541
  %v543 = vsel %vm377, %v454, -inf
  %544 = vmax.xlane.f32.xlu0 %v543
  %v545 = vpop.xlane.xlu0 %544
  %v546 = vsel %vm377, %v481, -inf
  %547 = vmax.xlane.f32.xlu0 %v546
  %v548 = vpop.xlane.xlu0 %547
  %v549 = vsel %vm377, %v508, -inf
  %550 = vmax.xlane.f32.xlu0 %v549
  %v551 = vpop.xlane.xlu0 %550
  %v552 = vsel %vm377, %v535, -inf
  %553 = vmax.xlane.f32.xlu0 %v552
  %v554 = vpop.xlane.xlu0 %553
  %v555 = vsub.f32 %v400, %v539
  %v556 = vsub.f32 %v427, %v542
  %v557 = vsub.f32 %v454, %v545
  %v558 = vsub.f32 %v481, %v548
  %v559 = vsub.f32 %v508, %v551
  %v560 = vsub.f32 %v535, %v554
  %v561 = vmul.f32 %v555, 1.442695
  %v562 = vpow.pop %v561
  %v563 = vmul.f32 %v556, 1.442695
  %v564 = vpow.pop %v563
  %v565 = vmul.f32 %v557, 1.442695
  %v566 = vpow.pop %v565
  %v567 = vmul.f32 %v558, 1.442695
  %v568 = vpow.pop %v567
  %v569 = vmul.f32 %v559, 1.442695
  %v570 = vpow.pop %v569
  %v571 = vmul.f32 %v560, 1.442695
  %v572 = vpow.pop %v571
  %v573 = vsel %vm377, %v562, 0.0
  %574 = vadd.xlane.f32.xlu0 %v573
  %v575 = vpop.xlane.xlu0 %574
  %v576 = vsel %vm377, %v564, 0.0
  %577 = vadd.xlane.f32.xlu0 %v576
  %v578 = vpop.xlane.xlu0 %577
  %v579 = vsel %vm377, %v566, 0.0
  %580 = vadd.xlane.f32.xlu0 %v579
  %v581 = vpop.xlane.xlu0 %580
  %v582 = vsel %vm377, %v568, 0.0
  %583 = vadd.xlane.f32.xlu0 %v582
  %v584 = vpop.xlane.xlu0 %583
  %v585 = vsel %vm377, %v570, 0.0
  %586 = vadd.xlane.f32.xlu0 %v585
  %v587 = vpop.xlane.xlu0 %586
  %v588 = vsel %vm377, %v572, 0.0
  %589 = vadd.xlane.f32.xlu0 %v588
  %v590 = vpop.xlane.xlu0 %589
  %v591 = vrcp.pop %v575
  %v592 = vrcp.pop %v578
  %v593 = vrcp.pop %v581
  %v594 = vrcp.pop %v584
  %v595 = vrcp.pop %v587
  %v596 = vrcp.pop %v590
  %v597 = vmul.f32 %v562, %v591
  %v598 = vmul.f32 %v564, %v592
  %v599 = vmul.f32 %v566, %v593
  %v600 = vmul.f32 %v568, %v594
  %v601 = vmul.f32 %v570, %v595
  %v602 = vmul.f32 %v572, %v596
  %603 = vrot.lane.b32.xlu0 %v357, 64
  %v604 = vpop.permute.xlu0 %603
  %v607 = vsel %vm377, %v597, 0
  %609 = vmatpush.msra.mxu0 0.0
  %610 = vmatpush.msra.mxu0 0.0
  %611 = vmatpush.msra.mxu0 0.0
  %612 = vmatpush.msra.mxu0 0.0
  %613 = vmatpush.msra.mxu0 0.0
  %614 = vmatpush.msra.mxu0 0.0
  %615 = vmatpush.msra.mxu0 0.0
  %616 = vmatpush.msra.mxu0 0.0
  %617 = vmatpush.msra.mxu0 0.0
  %618 = vmatpush.msra.mxu0 0.0
  %619 = vmatpush.msra.mxu0 0.0
  %620 = vmatpush.msra.mxu0 0.0
  %621 = vmatpush.msra.mxu0 0.0
  %622 = vmatpush.msra.mxu0 0.0
  %623 = vmatpush.msra.mxu0 0.0
  %624 = vmatpush.msra.mxu0 %v604
  %625 = vmatmul.f32.gmra.mxu0 %v607
  %v626 = vpop.f32.mrf.mxu0
  %v627 = vadd.f32 0.0, %v626
  %628 = vdwg.mxu0
  %629 = vrot.lane.b32.xlu0 %v360, 64
  %v630 = vpop.permute.xlu0 %629
  %v633 = vsel %vm377, %v598, 0
  %635 = vmatpush.msra.mxu0 0.0
  %636 = vmatpush.msra.mxu0 0.0
  %637 = vmatpush.msra.mxu0 0.0
  %638 = vmatpush.msra.mxu0 0.0
  %639 = vmatpush.msra.mxu0 0.0
  %640 = vmatpush.msra.mxu0 0.0
  %641 = vmatpush.msra.mxu0 0.0
  %642 = vmatpush.msra.mxu0 0.0
  %643 = vmatpush.msra.mxu0 0.0
  %644 = vmatpush.msra.mxu0 0.0
  %645 = vmatpush.msra.mxu0 0.0
  %646 = vmatpush.msra.mxu0 0.0
  %647 = vmatpush.msra.mxu0 0.0
  %648 = vmatpush.msra.mxu0 0.0
  %649 = vmatpush.msra.mxu0 0.0
  %650 = vmatpush.msra.mxu0 %v630
  %651 = vmatmul.f32.gmra.mxu0 %v633
  %v652 = vpop.f32.mrf.mxu0
  %v653 = vadd.f32 0.0, %v652
  %654 = vdwg.mxu0
  %655 = vrot.lane.b32.xlu0 %v363, 64
  %v656 = vpop.permute.xlu0 %655
  %v659 = vsel %vm377, %v599, 0
  %661 = vmatpush.msra.mxu0 0.0
  %662 = vmatpush.msra.mxu0 0.0
  %663 = vmatpush.msra.mxu0 0.0
  %664 = vmatpush.msra.mxu0 0.0
  %665 = vmatpush.msra.mxu0 0.0
  %666 = vmatpush.msra.mxu0 0.0
  %667 = vmatpush.msra.mxu0 0.0
  %668 = vmatpush.msra.mxu0 0.0
  %669 = vmatpush.msra.mxu0 0.0
  %670 = vmatpush.msra.mxu0 0.0
  %671 = vmatpush.msra.mxu0 0.0
  %672 = vmatpush.msra.mxu0 0.0
  %673 = vmatpush.msra.mxu0 0.0
  %674 = vmatpush.msra.mxu0 0.0
  %675 = vmatpush.msra.mxu0 0.0
  %676 = vmatpush.msra.mxu0 %v656
  %677 = vmatmul.f32.gmra.mxu0 %v659
  %v678 = vpop.f32.mrf.mxu0
  %v679 = vadd.f32 0.0, %v678
  %680 = vdwg.mxu0
  %681 = vrot.lane.b32.xlu0 %v366, 64
  %v682 = vpop.permute.xlu0 %681
  %v685 = vsel %vm377, %v600, 0
  %687 = vmatpush.msra.mxu0 0.0
  %688 = vmatpush.msra.mxu0 0.0
  %689 = vmatpush.msra.mxu0 0.0
  %690 = vmatpush.msra.mxu0 0.0
  %691 = vmatpush.msra.mxu0 0.0
  %692 = vmatpush.msra.mxu0 0.0
  %693 = vmatpush.msra.mxu0 0.0
  %694 = vmatpush.msra.mxu0 0.0
  %695 = vmatpush.msra.mxu0 0.0
  %696 = vmatpush.msra.mxu0 0.0
  %697 = vmatpush.msra.mxu0 0.0
  %698 = vmatpush.msra.mxu0 0.0
  %699 = vmatpush.msra.mxu0 0.0
  %700 = vmatpush.msra.mxu0 0.0
  %701 = vmatpush.msra.mxu0 0.0
  %702 = vmatpush.msra.mxu0 %v682
  %703 = vmatmul.f32.gmra.mxu0 %v685
  %v704 = vpop.f32.mrf.mxu0
  %v705 = vadd.f32 0.0, %v704
  %706 = vdwg.mxu0
  %707 = vrot.lane.b32.xlu0 %v369, 64
  %v708 = vpop.permute.xlu0 %707
  %v711 = vsel %vm377, %v601, 0
  %713 = vmatpush.msra.mxu0 0.0
  %714 = vmatpush.msra.mxu0 0.0
  %715 = vmatpush.msra.mxu0 0.0
  %716 = vmatpush.msra.mxu0 0.0
  %717 = vmatpush.msra.mxu0 0.0
  %718 = vmatpush.msra.mxu0 0.0
  %719 = vmatpush.msra.mxu0 0.0
  %720 = vmatpush.msra.mxu0 0.0
  %721 = vmatpush.msra.mxu0 0.0
  %722 = vmatpush.msra.mxu0 0.0
  %723 = vmatpush.msra.mxu0 0.0
  %724 = vmatpush.msra.mxu0 0.0
  %725 = vmatpush.msra.mxu0 0.0
  %726 = vmatpush.msra.mxu0 0.0
  %727 = vmatpush.msra.mxu0 0.0
  %728 = vmatpush.msra.mxu0 %v708
  %729 = vmatmul.f32.gmra.mxu0 %v711
  %v730 = vpop.f32.mrf.mxu0
  %v731 = vadd.f32 0.0, %v730
  %732 = vdwg.mxu0
  %733 = vrot.lane.b32.xlu0 %v372, 64
  %v734 = vpop.permute.xlu0 %733
  %v737 = vsel %vm377, %v602, 0
  %739 = vmatpush.msra.mxu0 0.0
  %740 = vmatpush.msra.mxu0 0.0
  %741 = vmatpush.msra.mxu0 0.0
  %742 = vmatpush.msra.mxu0 0.0
  %743 = vmatpush.msra.mxu0 0.0
  %744 = vmatpush.msra.mxu0 0.0
  %745 = vmatpush.msra.mxu0 0.0
  %746 = vmatpush.msra.mxu0 0.0
  %747 = vmatpush.msra.mxu0 0.0
  %748 = vmatpush.msra.mxu0 0.0
  %749 = vmatpush.msra.mxu0 0.0
  %750 = vmatpush.msra.mxu0 0.0
  %751 = vmatpush.msra.mxu0 0.0
  %752 = vmatpush.msra.mxu0 0.0
  %753 = vmatpush.msra.mxu0 0.0
  %754 = vmatpush.msra.mxu0 %v734
  %755 = vmatmul.f32.gmra.mxu0 %v737
  %v756 = vpop.f32.mrf.mxu0
  %v757 = vadd.f32 0.0, %v756
  %758 = vdwg.mxu0
  %759 = vrot.lane.b32.xlu0 %v357, 120
  %v760 = vpop.permute.xlu0 %759
  %761 = vrot.lane.b32.xlu0 %v357, 88
  %v762 = vpop.permute.xlu0 %761
  %v763 = vsel %vm377, %v760, 0
  %v765 = vsel %vm377, %v762, 0
  %767 = vmatpush.xpose.msra.mxu0 0.0
  %768 = vmatpush.xpose.msra.mxu0 0.0
  %769 = vmatpush.xpose.msra.mxu0 0.0
  %770 = vmatpush.xpose.msra.mxu0 0.0
  %771 = vmatpush.xpose.msra.mxu0 0.0
  %772 = vmatpush.xpose.msra.mxu0 0.0
  %773 = vmatpush.xpose.msra.mxu0 0.0
  %774 = vmatpush.xpose.msra.mxu0 0.0
  %775 = vmatpush.xpose.msra.mxu0 0.0
  %776 = vmatpush.xpose.msra.mxu0 0.0
  %777 = vmatpush.xpose.msra.mxu0 0.0
  %778 = vmatpush.xpose.msra.mxu0 0.0
  %779 = vmatpush.xpose.msra.mxu0 0.0
  %780 = vmatpush.xpose.msra.mxu0 0.0
  %781 = vmatpush.xpose.msra.mxu0 0.0
  %782 = vmatpush.xpose.msra.mxu0 %v765
  %783 = vmatmul.f32.gmra.mxu0 %v763
  %v784 = vpop.f32.mrf.mxu0
  %v785 = vadd.f32 %v161, %v784
  %786 = vdwg.mxu0
  %787 = vrot.lane.b32.xlu0 %v360, 120
  %v788 = vpop.permute.xlu0 %787
  %789 = vrot.lane.b32.xlu0 %v360, 88
  %v790 = vpop.permute.xlu0 %789
  %v791 = vsel %vm377, %v788, 0
  %v793 = vsel %vm377, %v790, 0
  %795 = vmatpush.xpose.msra.mxu0 0.0
  %796 = vmatpush.xpose.msra.mxu0 0.0
  %797 = vmatpush.xpose.msra.mxu0 0.0
  %798 = vmatpush.xpose.msra.mxu0 0.0
  %799 = vmatpush.xpose.msra.mxu0 0.0
  %800 = vmatpush.xpose.msra.mxu0 0.0
  %801 = vmatpush.xpose.msra.mxu0 0.0
  %802 = vmatpush.xpose.msra.mxu0 0.0
  %803 = vmatpush.xpose.msra.mxu0 0.0
  %804 = vmatpush.xpose.msra.mxu0 0.0
  %805 = vmatpush.xpose.msra.mxu0 0.0
  %806 = vmatpush.xpose.msra.mxu0 0.0
  %807 = vmatpush.xpose.msra.mxu0 0.0
  %808 = vmatpush.xpose.msra.mxu0 0.0
  %809 = vmatpush.xpose.msra.mxu0 0.0
  %810 = vmatpush.xpose.msra.mxu0 %v793
  %811 = vmatmul.f32.gmra.mxu0 %v791
  %v812 = vpop.f32.mrf.mxu0
  %v813 = vadd.f32 %v162, %v812
  %814 = vdwg.mxu0
  %815 = vrot.lane.b32.xlu0 %v363, 120
  %v816 = vpop.permute.xlu0 %815
  %817 = vrot.lane.b32.xlu0 %v363, 88
  %v818 = vpop.permute.xlu0 %817
  %v819 = vsel %vm377, %v816, 0
  %v821 = vsel %vm377, %v818, 0
  %823 = vmatpush.xpose.msra.mxu0 0.0
  %824 = vmatpush.xpose.msra.mxu0 0.0
  %825 = vmatpush.xpose.msra.mxu0 0.0
  %826 = vmatpush.xpose.msra.mxu0 0.0
  %827 = vmatpush.xpose.msra.mxu0 0.0
  %828 = vmatpush.xpose.msra.mxu0 0.0
  %829 = vmatpush.xpose.msra.mxu0 0.0
  %830 = vmatpush.xpose.msra.mxu0 0.0
  %831 = vmatpush.xpose.msra.mxu0 0.0
  %832 = vmatpush.xpose.msra.mxu0 0.0
  %833 = vmatpush.xpose.msra.mxu0 0.0
  %834 = vmatpush.xpose.msra.mxu0 0.0
  %835 = vmatpush.xpose.msra.mxu0 0.0
  %836 = vmatpush.xpose.msra.mxu0 0.0
  %837 = vmatpush.xpose.msra.mxu0 0.0
  %838 = vmatpush.xpose.msra.mxu0 %v821
  %839 = vmatmul.f32.gmra.mxu0 %v819
  %v840 = vpop.f32.mrf.mxu0
  %v841 = vadd.f32 %v163, %v840
  %842 = vdwg.mxu0
  %843 = vrot.lane.b32.xlu0 %v366, 120
  %v844 = vpop.permute.xlu0 %843
  %845 = vrot.lane.b32.xlu0 %v366, 88
  %v846 = vpop.permute.xlu0 %845
  %v847 = vsel %vm377, %v844, 0
  %v849 = vsel %vm377, %v846, 0
  %851 = vmatpush.xpose.msra.mxu0 0.0
  %852 = vmatpush.xpose.msra.mxu0 0.0
  %853 = vmatpush.xpose.msra.mxu0 0.0
  %854 = vmatpush.xpose.msra.mxu0 0.0
  %855 = vmatpush.xpose.msra.mxu0 0.0
  %856 = vmatpush.xpose.msra.mxu0 0.0
  %857 = vmatpush.xpose.msra.mxu0 0.0
  %858 = vmatpush.xpose.msra.mxu0 0.0
  %859 = vmatpush.xpose.msra.mxu0 0.0
  %860 = vmatpush.xpose.msra.mxu0 0.0
  %861 = vmatpush.xpose.msra.mxu0 0.0
  %862 = vmatpush.xpose.msra.mxu0 0.0
  %863 = vmatpush.xpose.msra.mxu0 0.0
  %864 = vmatpush.xpose.msra.mxu0 0.0
  %865 = vmatpush.xpose.msra.mxu0 0.0
  %866 = vmatpush.xpose.msra.mxu0 %v849
  %867 = vmatmul.f32.gmra.mxu0 %v847
  %v868 = vpop.f32.mrf.mxu0
  %v869 = vadd.f32 %v164, %v868
  %870 = vdwg.mxu0
  %871 = vrot.lane.b32.xlu0 %v369, 120
  %v872 = vpop.permute.xlu0 %871
  %873 = vrot.lane.b32.xlu0 %v369, 88
  %v874 = vpop.permute.xlu0 %873
  %v875 = vsel %vm377, %v872, 0
  %v877 = vsel %vm377, %v874, 0
  %879 = vmatpush.xpose.msra.mxu0 0.0
  %880 = vmatpush.xpose.msra.mxu0 0.0
  %881 = vmatpush.xpose.msra.mxu0 0.0
  %882 = vmatpush.xpose.msra.mxu0 0.0
  %883 = vmatpush.xpose.msra.mxu0 0.0
  %884 = vmatpush.xpose.msra.mxu0 0.0
  %885 = vmatpush.xpose.msra.mxu0 0.0
  %886 = vmatpush.xpose.msra.mxu0 0.0
  %887 = vmatpush.xpose.msra.mxu0 0.0
  %888 = vmatpush.xpose.msra.mxu0 0.0
  %889 = vmatpush.xpose.msra.mxu0 0.0
  %890 = vmatpush.xpose.msra.mxu0 0.0
  %891 = vmatpush.xpose.msra.mxu0 0.0
  %892 = vmatpush.xpose.msra.mxu0 0.0
  %893 = vmatpush.xpose.msra.mxu0 0.0
  %894 = vmatpush.xpose.msra.mxu0 %v877
  %895 = vmatmul.f32.gmra.mxu0 %v875
  %v896 = vpop.f32.mrf.mxu0
  %v897 = vadd.f32 %v165, %v896
  %898 = vdwg.mxu0
  %899 = vrot.lane.b32.xlu0 %v372, 120
  %v900 = vpop.permute.xlu0 %899
  %901 = vrot.lane.b32.xlu0 %v372, 88
  %v902 = vpop.permute.xlu0 %901
  %v903 = vsel %vm377, %v900, 0
  %v905 = vsel %vm377, %v902, 0
  %907 = vmatpush.xpose.msra.mxu0 0.0
  %908 = vmatpush.xpose.msra.mxu0 0.0
  %909 = vmatpush.xpose.msra.mxu0 0.0
  %910 = vmatpush.xpose.msra.mxu0 0.0
  %911 = vmatpush.xpose.msra.mxu0 0.0
  %912 = vmatpush.xpose.msra.mxu0 0.0
  %913 = vmatpush.xpose.msra.mxu0 0.0
  %914 = vmatpush.xpose.msra.mxu0 0.0
  %915 = vmatpush.xpose.msra.mxu0 0.0
  %916 = vmatpush.xpose.msra.mxu0 0.0
  %917 = vmatpush.xpose.msra.mxu0 0.0
  %918 = vmatpush.xpose.msra.mxu0 0.0
  %919 = vmatpush.xpose.msra.mxu0 0.0
  %920 = vmatpush.xpose.msra.mxu0 0.0
  %921 = vmatpush.xpose.msra.mxu0 0.0
  %922 = vmatpush.xpose.msra.mxu0 %v905
  %923 = vmatmul.f32.gmra.mxu0 %v903
  %v924 = vpop.f32.mrf.mxu0
  %v925 = vadd.f32 %v166, %v924
  %926 = vdwg.mxu0
  %v927 = vsel %vm377, %v785, -inf
  %928 = vmax.xlane.f32.xlu0 %v927
  %v929 = vpop.xlane.xlu0 %928
  %v930 = vsel %vm377, %v813, -inf
  %931 = vmax.xlane.f32.xlu0 %v930
  %v932 = vpop.xlane.xlu0 %931
  %v933 = vsel %vm377, %v841, -inf
  %934 = vmax.xlane.f32.xlu0 %v933
  %v935 = vpop.xlane.xlu0 %934
  %v936 = vsel %vm377, %v869, -inf
  %937 = vmax.xlane.f32.xlu0 %v936
  %v938 = vpop.xlane.xlu0 %937
  %v939 = vsel %vm377, %v897, -inf
  %940 = vmax.xlane.f32.xlu0 %v939
  %v941 = vpop.xlane.xlu0 %940
  %v942 = vsel %vm377, %v925, -inf
  %943 = vmax.xlane.f32.xlu0 %v942
  %v944 = vpop.xlane.xlu0 %943
  %v945 = vsub.f32 %v785, %v929
  %v946 = vsub.f32 %v813, %v932
  %v947 = vsub.f32 %v841, %v935
  %v948 = vsub.f32 %v869, %v938
  %v949 = vsub.f32 %v897, %v941
  %v950 = vsub.f32 %v925, %v944
  %v951 = vmul.f32 %v945, 1.442695
  %v952 = vpow.pop %v951
  %v953 = vmul.f32 %v946, 1.442695
  %v954 = vpow.pop %v953
  %v955 = vmul.f32 %v947, 1.442695
  %v956 = vpow.pop %v955
  %v957 = vmul.f32 %v948, 1.442695
  %v958 = vpow.pop %v957
  %v959 = vmul.f32 %v949, 1.442695
  %v960 = vpow.pop %v959
  %v961 = vmul.f32 %v950, 1.442695
  %v962 = vpow.pop %v961
  %v963 = vsel %vm377, %v952, 0.0
  %964 = vadd.xlane.f32.xlu0 %v963
  %v965 = vpop.xlane.xlu0 %964
  %v966 = vsel %vm377, %v954, 0.0
  %967 = vadd.xlane.f32.xlu0 %v966
  %v968 = vpop.xlane.xlu0 %967
  %v969 = vsel %vm377, %v956, 0.0
  %970 = vadd.xlane.f32.xlu0 %v969
  %v971 = vpop.xlane.xlu0 %970
  %v972 = vsel %vm377, %v958, 0.0
  %973 = vadd.xlane.f32.xlu0 %v972
  %v974 = vpop.xlane.xlu0 %973
  %v975 = vsel %vm377, %v960, 0.0
  %976 = vadd.xlane.f32.xlu0 %v975
  %v977 = vpop.xlane.xlu0 %976
  %v978 = vsel %vm377, %v962, 0.0
  %979 = vadd.xlane.f32.xlu0 %v978
  %v980 = vpop.xlane.xlu0 %979
  %v981 = vrcp.pop %v965
  %v982 = vrcp.pop %v968
  %v983 = vrcp.pop %v971
  %v984 = vrcp.pop %v974
  %v985 = vrcp.pop %v977
  %v986 = vrcp.pop %v980
  %v987 = vmul.f32 %v952, %v981
  %v988 = vmul.f32 %v954, %v982
  %v989 = vmul.f32 %v956, %v983
  %v990 = vmul.f32 %v958, %v984
  %v991 = vmul.f32 %v960, %v985
  %v992 = vmul.f32 %v962, %v986
  %993 = vrot.lane.b32.xlu0 %v357, 56
  %v994 = vpop.permute.xlu0 %993
  %v997 = vsel %vm377, %v987, 0
  %999 = vmatpush.msra.mxu0 0.0
  %1000 = vmatpush.msra.mxu0 0.0
  %1001 = vmatpush.msra.mxu0 0.0
  %1002 = vmatpush.msra.mxu0 0.0
  %1003 = vmatpush.msra.mxu0 0.0
  %1004 = vmatpush.msra.mxu0 0.0
  %1005 = vmatpush.msra.mxu0 0.0
  %1006 = vmatpush.msra.mxu0 0.0
  %1007 = vmatpush.msra.mxu0 0.0
  %1008 = vmatpush.msra.mxu0 0.0
  %1009 = vmatpush.msra.mxu0 0.0
  %1010 = vmatpush.msra.mxu0 0.0
  %1011 = vmatpush.msra.mxu0 0.0
  %1012 = vmatpush.msra.mxu0 0.0
  %1013 = vmatpush.msra.mxu0 0.0
  %1014 = vmatpush.msra.mxu0 %v994
  %1015 = vmatmul.f32.gmra.mxu0 %v997
  %v1016 = vpop.f32.mrf.mxu0
  %v1017 = vadd.f32 0.0, %v1016
  %1018 = vdwg.mxu0
  %1019 = vrot.lane.b32.xlu0 %v360, 56
  %v1020 = vpop.permute.xlu0 %1019
  %v1023 = vsel %vm377, %v988, 0
  %1025 = vmatpush.msra.mxu0 0.0
  %1026 = vmatpush.msra.mxu0 0.0
  %1027 = vmatpush.msra.mxu0 0.0
  %1028 = vmatpush.msra.mxu0 0.0
  %1029 = vmatpush.msra.mxu0 0.0
  %1030 = vmatpush.msra.mxu0 0.0
  %1031 = vmatpush.msra.mxu0 0.0
  %1032 = vmatpush.msra.mxu0 0.0
  %1033 = vmatpush.msra.mxu0 0.0
  %1034 = vmatpush.msra.mxu0 0.0
  %1035 = vmatpush.msra.mxu0 0.0
  %1036 = vmatpush.msra.mxu0 0.0
  %1037 = vmatpush.msra.mxu0 0.0
  %1038 = vmatpush.msra.mxu0 0.0
  %1039 = vmatpush.msra.mxu0 0.0
  %1040 = vmatpush.msra.mxu0 %v1020
  %1041 = vmatmul.f32.gmra.mxu0 %v1023
  %v1042 = vpop.f32.mrf.mxu0
  %v1043 = vadd.f32 0.0, %v1042
  %1044 = vdwg.mxu0
  %1045 = vrot.lane.b32.xlu0 %v363, 56
  %v1046 = vpop.permute.xlu0 %1045
  %v1049 = vsel %vm377, %v989, 0
  %1051 = vmatpush.msra.mxu0 0.0
  %1052 = vmatpush.msra.mxu0 0.0
  %1053 = vmatpush.msra.mxu0 0.0
  %1054 = vmatpush.msra.mxu0 0.0
  %1055 = vmatpush.msra.mxu0 0.0
  %1056 = vmatpush.msra.mxu0 0.0
  %1057 = vmatpush.msra.mxu0 0.0
  %1058 = vmatpush.msra.mxu0 0.0
  %1059 = vmatpush.msra.mxu0 0.0
  %1060 = vmatpush.msra.mxu0 0.0
  %1061 = vmatpush.msra.mxu0 0.0
  %1062 = vmatpush.msra.mxu0 0.0
  %1063 = vmatpush.msra.mxu0 0.0
  %1064 = vmatpush.msra.mxu0 0.0
  %1065 = vmatpush.msra.mxu0 0.0
  %1066 = vmatpush.msra.mxu0 %v1046
  %1067 = vmatmul.f32.gmra.mxu0 %v1049
  %v1068 = vpop.f32.mrf.mxu0
  %v1069 = vadd.f32 0.0, %v1068
  %1070 = vdwg.mxu0
  %1071 = vrot.lane.b32.xlu0 %v366, 56
  %v1072 = vpop.permute.xlu0 %1071
  %v1075 = vsel %vm377, %v990, 0
  %1077 = vmatpush.msra.mxu0 0.0
  %1078 = vmatpush.msra.mxu0 0.0
  %1079 = vmatpush.msra.mxu0 0.0
  %1080 = vmatpush.msra.mxu0 0.0
  %1081 = vmatpush.msra.mxu0 0.0
  %1082 = vmatpush.msra.mxu0 0.0
  %1083 = vmatpush.msra.mxu0 0.0
  %1084 = vmatpush.msra.mxu0 0.0
  %1085 = vmatpush.msra.mxu0 0.0
  %1086 = vmatpush.msra.mxu0 0.0
  %1087 = vmatpush.msra.mxu0 0.0
  %1088 = vmatpush.msra.mxu0 0.0
  %1089 = vmatpush.msra.mxu0 0.0
  %1090 = vmatpush.msra.mxu0 0.0
  %1091 = vmatpush.msra.mxu0 0.0
  %1092 = vmatpush.msra.mxu0 %v1072
  %1093 = vmatmul.f32.gmra.mxu0 %v1075
  %v1094 = vpop.f32.mrf.mxu0
  %v1095 = vadd.f32 0.0, %v1094
  %1096 = vdwg.mxu0
  %1097 = vrot.lane.b32.xlu0 %v369, 56
  %v1098 = vpop.permute.xlu0 %1097
  %v1101 = vsel %vm377, %v991, 0
  %1103 = vmatpush.msra.mxu0 0.0
  %1104 = vmatpush.msra.mxu0 0.0
  %1105 = vmatpush.msra.mxu0 0.0
  %1106 = vmatpush.msra.mxu0 0.0
  %1107 = vmatpush.msra.mxu0 0.0
  %1108 = vmatpush.msra.mxu0 0.0
  %1109 = vmatpush.msra.mxu0 0.0
  %1110 = vmatpush.msra.mxu0 0.0
  %1111 = vmatpush.msra.mxu0 0.0
  %1112 = vmatpush.msra.mxu0 0.0
  %1113 = vmatpush.msra.mxu0 0.0
  %1114 = vmatpush.msra.mxu0 0.0
  %1115 = vmatpush.msra.mxu0 0.0
  %1116 = vmatpush.msra.mxu0 0.0
  %1117 = vmatpush.msra.mxu0 0.0
  %1118 = vmatpush.msra.mxu0 %v1098
  %1119 = vmatmul.f32.gmra.mxu0 %v1101
  %v1120 = vpop.f32.mrf.mxu0
  %v1121 = vadd.f32 0.0, %v1120
  %1122 = vdwg.mxu0
  %1123 = vrot.lane.b32.xlu0 %v372, 56
  %v1124 = vpop.permute.xlu0 %1123
  %v1127 = vsel %vm377, %v992, 0
  %1129 = vmatpush.msra.mxu0 0.0
  %1130 = vmatpush.msra.mxu0 0.0
  %1131 = vmatpush.msra.mxu0 0.0
  %1132 = vmatpush.msra.mxu0 0.0
  %1133 = vmatpush.msra.mxu0 0.0
  %1134 = vmatpush.msra.mxu0 0.0
  %1135 = vmatpush.msra.mxu0 0.0
  %1136 = vmatpush.msra.mxu0 0.0
  %1137 = vmatpush.msra.mxu0 0.0
  %1138 = vmatpush.msra.mxu0 0.0
  %1139 = vmatpush.msra.mxu0 0.0
  %1140 = vmatpush.msra.mxu0 0.0
  %1141 = vmatpush.msra.mxu0 0.0
  %1142 = vmatpush.msra.mxu0 0.0
  %1143 = vmatpush.msra.mxu0 0.0
  %1144 = vmatpush.msra.mxu0 %v1124
  %1145 = vmatmul.f32.gmra.mxu0 %v1127
  %v1146 = vpop.f32.mrf.mxu0
  %v1147 = vadd.f32 0.0, %v1146
  %1148 = vdwg.mxu0
  %1149 = vrot.lane.b32.xlu0 %v357, 112
  %v1150 = vpop.permute.xlu0 %1149
  %1151 = vrot.lane.b32.xlu0 %v357, 80
  %v1152 = vpop.permute.xlu0 %1151
  %v1153 = vsel %vm377, %v1150, 0
  %v1155 = vsel %vm377, %v1152, 0
  %1157 = vmatpush.xpose.msra.mxu0 0.0
  %1158 = vmatpush.xpose.msra.mxu0 0.0
  %1159 = vmatpush.xpose.msra.mxu0 0.0
  %1160 = vmatpush.xpose.msra.mxu0 0.0
  %1161 = vmatpush.xpose.msra.mxu0 0.0
  %1162 = vmatpush.xpose.msra.mxu0 0.0
  %1163 = vmatpush.xpose.msra.mxu0 0.0
  %1164 = vmatpush.xpose.msra.mxu0 0.0
  %1165 = vmatpush.xpose.msra.mxu0 0.0
  %1166 = vmatpush.xpose.msra.mxu0 0.0
  %1167 = vmatpush.xpose.msra.mxu0 0.0
  %1168 = vmatpush.xpose.msra.mxu0 0.0
  %1169 = vmatpush.xpose.msra.mxu0 0.0
  %1170 = vmatpush.xpose.msra.mxu0 0.0
  %1171 = vmatpush.xpose.msra.mxu0 0.0
  %1172 = vmatpush.xpose.msra.mxu0 %v1155
  %1173 = vmatmul.f32.gmra.mxu0 %v1153
  %v1174 = vpop.f32.mrf.mxu0
  %v1175 = vadd.f32 %v167, %v1174
  %1176 = vdwg.mxu0
  %1177 = vrot.lane.b32.xlu0 %v360, 112
  %v1178 = vpop.permute.xlu0 %1177
  %1179 = vrot.lane.b32.xlu0 %v360, 80
  %v1180 = vpop.permute.xlu0 %1179
  %v1181 = vsel %vm377, %v1178, 0
  %v1183 = vsel %vm377, %v1180, 0
  %1185 = vmatpush.xpose.msra.mxu0 0.0
  %1186 = vmatpush.xpose.msra.mxu0 0.0
  %1187 = vmatpush.xpose.msra.mxu0 0.0
  %1188 = vmatpush.xpose.msra.mxu0 0.0
  %1189 = vmatpush.xpose.msra.mxu0 0.0
  %1190 = vmatpush.xpose.msra.mxu0 0.0
  %1191 = vmatpush.xpose.msra.mxu0 0.0
  %1192 = vmatpush.xpose.msra.mxu0 0.0
  %1193 = vmatpush.xpose.msra.mxu0 0.0
  %1194 = vmatpush.xpose.msra.mxu0 0.0
  %1195 = vmatpush.xpose.msra.mxu0 0.0
  %1196 = vmatpush.xpose.msra.mxu0 0.0
  %1197 = vmatpush.xpose.msra.mxu0 0.0
  %1198 = vmatpush.xpose.msra.mxu0 0.0
  %1199 = vmatpush.xpose.msra.mxu0 0.0
  %1200 = vmatpush.xpose.msra.mxu0 %v1183
  %1201 = vmatmul.f32.gmra.mxu0 %v1181
  %v1202 = vpop.f32.mrf.mxu0
  %v1203 = vadd.f32 %v168, %v1202
  %1204 = vdwg.mxu0
  %1205 = vrot.lane.b32.xlu0 %v363, 112
  %v1206 = vpop.permute.xlu0 %1205
  %1207 = vrot.lane.b32.xlu0 %v363, 80
  %v1208 = vpop.permute.xlu0 %1207
  %v1209 = vsel %vm377, %v1206, 0
  %v1211 = vsel %vm377, %v1208, 0
  %1213 = vmatpush.xpose.msra.mxu0 0.0
  %1214 = vmatpush.xpose.msra.mxu0 0.0
  %1215 = vmatpush.xpose.msra.mxu0 0.0
  %1216 = vmatpush.xpose.msra.mxu0 0.0
  %1217 = vmatpush.xpose.msra.mxu0 0.0
  %1218 = vmatpush.xpose.msra.mxu0 0.0
  %1219 = vmatpush.xpose.msra.mxu0 0.0
  %1220 = vmatpush.xpose.msra.mxu0 0.0
  %1221 = vmatpush.xpose.msra.mxu0 0.0
  %1222 = vmatpush.xpose.msra.mxu0 0.0
  %1223 = vmatpush.xpose.msra.mxu0 0.0
  %1224 = vmatpush.xpose.msra.mxu0 0.0
  %1225 = vmatpush.xpose.msra.mxu0 0.0
  %1226 = vmatpush.xpose.msra.mxu0 0.0
  %1227 = vmatpush.xpose.msra.mxu0 0.0
  %1228 = vmatpush.xpose.msra.mxu0 %v1211
  %1229 = vmatmul.f32.gmra.mxu0 %v1209
  %v1230 = vpop.f32.mrf.mxu0
  %v1231 = vadd.f32 %v169, %v1230
  %1232 = vdwg.mxu0
  %1233 = vrot.lane.b32.xlu0 %v366, 112
  %v1234 = vpop.permute.xlu0 %1233
  %1235 = vrot.lane.b32.xlu0 %v366, 80
  %v1236 = vpop.permute.xlu0 %1235
  %v1237 = vsel %vm377, %v1234, 0
  %v1239 = vsel %vm377, %v1236, 0
  %1241 = vmatpush.xpose.msra.mxu0 0.0
  %1242 = vmatpush.xpose.msra.mxu0 0.0
  %1243 = vmatpush.xpose.msra.mxu0 0.0
  %1244 = vmatpush.xpose.msra.mxu0 0.0
  %1245 = vmatpush.xpose.msra.mxu0 0.0
  %1246 = vmatpush.xpose.msra.mxu0 0.0
  %1247 = vmatpush.xpose.msra.mxu0 0.0
  %1248 = vmatpush.xpose.msra.mxu0 0.0
  %1249 = vmatpush.xpose.msra.mxu0 0.0
  %1250 = vmatpush.xpose.msra.mxu0 0.0
  %1251 = vmatpush.xpose.msra.mxu0 0.0
  %1252 = vmatpush.xpose.msra.mxu0 0.0
  %1253 = vmatpush.xpose.msra.mxu0 0.0
  %1254 = vmatpush.xpose.msra.mxu0 0.0
  %1255 = vmatpush.xpose.msra.mxu0 0.0
  %1256 = vmatpush.xpose.msra.mxu0 %v1239
  %1257 = vmatmul.f32.gmra.mxu0 %v1237
  %v1258 = vpop.f32.mrf.mxu0
  %v1259 = vadd.f32 %v170, %v1258
  %1260 = vdwg.mxu0
  %1261 = vrot.lane.b32.xlu0 %v369, 112
  %v1262 = vpop.permute.xlu0 %1261
  %1263 = vrot.lane.b32.xlu0 %v369, 80
  %v1264 = vpop.permute.xlu0 %1263
  %v1265 = vsel %vm377, %v1262, 0
  %v1267 = vsel %vm377, %v1264, 0
  %1269 = vmatpush.xpose.msra.mxu0 0.0
  %1270 = vmatpush.xpose.msra.mxu0 0.0
  %1271 = vmatpush.xpose.msra.mxu0 0.0
  %1272 = vmatpush.xpose.msra.mxu0 0.0
  %1273 = vmatpush.xpose.msra.mxu0 0.0
  %1274 = vmatpush.xpose.msra.mxu0 0.0
  %1275 = vmatpush.xpose.msra.mxu0 0.0
  %1276 = vmatpush.xpose.msra.mxu0 0.0
  %1277 = vmatpush.xpose.msra.mxu0 0.0
  %1278 = vmatpush.xpose.msra.mxu0 0.0
  %1279 = vmatpush.xpose.msra.mxu0 0.0
  %1280 = vmatpush.xpose.msra.mxu0 0.0
  %1281 = vmatpush.xpose.msra.mxu0 0.0
  %1282 = vmatpush.xpose.msra.mxu0 0.0
  %1283 = vmatpush.xpose.msra.mxu0 0.0
  %1284 = vmatpush.xpose.msra.mxu0 %v1267
  %1285 = vmatmul.f32.gmra.mxu0 %v1265
  %v1286 = vpop.f32.mrf.mxu0
  %v1287 = vadd.f32 %v171, %v1286
  %1288 = vdwg.mxu0
  %1289 = vrot.lane.b32.xlu0 %v372, 112
  %v1290 = vpop.permute.xlu0 %1289
  %1291 = vrot.lane.b32.xlu0 %v372, 80
  %v1292 = vpop.permute.xlu0 %1291
  %v1293 = vsel %vm377, %v1290, 0
  %v1295 = vsel %vm377, %v1292, 0
  %1297 = vmatpush.xpose.msra.mxu0 0.0
  %1298 = vmatpush.xpose.msra.mxu0 0.0
  %1299 = vmatpush.xpose.msra.mxu0 0.0
  %1300 = vmatpush.xpose.msra.mxu0 0.0
  %1301 = vmatpush.xpose.msra.mxu0 0.0
  %1302 = vmatpush.xpose.msra.mxu0 0.0
  %1303 = vmatpush.xpose.msra.mxu0 0.0
  %1304 = vmatpush.xpose.msra.mxu0 0.0
  %1305 = vmatpush.xpose.msra.mxu0 0.0
  %1306 = vmatpush.xpose.msra.mxu0 0.0
  %1307 = vmatpush.xpose.msra.mxu0 0.0
  %1308 = vmatpush.xpose.msra.mxu0 0.0
  %1309 = vmatpush.xpose.msra.mxu0 0.0
  %1310 = vmatpush.xpose.msra.mxu0 0.0
  %1311 = vmatpush.xpose.msra.mxu0 0.0
  %1312 = vmatpush.xpose.msra.mxu0 %v1295
  %1313 = vmatmul.f32.gmra.mxu0 %v1293
  %v1314 = vpop.f32.mrf.mxu0
  %v1315 = vadd.f32 %v172, %v1314
  %1316 = vdwg.mxu0
  %v1317 = vsel %vm377, %v1175, -inf
  %1318 = vmax.xlane.f32.xlu0 %v1317
  %v1319 = vpop.xlane.xlu0 %1318
  %v1320 = vsel %vm377, %v1203, -inf
  %1321 = vmax.xlane.f32.xlu0 %v1320
  %v1322 = vpop.xlane.xlu0 %1321
  %v1323 = vsel %vm377, %v1231, -inf
  %1324 = vmax.xlane.f32.xlu0 %v1323
  %v1325 = vpop.xlane.xlu0 %1324
  %v1326 = vsel %vm377, %v1259, -inf
  %1327 = vmax.xlane.f32.xlu0 %v1326
  %v1328 = vpop.xlane.xlu0 %1327
  %v1329 = vsel %vm377, %v1287, -inf
  %1330 = vmax.xlane.f32.xlu0 %v1329
  %v1331 = vpop.xlane.xlu0 %1330
  %v1332 = vsel %vm377, %v1315, -inf
  %1333 = vmax.xlane.f32.xlu0 %v1332
  %v1334 = vpop.xlane.xlu0 %1333
  %v1335 = vsub.f32 %v1175, %v1319
  %v1336 = vsub.f32 %v1203, %v1322
  %v1337 = vsub.f32 %v1231, %v1325
  %v1338 = vsub.f32 %v1259, %v1328
  %v1339 = vsub.f32 %v1287, %v1331
  %v1340 = vsub.f32 %v1315, %v1334
  %v1341 = vmul.f32 %v1335, 1.442695
  %v1342 = vpow.pop %v1341
  %v1343 = vmul.f32 %v1336, 1.442695
  %v1344 = vpow.pop %v1343
  %v1345 = vmul.f32 %v1337, 1.442695
  %v1346 = vpow.pop %v1345
  %v1347 = vmul.f32 %v1338, 1.442695
  %v1348 = vpow.pop %v1347
  %v1349 = vmul.f32 %v1339, 1.442695
  %v1350 = vpow.pop %v1349
  %v1351 = vmul.f32 %v1340, 1.442695
  %v1352 = vpow.pop %v1351
  %v1353 = vsel %vm377, %v1342, 0.0
  %1354 = vadd.xlane.f32.xlu0 %v1353
  %v1355 = vpop.xlane.xlu0 %1354
  %v1356 = vsel %vm377, %v1344, 0.0
  %1357 = vadd.xlane.f32.xlu0 %v1356
  %v1358 = vpop.xlane.xlu0 %1357
  %v1359 = vsel %vm377, %v1346, 0.0
  %1360 = vadd.xlane.f32.xlu0 %v1359
  %v1361 = vpop.xlane.xlu0 %1360
  %v1362 = vsel %vm377, %v1348, 0.0
  %1363 = vadd.xlane.f32.xlu0 %v1362
  %v1364 = vpop.xlane.xlu0 %1363
  %v1365 = vsel %vm377, %v1350, 0.0
  %1366 = vadd.xlane.f32.xlu0 %v1365
  %v1367 = vpop.xlane.xlu0 %1366
  %v1368 = vsel %vm377, %v1352, 0.0
  %1369 = vadd.xlane.f32.xlu0 %v1368
  %v1370 = vpop.xlane.xlu0 %1369
  %v1371 = vrcp.pop %v1355
  %v1372 = vrcp.pop %v1358
  %v1373 = vrcp.pop %v1361
  %v1374 = vrcp.pop %v1364
  %v1375 = vrcp.pop %v1367
  %v1376 = vrcp.pop %v1370
  %v1377 = vmul.f32 %v1342, %v1371
  %v1378 = vmul.f32 %v1344, %v1372
  %v1379 = vmul.f32 %v1346, %v1373
  %v1380 = vmul.f32 %v1348, %v1374
  %v1381 = vmul.f32 %v1350, %v1375
  %v1382 = vmul.f32 %v1352, %v1376
  %1383 = vrot.lane.b32.xlu0 %v357, 48
  %v1384 = vpop.permute.xlu0 %1383
  %v1387 = vsel %vm377, %v1377, 0
  %1389 = vmatpush.msra.mxu0 0.0
  %1390 = vmatpush.msra.mxu0 0.0
  %1391 = vmatpush.msra.mxu0 0.0
  %1392 = vmatpush.msra.mxu0 0.0
  %1393 = vmatpush.msra.mxu0 0.0
  %1394 = vmatpush.msra.mxu0 0.0
  %1395 = vmatpush.msra.mxu0 0.0
  %1396 = vmatpush.msra.mxu0 0.0
  %1397 = vmatpush.msra.mxu0 0.0
  %1398 = vmatpush.msra.mxu0 0.0
  %1399 = vmatpush.msra.mxu0 0.0
  %1400 = vmatpush.msra.mxu0 0.0
  %1401 = vmatpush.msra.mxu0 0.0
  %1402 = vmatpush.msra.mxu0 0.0
  %1403 = vmatpush.msra.mxu0 0.0
  %1404 = vmatpush.msra.mxu0 %v1384
  %1405 = vmatmul.f32.gmra.mxu0 %v1387
  %v1406 = vpop.f32.mrf.mxu0
  %v1407 = vadd.f32 0.0, %v1406
  %1408 = vdwg.mxu0
  %1409 = vrot.lane.b32.xlu0 %v360, 48
  %v1410 = vpop.permute.xlu0 %1409
  %v1413 = vsel %vm377, %v1378, 0
  %1415 = vmatpush.msra.mxu0 0.0
  %1416 = vmatpush.msra.mxu0 0.0
  %1417 = vmatpush.msra.mxu0 0.0
  %1418 = vmatpush.msra.mxu0 0.0
  %1419 = vmatpush.msra.mxu0 0.0
  %1420 = vmatpush.msra.mxu0 0.0
  %1421 = vmatpush.msra.mxu0 0.0
  %1422 = vmatpush.msra.mxu0 0.0
  %1423 = vmatpush.msra.mxu0 0.0
  %1424 = vmatpush.msra.mxu0 0.0
  %1425 = vmatpush.msra.mxu0 0.0
  %1426 = vmatpush.msra.mxu0 0.0
  %1427 = vmatpush.msra.mxu0 0.0
  %1428 = vmatpush.msra.mxu0 0.0
  %1429 = vmatpush.msra.mxu0 0.0
  %1430 = vmatpush.msra.mxu0 %v1410
  %1431 = vmatmul.f32.gmra.mxu0 %v1413
  %v1432 = vpop.f32.mrf.mxu0
  %v1433 = vadd.f32 0.0, %v1432
  %1434 = vdwg.mxu0
  %1435 = vrot.lane.b32.xlu0 %v363, 48
  %v1436 = vpop.permute.xlu0 %1435
  %v1439 = vsel %vm377, %v1379, 0
  %1441 = vmatpush.msra.mxu0 0.0
  %1442 = vmatpush.msra.mxu0 0.0
  %1443 = vmatpush.msra.mxu0 0.0
  %1444 = vmatpush.msra.mxu0 0.0
  %1445 = vmatpush.msra.mxu0 0.0
  %1446 = vmatpush.msra.mxu0 0.0
  %1447 = vmatpush.msra.mxu0 0.0
  %1448 = vmatpush.msra.mxu0 0.0
  %1449 = vmatpush.msra.mxu0 0.0
  %1450 = vmatpush.msra.mxu0 0.0
  %1451 = vmatpush.msra.mxu0 0.0
  %1452 = vmatpush.msra.mxu0 0.0
  %1453 = vmatpush.msra.mxu0 0.0
  %1454 = vmatpush.msra.mxu0 0.0
  %1455 = vmatpush.msra.mxu0 0.0
  %1456 = vmatpush.msra.mxu0 %v1436
  %1457 = vmatmul.f32.gmra.mxu0 %v1439
  %v1458 = vpop.f32.mrf.mxu0
  %v1459 = vadd.f32 0.0, %v1458
  %1460 = vdwg.mxu0
  %1461 = vrot.lane.b32.xlu0 %v366, 48
  %v1462 = vpop.permute.xlu0 %1461
  %v1465 = vsel %vm377, %v1380, 0
  %1467 = vmatpush.msra.mxu0 0.0
  %1468 = vmatpush.msra.mxu0 0.0
  %1469 = vmatpush.msra.mxu0 0.0
  %1470 = vmatpush.msra.mxu0 0.0
  %1471 = vmatpush.msra.mxu0 0.0
  %1472 = vmatpush.msra.mxu0 0.0
  %1473 = vmatpush.msra.mxu0 0.0
  %1474 = vmatpush.msra.mxu0 0.0
  %1475 = vmatpush.msra.mxu0 0.0
  %1476 = vmatpush.msra.mxu0 0.0
  %1477 = vmatpush.msra.mxu0 0.0
  %1478 = vmatpush.msra.mxu0 0.0
  %1479 = vmatpush.msra.mxu0 0.0
  %1480 = vmatpush.msra.mxu0 0.0
  %1481 = vmatpush.msra.mxu0 0.0
  %1482 = vmatpush.msra.mxu0 %v1462
  %1483 = vmatmul.f32.gmra.mxu0 %v1465
  %v1484 = vpop.f32.mrf.mxu0
  %v1485 = vadd.f32 0.0, %v1484
  %1486 = vdwg.mxu0
  %1487 = vrot.lane.b32.xlu0 %v369, 48
  %v1488 = vpop.permute.xlu0 %1487
  %v1491 = vsel %vm377, %v1381, 0
  %1493 = vmatpush.msra.mxu0 0.0
  %1494 = vmatpush.msra.mxu0 0.0
  %1495 = vmatpush.msra.mxu0 0.0
  %1496 = vmatpush.msra.mxu0 0.0
  %1497 = vmatpush.msra.mxu0 0.0
  %1498 = vmatpush.msra.mxu0 0.0
  %1499 = vmatpush.msra.mxu0 0.0
  %1500 = vmatpush.msra.mxu0 0.0
  %1501 = vmatpush.msra.mxu0 0.0
  %1502 = vmatpush.msra.mxu0 0.0
  %1503 = vmatpush.msra.mxu0 0.0
  %1504 = vmatpush.msra.mxu0 0.0
  %1505 = vmatpush.msra.mxu0 0.0
  %1506 = vmatpush.msra.mxu0 0.0
  %1507 = vmatpush.msra.mxu0 0.0
  %1508 = vmatpush.msra.mxu0 %v1488
  %1509 = vmatmul.f32.gmra.mxu0 %v1491
  %v1510 = vpop.f32.mrf.mxu0
  %v1511 = vadd.f32 0.0, %v1510
  %1512 = vdwg.mxu0
  %1513 = vrot.lane.b32.xlu0 %v372, 48
  %v1514 = vpop.permute.xlu0 %1513
  %v1517 = vsel %vm377, %v1382, 0
  %1519 = vmatpush.msra.mxu0 0.0
  %1520 = vmatpush.msra.mxu0 0.0
  %1521 = vmatpush.msra.mxu0 0.0
  %1522 = vmatpush.msra.mxu0 0.0
  %1523 = vmatpush.msra.mxu0 0.0
  %1524 = vmatpush.msra.mxu0 0.0
  %1525 = vmatpush.msra.mxu0 0.0
  %1526 = vmatpush.msra.mxu0 0.0
  %1527 = vmatpush.msra.mxu0 0.0
  %1528 = vmatpush.msra.mxu0 0.0
  %1529 = vmatpush.msra.mxu0 0.0
  %1530 = vmatpush.msra.mxu0 0.0
  %1531 = vmatpush.msra.mxu0 0.0
  %1532 = vmatpush.msra.mxu0 0.0
  %1533 = vmatpush.msra.mxu0 0.0
  %1534 = vmatpush.msra.mxu0 %v1514
  %1535 = vmatmul.f32.gmra.mxu0 %v1517
  %v1536 = vpop.f32.mrf.mxu0
  %v1537 = vadd.f32 0.0, %v1536
  %1538 = vdwg.mxu0
  %1539 = vrot.lane.b32.xlu0 %v357, 104
  %v1540 = vpop.permute.xlu0 %1539
  %1541 = vrot.lane.b32.xlu0 %v357, 72
  %v1542 = vpop.permute.xlu0 %1541
  %v1543 = vsel %vm377, %v1540, 0
  %v1545 = vsel %vm377, %v1542, 0
  %1547 = vmatpush.xpose.msra.mxu0 0.0
  %1548 = vmatpush.xpose.msra.mxu0 0.0
  %1549 = vmatpush.xpose.msra.mxu0 0.0
  %1550 = vmatpush.xpose.msra.mxu0 0.0
  %1551 = vmatpush.xpose.msra.mxu0 0.0
  %1552 = vmatpush.xpose.msra.mxu0 0.0
  %1553 = vmatpush.xpose.msra.mxu0 0.0
  %1554 = vmatpush.xpose.msra.mxu0 0.0
  %1555 = vmatpush.xpose.msra.mxu0 0.0
  %1556 = vmatpush.xpose.msra.mxu0 0.0
  %1557 = vmatpush.xpose.msra.mxu0 0.0
  %1558 = vmatpush.xpose.msra.mxu0 0.0
  %1559 = vmatpush.xpose.msra.mxu0 0.0
  %1560 = vmatpush.xpose.msra.mxu0 0.0
  %1561 = vmatpush.xpose.msra.mxu0 0.0
  %1562 = vmatpush.xpose.msra.mxu0 %v1545
  %1563 = vmatmul.f32.gmra.mxu0 %v1543
  %v1564 = vpop.f32.mrf.mxu0
  %v1565 = vadd.f32 %v173, %v1564
  %1566 = vdwg.mxu0
  %1567 = vrot.lane.b32.xlu0 %v360, 104
  %v1568 = vpop.permute.xlu0 %1567
  %1569 = vrot.lane.b32.xlu0 %v360, 72
  %v1570 = vpop.permute.xlu0 %1569
  %v1571 = vsel %vm377, %v1568, 0
  %v1573 = vsel %vm377, %v1570, 0
  %1575 = vmatpush.xpose.msra.mxu0 0.0
  %1576 = vmatpush.xpose.msra.mxu0 0.0
  %1577 = vmatpush.xpose.msra.mxu0 0.0
  %1578 = vmatpush.xpose.msra.mxu0 0.0
  %1579 = vmatpush.xpose.msra.mxu0 0.0
  %1580 = vmatpush.xpose.msra.mxu0 0.0
  %1581 = vmatpush.xpose.msra.mxu0 0.0
  %1582 = vmatpush.xpose.msra.mxu0 0.0
  %1583 = vmatpush.xpose.msra.mxu0 0.0
  %1584 = vmatpush.xpose.msra.mxu0 0.0
  %1585 = vmatpush.xpose.msra.mxu0 0.0
  %1586 = vmatpush.xpose.msra.mxu0 0.0
  %1587 = vmatpush.xpose.msra.mxu0 0.0
  %1588 = vmatpush.xpose.msra.mxu0 0.0
  %1589 = vmatpush.xpose.msra.mxu0 0.0
  %1590 = vmatpush.xpose.msra.mxu0 %v1573
  %1591 = vmatmul.f32.gmra.mxu0 %v1571
  %v1592 = vpop.f32.mrf.mxu0
  %v1593 = vadd.f32 %v174, %v1592
  %1594 = vdwg.mxu0
  %1595 = vrot.lane.b32.xlu0 %v363, 104
  %v1596 = vpop.permute.xlu0 %1595
  %1597 = vrot.lane.b32.xlu0 %v363, 72
  %v1598 = vpop.permute.xlu0 %1597
  %v1599 = vsel %vm377, %v1596, 0
  %v1601 = vsel %vm377, %v1598, 0
  %1603 = vmatpush.xpose.msra.mxu0 0.0
  %1604 = vmatpush.xpose.msra.mxu0 0.0
  %1605 = vmatpush.xpose.msra.mxu0 0.0
  %1606 = vmatpush.xpose.msra.mxu0 0.0
  %1607 = vmatpush.xpose.msra.mxu0 0.0
  %1608 = vmatpush.xpose.msra.mxu0 0.0
  %1609 = vmatpush.xpose.msra.mxu0 0.0
  %1610 = vmatpush.xpose.msra.mxu0 0.0
  %1611 = vmatpush.xpose.msra.mxu0 0.0
  %1612 = vmatpush.xpose.msra.mxu0 0.0
  %1613 = vmatpush.xpose.msra.mxu0 0.0
  %1614 = vmatpush.xpose.msra.mxu0 0.0
  %1615 = vmatpush.xpose.msra.mxu0 0.0
  %1616 = vmatpush.xpose.msra.mxu0 0.0
  %1617 = vmatpush.xpose.msra.mxu0 0.0
  %1618 = vmatpush.xpose.msra.mxu0 %v1601
  %1619 = vmatmul.f32.gmra.mxu0 %v1599
  %v1620 = vpop.f32.mrf.mxu0
  %v1621 = vadd.f32 %v175, %v1620
  %1622 = vdwg.mxu0
  %1623 = vrot.lane.b32.xlu0 %v366, 104
  %v1624 = vpop.permute.xlu0 %1623
  %1625 = vrot.lane.b32.xlu0 %v366, 72
  %v1626 = vpop.permute.xlu0 %1625
  %v1627 = vsel %vm377, %v1624, 0
  %v1629 = vsel %vm377, %v1626, 0
  %1631 = vmatpush.xpose.msra.mxu0 0.0
  %1632 = vmatpush.xpose.msra.mxu0 0.0
  %1633 = vmatpush.xpose.msra.mxu0 0.0
  %1634 = vmatpush.xpose.msra.mxu0 0.0
  %1635 = vmatpush.xpose.msra.mxu0 0.0
  %1636 = vmatpush.xpose.msra.mxu0 0.0
  %1637 = vmatpush.xpose.msra.mxu0 0.0
  %1638 = vmatpush.xpose.msra.mxu0 0.0
  %1639 = vmatpush.xpose.msra.mxu0 0.0
  %1640 = vmatpush.xpose.msra.mxu0 0.0
  %1641 = vmatpush.xpose.msra.mxu0 0.0
  %1642 = vmatpush.xpose.msra.mxu0 0.0
  %1643 = vmatpush.xpose.msra.mxu0 0.0
  %1644 = vmatpush.xpose.msra.mxu0 0.0
  %1645 = vmatpush.xpose.msra.mxu0 0.0
  %1646 = vmatpush.xpose.msra.mxu0 %v1629
  %1647 = vmatmul.f32.gmra.mxu0 %v1627
  %v1648 = vpop.f32.mrf.mxu0
  %v1649 = vadd.f32 %v176, %v1648
  %1650 = vdwg.mxu0
  %1651 = vrot.lane.b32.xlu0 %v369, 104
  %v1652 = vpop.permute.xlu0 %1651
  %1653 = vrot.lane.b32.xlu0 %v369, 72
  %v1654 = vpop.permute.xlu0 %1653
  %v1655 = vsel %vm377, %v1652, 0
  %v1657 = vsel %vm377, %v1654, 0
  %1659 = vmatpush.xpose.msra.mxu0 0.0
  %1660 = vmatpush.xpose.msra.mxu0 0.0
  %1661 = vmatpush.xpose.msra.mxu0 0.0
  %1662 = vmatpush.xpose.msra.mxu0 0.0
  %1663 = vmatpush.xpose.msra.mxu0 0.0
  %1664 = vmatpush.xpose.msra.mxu0 0.0
  %1665 = vmatpush.xpose.msra.mxu0 0.0
  %1666 = vmatpush.xpose.msra.mxu0 0.0
  %1667 = vmatpush.xpose.msra.mxu0 0.0
  %1668 = vmatpush.xpose.msra.mxu0 0.0
  %1669 = vmatpush.xpose.msra.mxu0 0.0
  %1670 = vmatpush.xpose.msra.mxu0 0.0
  %1671 = vmatpush.xpose.msra.mxu0 0.0
  %1672 = vmatpush.xpose.msra.mxu0 0.0
  %1673 = vmatpush.xpose.msra.mxu0 0.0
  %1674 = vmatpush.xpose.msra.mxu0 %v1657
  %1675 = vmatmul.f32.gmra.mxu0 %v1655
  %v1676 = vpop.f32.mrf.mxu0
  %v1677 = vadd.f32 %v177, %v1676
  %1678 = vdwg.mxu0
  %1679 = vrot.lane.b32.xlu0 %v372, 104
  %v1680 = vpop.permute.xlu0 %1679
  %1681 = vrot.lane.b32.xlu0 %v372, 72
  %v1682 = vpop.permute.xlu0 %1681
  %v1683 = vsel %vm377, %v1680, 0
  %v1685 = vsel %vm377, %v1682, 0
  %1687 = vmatpush.xpose.msra.mxu0 0.0
  %1688 = vmatpush.xpose.msra.mxu0 0.0
  %1689 = vmatpush.xpose.msra.mxu0 0.0
  %1690 = vmatpush.xpose.msra.mxu0 0.0
  %1691 = vmatpush.xpose.msra.mxu0 0.0
  %1692 = vmatpush.xpose.msra.mxu0 0.0
  %1693 = vmatpush.xpose.msra.mxu0 0.0
  %1694 = vmatpush.xpose.msra.mxu0 0.0
  %1695 = vmatpush.xpose.msra.mxu0 0.0
  %1696 = vmatpush.xpose.msra.mxu0 0.0
  %1697 = vmatpush.xpose.msra.mxu0 0.0
  %1698 = vmatpush.xpose.msra.mxu0 0.0
  %1699 = vmatpush.xpose.msra.mxu0 0.0
  %1700 = vmatpush.xpose.msra.mxu0 0.0
  %1701 = vmatpush.xpose.msra.mxu0 0.0
  %1702 = vmatpush.xpose.msra.mxu0 %v1685
  %1703 = vmatmul.f32.gmra.mxu0 %v1683
  %v1704 = vpop.f32.mrf.mxu0
  %v1705 = vadd.f32 %v178, %v1704
  %1706 = vdwg.mxu0
  %v1707 = vsel %vm377, %v1565, -inf
  %1708 = vmax.xlane.f32.xlu0 %v1707
  %v1709 = vpop.xlane.xlu0 %1708
  %v1710 = vsel %vm377, %v1593, -inf
  %1711 = vmax.xlane.f32.xlu0 %v1710
  %v1712 = vpop.xlane.xlu0 %1711
  %v1713 = vsel %vm377, %v1621, -inf
  %1714 = vmax.xlane.f32.xlu0 %v1713
  %v1715 = vpop.xlane.xlu0 %1714
  %v1716 = vsel %vm377, %v1649, -inf
  %1717 = vmax.xlane.f32.xlu0 %v1716
  %v1718 = vpop.xlane.xlu0 %1717
  %v1719 = vsel %vm377, %v1677, -inf
  %1720 = vmax.xlane.f32.xlu0 %v1719
  %v1721 = vpop.xlane.xlu0 %1720
  %v1722 = vsel %vm377, %v1705, -inf
  %1723 = vmax.xlane.f32.xlu0 %v1722
  %v1724 = vpop.xlane.xlu0 %1723
  %v1725 = vsub.f32 %v1565, %v1709
  %v1726 = vsub.f32 %v1593, %v1712
  %v1727 = vsub.f32 %v1621, %v1715
  %v1728 = vsub.f32 %v1649, %v1718
  %v1729 = vsub.f32 %v1677, %v1721
  %v1730 = vsub.f32 %v1705, %v1724
  %v1731 = vmul.f32 %v1725, 1.442695
  %v1732 = vpow.pop %v1731
  %v1733 = vmul.f32 %v1726, 1.442695
  %v1734 = vpow.pop %v1733
  %v1735 = vmul.f32 %v1727, 1.442695
  %v1736 = vpow.pop %v1735
  %v1737 = vmul.f32 %v1728, 1.442695
  %v1738 = vpow.pop %v1737
  %v1739 = vmul.f32 %v1729, 1.442695
  %v1740 = vpow.pop %v1739
  %v1741 = vmul.f32 %v1730, 1.442695
  %v1742 = vpow.pop %v1741
  %v1743 = vsel %vm377, %v1732, 0.0
  %1744 = vadd.xlane.f32.xlu0 %v1743
  %v1745 = vpop.xlane.xlu0 %1744
  %v1746 = vsel %vm377, %v1734, 0.0
  %1747 = vadd.xlane.f32.xlu0 %v1746
  %v1748 = vpop.xlane.xlu0 %1747
  %v1749 = vsel %vm377, %v1736, 0.0
  %1750 = vadd.xlane.f32.xlu0 %v1749
  %v1751 = vpop.xlane.xlu0 %1750
  %v1752 = vsel %vm377, %v1738, 0.0
  %1753 = vadd.xlane.f32.xlu0 %v1752
  %v1754 = vpop.xlane.xlu0 %1753
  %v1755 = vsel %vm377, %v1740, 0.0
  %1756 = vadd.xlane.f32.xlu0 %v1755
  %v1757 = vpop.xlane.xlu0 %1756
  %v1758 = vsel %vm377, %v1742, 0.0
  %1759 = vadd.xlane.f32.xlu0 %v1758
  %v1760 = vpop.xlane.xlu0 %1759
  %v1761 = vrcp.pop %v1745
  %v1762 = vrcp.pop %v1748
  %v1763 = vrcp.pop %v1751
  %v1764 = vrcp.pop %v1754
  %v1765 = vrcp.pop %v1757
  %v1766 = vrcp.pop %v1760
  %v1767 = vmul.f32 %v1732, %v1761
  %v1768 = vmul.f32 %v1734, %v1762
  %v1769 = vmul.f32 %v1736, %v1763
  %v1770 = vmul.f32 %v1738, %v1764
  %v1771 = vmul.f32 %v1740, %v1765
  %v1772 = vmul.f32 %v1742, %v1766
  %1773 = vrot.lane.b32.xlu0 %v357, 40
  %v1774 = vpop.permute.xlu0 %1773
  %v1777 = vsel %vm377, %v1767, 0
  %1779 = vmatpush.msra.mxu0 0.0
  %1780 = vmatpush.msra.mxu0 0.0
  %1781 = vmatpush.msra.mxu0 0.0
  %1782 = vmatpush.msra.mxu0 0.0
  %1783 = vmatpush.msra.mxu0 0.0
  %1784 = vmatpush.msra.mxu0 0.0
  %1785 = vmatpush.msra.mxu0 0.0
  %1786 = vmatpush.msra.mxu0 0.0
  %1787 = vmatpush.msra.mxu0 0.0
  %1788 = vmatpush.msra.mxu0 0.0
  %1789 = vmatpush.msra.mxu0 0.0
  %1790 = vmatpush.msra.mxu0 0.0
  %1791 = vmatpush.msra.mxu0 0.0
  %1792 = vmatpush.msra.mxu0 0.0
  %1793 = vmatpush.msra.mxu0 0.0
  %1794 = vmatpush.msra.mxu0 %v1774
  %1795 = vmatmul.f32.gmra.mxu0 %v1777
  %v1796 = vpop.f32.mrf.mxu0
  %v1797 = vadd.f32 0.0, %v1796
  %1798 = vdwg.mxu0
  %1799 = vrot.lane.b32.xlu0 %v360, 40
  %v1800 = vpop.permute.xlu0 %1799
  %v1803 = vsel %vm377, %v1768, 0
  %1805 = vmatpush.msra.mxu0 0.0
  %1806 = vmatpush.msra.mxu0 0.0
  %1807 = vmatpush.msra.mxu0 0.0
  %1808 = vmatpush.msra.mxu0 0.0
  %1809 = vmatpush.msra.mxu0 0.0
  %1810 = vmatpush.msra.mxu0 0.0
  %1811 = vmatpush.msra.mxu0 0.0
  %1812 = vmatpush.msra.mxu0 0.0
  %1813 = vmatpush.msra.mxu0 0.0
  %1814 = vmatpush.msra.mxu0 0.0
  %1815 = vmatpush.msra.mxu0 0.0
  %1816 = vmatpush.msra.mxu0 0.0
  %1817 = vmatpush.msra.mxu0 0.0
  %1818 = vmatpush.msra.mxu0 0.0
  %1819 = vmatpush.msra.mxu0 0.0
  %1820 = vmatpush.msra.mxu0 %v1800
  %1821 = vmatmul.f32.gmra.mxu0 %v1803
  %v1822 = vpop.f32.mrf.mxu0
  %v1823 = vadd.f32 0.0, %v1822
  %1824 = vdwg.mxu0
  %1825 = vrot.lane.b32.xlu0 %v363, 40
  %v1826 = vpop.permute.xlu0 %1825
  %v1829 = vsel %vm377, %v1769, 0
  %1831 = vmatpush.msra.mxu0 0.0
  %1832 = vmatpush.msra.mxu0 0.0
  %1833 = vmatpush.msra.mxu0 0.0
  %1834 = vmatpush.msra.mxu0 0.0
  %1835 = vmatpush.msra.mxu0 0.0
  %1836 = vmatpush.msra.mxu0 0.0
  %1837 = vmatpush.msra.mxu0 0.0
  %1838 = vmatpush.msra.mxu0 0.0
  %1839 = vmatpush.msra.mxu0 0.0
  %1840 = vmatpush.msra.mxu0 0.0
  %1841 = vmatpush.msra.mxu0 0.0
  %1842 = vmatpush.msra.mxu0 0.0
  %1843 = vmatpush.msra.mxu0 0.0
  %1844 = vmatpush.msra.mxu0 0.0
  %1845 = vmatpush.msra.mxu0 0.0
  %1846 = vmatpush.msra.mxu0 %v1826
  %1847 = vmatmul.f32.gmra.mxu0 %v1829
  %v1848 = vpop.f32.mrf.mxu0
  %v1849 = vadd.f32 0.0, %v1848
  %1850 = vdwg.mxu0
  %1851 = vrot.lane.b32.xlu0 %v366, 40
  %v1852 = vpop.permute.xlu0 %1851
  %v1855 = vsel %vm377, %v1770, 0
  %1857 = vmatpush.msra.mxu0 0.0
  %1858 = vmatpush.msra.mxu0 0.0
  %1859 = vmatpush.msra.mxu0 0.0
  %1860 = vmatpush.msra.mxu0 0.0
  %1861 = vmatpush.msra.mxu0 0.0
  %1862 = vmatpush.msra.mxu0 0.0
  %1863 = vmatpush.msra.mxu0 0.0
  %1864 = vmatpush.msra.mxu0 0.0
  %1865 = vmatpush.msra.mxu0 0.0
  %1866 = vmatpush.msra.mxu0 0.0
  %1867 = vmatpush.msra.mxu0 0.0
  %1868 = vmatpush.msra.mxu0 0.0
  %1869 = vmatpush.msra.mxu0 0.0
  %1870 = vmatpush.msra.mxu0 0.0
  %1871 = vmatpush.msra.mxu0 0.0
  %1872 = vmatpush.msra.mxu0 %v1852
  %1873 = vmatmul.f32.gmra.mxu0 %v1855
  %v1874 = vpop.f32.mrf.mxu0
  %v1875 = vadd.f32 0.0, %v1874
  %1876 = vdwg.mxu0
  %1877 = vrot.lane.b32.xlu0 %v369, 40
  %v1878 = vpop.permute.xlu0 %1877
  %v1881 = vsel %vm377, %v1771, 0
  %1883 = vmatpush.msra.mxu0 0.0
  %1884 = vmatpush.msra.mxu0 0.0
  %1885 = vmatpush.msra.mxu0 0.0
  %1886 = vmatpush.msra.mxu0 0.0
  %1887 = vmatpush.msra.mxu0 0.0
  %1888 = vmatpush.msra.mxu0 0.0
  %1889 = vmatpush.msra.mxu0 0.0
  %1890 = vmatpush.msra.mxu0 0.0
  %1891 = vmatpush.msra.mxu0 0.0
  %1892 = vmatpush.msra.mxu0 0.0
  %1893 = vmatpush.msra.mxu0 0.0
  %1894 = vmatpush.msra.mxu0 0.0
  %1895 = vmatpush.msra.mxu0 0.0
  %1896 = vmatpush.msra.mxu0 0.0
  %1897 = vmatpush.msra.mxu0 0.0
  %1898 = vmatpush.msra.mxu0 %v1878
  %1899 = vmatmul.f32.gmra.mxu0 %v1881
  %v1900 = vpop.f32.mrf.mxu0
  %v1901 = vadd.f32 0.0, %v1900
  %1902 = vdwg.mxu0
  %1903 = vrot.lane.b32.xlu0 %v372, 40
  %v1904 = vpop.permute.xlu0 %1903
  %v1907 = vsel %vm377, %v1772, 0
  %1909 = vmatpush.msra.mxu0 0.0
  %1910 = vmatpush.msra.mxu0 0.0
  %1911 = vmatpush.msra.mxu0 0.0
  %1912 = vmatpush.msra.mxu0 0.0
  %1913 = vmatpush.msra.mxu0 0.0
  %1914 = vmatpush.msra.mxu0 0.0
  %1915 = vmatpush.msra.mxu0 0.0
  %1916 = vmatpush.msra.mxu0 0.0
  %1917 = vmatpush.msra.mxu0 0.0
  %1918 = vmatpush.msra.mxu0 0.0
  %1919 = vmatpush.msra.mxu0 0.0
  %1920 = vmatpush.msra.mxu0 0.0
  %1921 = vmatpush.msra.mxu0 0.0
  %1922 = vmatpush.msra.mxu0 0.0
  %1923 = vmatpush.msra.mxu0 0.0
  %1924 = vmatpush.msra.mxu0 %v1904
  %1925 = vmatmul.f32.gmra.mxu0 %v1907
  %v1926 = vpop.f32.mrf.mxu0
  %v1927 = vadd.f32 0.0, %v1926
  %1928 = vdwg.mxu0
  %1935 = vrot.lane.b32.xlu0 %v1017, 8
  %v1936 = vpop.permute.xlu0 %1935
  %1937 = vrot.lane.b32.xlu0 %v1043, 8
  %v1938 = vpop.permute.xlu0 %1937
  %1939 = vrot.lane.b32.xlu0 %v1069, 8
  %v1940 = vpop.permute.xlu0 %1939
  %1941 = vrot.lane.b32.xlu0 %v1095, 8
  %v1942 = vpop.permute.xlu0 %1941
  %1943 = vrot.lane.b32.xlu0 %v1121, 8
  %v1944 = vpop.permute.xlu0 %1943
  %1945 = vrot.lane.b32.xlu0 %v1147, 8
  %v1946 = vpop.permute.xlu0 %1945
  %1959 = vrot.lane.b32.xlu0 %v1407, 16
  %v1960 = vpop.permute.xlu0 %1959
  %1961 = vrot.lane.b32.xlu0 %v1433, 16
  %v1962 = vpop.permute.xlu0 %1961
  %1963 = vrot.lane.b32.xlu0 %v1459, 16
  %v1964 = vpop.permute.xlu0 %1963
  %1965 = vrot.lane.b32.xlu0 %v1485, 16
  %v1966 = vpop.permute.xlu0 %1965
  %1967 = vrot.lane.b32.xlu0 %v1511, 16
  %v1968 = vpop.permute.xlu0 %1967
  %1969 = vrot.lane.b32.xlu0 %v1537, 16
  %v1970 = vpop.permute.xlu0 %1969
  %1983 = vrot.lane.b32.xlu0 %v1797, 24
  %v1984 = vpop.permute.xlu0 %1983
  %1985 = vrot.lane.b32.xlu0 %v1823, 24
  %v1986 = vpop.permute.xlu0 %1985
  %1987 = vrot.lane.b32.xlu0 %v1849, 24
  %v1988 = vpop.permute.xlu0 %1987
  %1989 = vrot.lane.b32.xlu0 %v1875, 24
  %v1990 = vpop.permute.xlu0 %1989
  %1991 = vrot.lane.b32.xlu0 %v1901, 24
  %v1992 = vpop.permute.xlu0 %1991
  %1993 = vrot.lane.b32.xlu0 %v1927, 24
  %v1994 = vpop.permute.xlu0 %1993
  %v2001 = vsel %vm377, %v627, %v1936
  %v2002 = vsel %vm377, %v653, %v1938
  %v2003 = vsel %vm377, %v679, %v1940
  %v2004 = vsel %vm377, %v705, %v1942
  %v2005 = vsel %vm377, %v731, %v1944
  %v2006 = vsel %vm377, %v757, %v1946
  %vm2007 = vcmask 130048
  %v2008 = vsel %vm2007, %v2001, %v1960
  %v2009 = vsel %vm2007, %v2002, %v1962
  %v2010 = vsel %vm2007, %v2003, %v1964
  %v2011 = vsel %vm2007, %v2004, %v1966
  %v2012 = vsel %vm2007, %v2005, %v1968
  %v2013 = vsel %vm2007, %v2006, %v1970
  %vm2014 = vcmask 195584
  %v2015 = vsel %vm2014, %v2008, %v1984
  %v2016 = vsel %vm2014, %v2009, %v1986
  %v2017 = vsel %vm2014, %v2010, %v1988
  %v2018 = vsel %vm2014, %v2011, %v1990
  %v2019 = vsel %vm2014, %v2012, %v1992
  %v2020 = vsel %vm2014, %v2013, %v1994
  %2025 = vrot.lane.b32.xlu0 %v179, 32
  %v2026 = vpop.permute.xlu0 %2025
  %2027 = vrot.lane.b32.xlu0 %v180, 32
  %v2028 = vpop.permute.xlu0 %2027
  %2029 = vrot.lane.b32.xlu0 %v181, 32
  %v2030 = vpop.permute.xlu0 %2029
  %2031 = vrot.lane.b32.xlu0 %v182, 32
  %v2032 = vpop.permute.xlu0 %2031
  %v2038 = vsel %vm210, %v2015, 0
  %v2041 = vsel %vm210, %v2016, 0
  %v2044 = vsel %vm210, %v2017, 0
  %v2047 = vsel %vm210, %v2018, 0
  %v2050 = vsel %vm210, %v2019, 0
  %v2053 = vsel %vm210, %v2020, 0
  %2055 = vmatpush.msra.mxu0 0.0
  %2056 = vmatpush.msra.mxu0 0.0
  %2057 = vmatpush.msra.mxu0 0.0
  %2058 = vmatpush.msra.mxu0 0.0
  %2059 = vmatpush.msra.mxu0 0.0
  %2060 = vmatpush.msra.mxu0 0.0
  %2061 = vmatpush.msra.mxu0 0.0
  %2062 = vmatpush.msra.mxu0 0.0
  %2063 = vmatpush.msra.mxu0 0.0
  %2064 = vmatpush.msra.mxu0 0.0
  %2065 = vmatpush.msra.mxu0 0.0
  %2066 = vmatpush.msra.mxu0 0.0
  %2067 = vmatpush.msra.mxu0 %v2032
  %2068 = vmatpush.msra.mxu0 %v2030
  %2069 = vmatpush.msra.mxu0 %v2028
  %2070 = vmatpush.msra.mxu0 %v2026
  %2071 = vmatmul.f32.gmra.mxu0 %v2038
  %v2072 = vpop.f32.mrf.mxu0
  %v2073 = vadd.f32 0.0, %v2072
  %2074 = vmatmul.f32.gmra.mxu0 %v2041
  %v2075 = vpop.f32.mrf.mxu0
  %v2076 = vadd.f32 0.0, %v2075
  %2077 = vmatmul.f32.gmra.mxu0 %v2044
  %v2078 = vpop.f32.mrf.mxu0
  %v2079 = vadd.f32 0.0, %v2078
  %2080 = vmatmul.f32.gmra.mxu0 %v2047
  %v2081 = vpop.f32.mrf.mxu0
  %v2082 = vadd.f32 0.0, %v2081
  %2083 = vmatmul.f32.gmra.mxu0 %v2050
  %v2084 = vpop.f32.mrf.mxu0
  %v2085 = vadd.f32 0.0, %v2084
  %2086 = vmatmul.f32.gmra.mxu0 %v2053
  %v2087 = vpop.f32.mrf.mxu0
  %v2088 = vadd.f32 0.0, %v2087
  %2089 = vdwg.mxu0
  %v2090 = vadd.f32 %v98, %v2073
  %v2091 = vadd.f32 %v101, %v2076
  %v2092 = vadd.f32 %v104, %v2079
  %v2093 = vadd.f32 %v107, %v2082
  %v2094 = vadd.f32 %v110, %v2085
  %v2095 = vadd.f32 %v113, %v2088
  %v2096 = vld [vmem:[%s6 + $0x2] sm:$0x1]
  %v2097 = vmul.f32 %v2090, %v2090
  %v2098 = vmul.f32 %v2091, %v2091
  %v2099 = vmul.f32 %v2092, %v2092
  %v2100 = vmul.f32 %v2093, %v2093
  %v2101 = vmul.f32 %v2094, %v2094
  %v2102 = vmul.f32 %v2095, %v2095
  %v2103 = vsel %vm210, %v2097, 0.0
  %2104 = vadd.xlane.f32.xlu0 %v2103
  %v2105 = vpop.xlane.xlu0 %2104
  %v2106 = vsel %vm210, %v2098, 0.0
  %2107 = vadd.xlane.f32.xlu0 %v2106
  %v2108 = vpop.xlane.xlu0 %2107
  %v2109 = vsel %vm210, %v2099, 0.0
  %2110 = vadd.xlane.f32.xlu0 %v2109
  %v2111 = vpop.xlane.xlu0 %2110
  %v2112 = vsel %vm210, %v2100, 0.0
  %2113 = vadd.xlane.f32.xlu0 %v2112
  %v2114 = vpop.xlane.xlu0 %2113
  %v2115 = vsel %vm210, %v2101, 0.0
  %2116 = vadd.xlane.f32.xlu0 %v2115
  %v2117 = vpop.xlane.xlu0 %2116
  %v2118 = vsel %vm210, %v2102, 0.0
  %2119 = vadd.xlane.f32.xlu0 %v2118
  %v2120 = vpop.xlane.xlu0 %2119
  %v2121 = vmul.f32 %v2105, %v235
  %v2122 = vmul.f32 %v2108, %v235
  %v2123 = vmul.f32 %v2111, %v235
  %v2124 = vmul.f32 %v2114, %v235
  %v2125 = vmul.f32 %v2117, %v235
  %v2126 = vmul.f32 %v2120, %v235
  %v2127 = vadd.f32 %v2121, 1e-06
  %v2128 = vadd.f32 %v2122, 1e-06
  %v2129 = vadd.f32 %v2123, 1e-06
  %v2130 = vadd.f32 %v2124, 1e-06
  %v2131 = vadd.f32 %v2125, 1e-06
  %v2132 = vadd.f32 %v2126, 1e-06
  %v2133 = vrsqrt.pop %v2127
  %v2134 = vmul.f32 %v2133, %v2127
  %v2135 = vmul.f32 %v2134, %v2133
  %v2136 = vmul.f32 0.5, %v2135
  %v2137 = vsub.f32 1.5, %v2136
  %v2138 = vmul.f32 %v2133, %v2137
  %vm2139 = vweird.f32 %v2127
  %vm2140 = vweird.f32 %v2133
  %vm2141 = vmor %vm2139, %vm2140
  %v2142 = vsel %vm2141, %v2133, %v2138
  %v2143 = vrsqrt.pop %v2128
  %v2144 = vmul.f32 %v2143, %v2128
  %v2145 = vmul.f32 %v2144, %v2143
  %v2146 = vmul.f32 0.5, %v2145
  %v2147 = vsub.f32 1.5, %v2146
  %v2148 = vmul.f32 %v2143, %v2147
  %vm2149 = vweird.f32 %v2128
  %vm2150 = vweird.f32 %v2143
  %vm2151 = vmor %vm2149, %vm2150
  %v2152 = vsel %vm2151, %v2143, %v2148
  %v2153 = vrsqrt.pop %v2129
  %v2154 = vmul.f32 %v2153, %v2129
  %v2155 = vmul.f32 %v2154, %v2153
  %v2156 = vmul.f32 0.5, %v2155
  %v2157 = vsub.f32 1.5, %v2156
  %v2158 = vmul.f32 %v2153, %v2157
  %vm2159 = vweird.f32 %v2129
  %vm2160 = vweird.f32 %v2153
  %vm2161 = vmor %vm2159, %vm2160
  %v2162 = vsel %vm2161, %v2153, %v2158
  %v2163 = vrsqrt.pop %v2130
  %v2164 = vmul.f32 %v2163, %v2130
  %v2165 = vmul.f32 %v2164, %v2163
  %v2166 = vmul.f32 0.5, %v2165
  %v2167 = vsub.f32 1.5, %v2166
  %v2168 = vmul.f32 %v2163, %v2167
  %vm2169 = vweird.f32 %v2130
  %vm2170 = vweird.f32 %v2163
  %vm2171 = vmor %vm2169, %vm2170
  %v2172 = vsel %vm2171, %v2163, %v2168
  %v2173 = vrsqrt.pop %v2131
  %v2174 = vmul.f32 %v2173, %v2131
  %v2175 = vmul.f32 %v2174, %v2173
  %v2176 = vmul.f32 0.5, %v2175
  %v2177 = vsub.f32 1.5, %v2176
  %v2178 = vmul.f32 %v2173, %v2177
  %vm2179 = vweird.f32 %v2131
  %vm2180 = vweird.f32 %v2173
  %vm2181 = vmor %vm2179, %vm2180
  %v2182 = vsel %vm2181, %v2173, %v2178
  %v2183 = vrsqrt.pop %v2132
  %v2184 = vmul.f32 %v2183, %v2132
  %v2185 = vmul.f32 %v2184, %v2183
  %v2186 = vmul.f32 0.5, %v2185
  %v2187 = vsub.f32 1.5, %v2186
  %v2188 = vmul.f32 %v2183, %v2187
  %vm2189 = vweird.f32 %v2132
  %vm2190 = vweird.f32 %v2183
  %vm2191 = vmor %vm2189, %vm2190
  %v2192 = vsel %vm2191, %v2183, %v2188
  %v2193 = vmul.f32 %v2090, %v2142
  %v2194 = vmul.f32 %v2091, %v2152
  %v2195 = vmul.f32 %v2092, %v2162
  %v2196 = vmul.f32 %v2093, %v2172
  %v2197 = vmul.f32 %v2094, %v2182
  %v2198 = vmul.f32 %v2095, %v2192
  %v2199 = vperm.slane %v2096, 0
  %v2200 = vmul.f32 %v2193, %v2199
  %v2201 = vmul.f32 %v2194, %v2199
  %v2202 = vmul.f32 %v2195, %v2199
  %v2203 = vmul.f32 %v2196, %v2199
  %v2204 = vmul.f32 %v2197, %v2199
  %v2205 = vmul.f32 %v2198, %v2199
  %v2207 = vsel %vm210, %v2200, 0
  %v2210 = vsel %vm210, %v2201, 0
  %v2213 = vsel %vm210, %v2202, 0
  %v2216 = vsel %vm210, %v2203, 0
  %v2219 = vsel %vm210, %v2204, 0
  %v2222 = vsel %vm210, %v2205, 0
  %2224 = vmatpush.msra.mxu0 0.0
  %2225 = vmatpush.msra.mxu0 0.0
  %2226 = vmatpush.msra.mxu0 0.0
  %2227 = vmatpush.msra.mxu0 0.0
  %2228 = vmatpush.msra.mxu0 0.0
  %2229 = vmatpush.msra.mxu0 0.0
  %2230 = vmatpush.msra.mxu0 0.0
  %2231 = vmatpush.msra.mxu0 0.0
  %2232 = vmatpush.msra.mxu0 0.0
  %2233 = vmatpush.msra.mxu0 0.0
  %2234 = vmatpush.msra.mxu0 0.0
  %2235 = vmatpush.msra.mxu0 0.0
  %2236 = vmatpush.msra.mxu0 %v186
  %2237 = vmatpush.msra.mxu0 %v185
  %2238 = vmatpush.msra.mxu0 %v184
  %2239 = vmatpush.msra.mxu0 %v183
  %2240 = vmatmul.f32.gmra.mxu0 %v2207
  %v2241 = vpop.f32.mrf.mxu0
  %v2242 = vadd.f32 0.0, %v2241
  %2243 = vmatmul.f32.gmra.mxu0 %v2210
  %v2244 = vpop.f32.mrf.mxu0
  %v2245 = vadd.f32 0.0, %v2244
  %2246 = vmatmul.f32.gmra.mxu0 %v2213
  %v2247 = vpop.f32.mrf.mxu0
  %v2248 = vadd.f32 0.0, %v2247
  %2249 = vmatmul.f32.gmra.mxu0 %v2216
  %v2250 = vpop.f32.mrf.mxu0
  %v2251 = vadd.f32 0.0, %v2250
  %2252 = vmatmul.f32.gmra.mxu0 %v2219
  %v2253 = vpop.f32.mrf.mxu0
  %v2254 = vadd.f32 0.0, %v2253
  %2255 = vmatmul.f32.gmra.mxu0 %v2222
  %v2256 = vpop.f32.mrf.mxu0
  %v2257 = vadd.f32 0.0, %v2256
  %2258 = vdwg.mxu0
  %v2259 = vmul.f32 %v2242, %v2242
  %v2260 = vmul.f32 %v2245, %v2245
  %v2261 = vmul.f32 %v2248, %v2248
  %v2262 = vmul.f32 %v2251, %v2251
  %v2263 = vmul.f32 %v2254, %v2254
  %v2264 = vmul.f32 %v2257, %v2257
  %v2265 = vmul.f32 %v2242, %v2259
  %v2266 = vmul.f32 %v2245, %v2260
  %v2267 = vmul.f32 %v2248, %v2261
  %v2268 = vmul.f32 %v2251, %v2262
  %v2269 = vmul.f32 %v2254, %v2263
  %v2270 = vmul.f32 %v2257, %v2264
  %v2271 = vmul.f32 %v2265, 0.044715
  %v2272 = vmul.f32 %v2266, 0.044715
  %v2273 = vmul.f32 %v2267, 0.044715
  %v2274 = vmul.f32 %v2268, 0.044715
  %v2275 = vmul.f32 %v2269, 0.044715
  %v2276 = vmul.f32 %v2270, 0.044715
  %v2277 = vadd.f32 %v2242, %v2271
  %v2278 = vadd.f32 %v2245, %v2272
  %v2279 = vadd.f32 %v2248, %v2273
  %v2280 = vadd.f32 %v2251, %v2274
  %v2281 = vadd.f32 %v2254, %v2275
  %v2282 = vadd.f32 %v2257, %v2276
  %v2283 = vmul.f32 %v2277, 0.7978846
  %v2284 = vmul.f32 %v2278, 0.7978846
  %v2285 = vmul.f32 %v2279, 0.7978846
  %v2286 = vmul.f32 %v2280, 0.7978846
  %v2287 = vmul.f32 %v2281, 0.7978846
  %v2288 = vmul.f32 %v2282, 0.7978846
  %v2289 = vtanh.pop %v2283
  %v2290 = vtanh.pop %v2284
  %v2291 = vtanh.pop %v2285
  %v2292 = vtanh.pop %v2286
  %v2293 = vtanh.pop %v2287
  %v2294 = vtanh.pop %v2288
  %v2295 = vadd.f32 %v2289, 1.0
  %v2296 = vadd.f32 %v2290, 1.0
  %v2297 = vadd.f32 %v2291, 1.0
  %v2298 = vadd.f32 %v2292, 1.0
  %v2299 = vadd.f32 %v2293, 1.0
  %v2300 = vadd.f32 %v2294, 1.0
  %v2301 = vmul.f32 %v2295, 0.5
  %v2302 = vmul.f32 %v2296, 0.5
  %v2303 = vmul.f32 %v2297, 0.5
  %v2304 = vmul.f32 %v2298, 0.5
  %v2305 = vmul.f32 %v2299, 0.5
  %v2306 = vmul.f32 %v2300, 0.5
  %v2307 = vmul.f32 %v2242, %v2301
  %v2308 = vmul.f32 %v2245, %v2302
  %v2309 = vmul.f32 %v2248, %v2303
  %v2310 = vmul.f32 %v2251, %v2304
  %v2311 = vmul.f32 %v2254, %v2305
  %v2312 = vmul.f32 %v2257, %v2306
  %2313 = vrot.lane.b32.xlu0 %v2242, 64
  %v2314 = vpop.permute.xlu0 %2313
  %2315 = vrot.lane.b32.xlu0 %v2245, 64
  %v2316 = vpop.permute.xlu0 %2315
  %2317 = vrot.lane.b32.xlu0 %v2248, 64
  %v2318 = vpop.permute.xlu0 %2317
  %2319 = vrot.lane.b32.xlu0 %v2251, 64
  %v2320 = vpop.permute.xlu0 %2319
  %2321 = vrot.lane.b32.xlu0 %v2254, 64
  %v2322 = vpop.permute.xlu0 %2321
  %2323 = vrot.lane.b32.xlu0 %v2257, 64
  %v2324 = vpop.permute.xlu0 %2323
  %v2325 = vmul.f32 %v2307, %v2314
  %v2326 = vmul.f32 %v2308, %v2316
  %v2327 = vmul.f32 %v2309, %v2318
  %v2328 = vmul.f32 %v2310, %v2320
  %v2329 = vmul.f32 %v2311, %v2322
  %v2330 = vmul.f32 %v2312, %v2324
  %2331 = vmatpush.msra.mxu0 %v202
  %2332 = vmatpush.msra.mxu0 %v201
  %2333 = vmatpush.msra.mxu0 %v200
  %2334 = vmatpush.msra.mxu0 %v199
  %2335 = vmatpush.msra.mxu0 %v198
  %2336 = vmatpush.msra.mxu0 %v197
  %2337 = vmatpush.msra.mxu0 %v196
  %2338 = vmatpush.msra.mxu0 %v195
  %2339 = vmatpush.msra.mxu0 %v194
  %2340 = vmatpush.msra.mxu0 %v193
  %2341 = vmatpush.msra.mxu0 %v192
  %2342 = vmatpush.msra.mxu0 %v191
  %2343 = vmatpush.msra.mxu0 %v190
  %2344 = vmatpush.msra.mxu0 %v189
  %2345 = vmatpush.msra.mxu0 %v188
  %2346 = vmatpush.msra.mxu0 %v187
  %2347 = vmatmul.f32.gmra.mxu0 %v2325
  %v2348 = vpop.f32.mrf.mxu0
  %v2349 = vadd.f32 0.0, %v2348
  %2350 = vmatmul.f32.gmra.mxu0 %v2326
  %v2351 = vpop.f32.mrf.mxu0
  %v2352 = vadd.f32 0.0, %v2351
  %2353 = vmatmul.f32.gmra.mxu0 %v2327
  %v2354 = vpop.f32.mrf.mxu0
  %v2355 = vadd.f32 0.0, %v2354
  %2356 = vmatmul.f32.gmra.mxu0 %v2328
  %v2357 = vpop.f32.mrf.mxu0
  %v2358 = vadd.f32 0.0, %v2357
  %2359 = vmatmul.f32.gmra.mxu0 %v2329
  %v2360 = vpop.f32.mrf.mxu0
  %v2361 = vadd.f32 0.0, %v2360
  %2362 = vmatmul.f32.gmra.mxu0 %v2330
  %v2363 = vpop.f32.mrf.mxu0
  %v2364 = vadd.f32 0.0, %v2363
  %2365 = vdwg.mxu0
  %v2366 = vadd.f32 %v2090, %v2349
  %v2367 = vadd.f32 %v2091, %v2352
  %v2368 = vadd.f32 %v2092, %v2355
  %v2369 = vadd.f32 %v2093, %v2358
  %v2370 = vadd.f32 %v2094, %v2361
  %v2371 = vadd.f32 %v2095, %v2364
  %s2372 = scalar_lea.vmem %s4, 32
  %v2373 = vld [vmem:[%s2372] sm:$0xff]
  %v2374 = vld [vmem:[%s2372 + $0x8] sm:$0xff]
  %v2375 = vld [vmem:[%s2372 + $0x10] sm:$0xff]
  %v2376 = vld [vmem:[%s2372 + $0x18] sm:$0xff]
  %s2377 = scalar_lea.vmem %s5, 160
  %v2378 = vld [vmem:[%s2377] sm:$0xff]
  %v2379 = vld [vmem:[%s2377 + $0x8] sm:$0xff]
  %v2380 = vld [vmem:[%s2377 + $0x10] sm:$0xff]
  %v2381 = vld [vmem:[%s2377 + $0x18] sm:$0xff]
  %v2382 = vld [vmem:[%s2377 + $0x20] sm:$0xff]
  %v2383 = vld [vmem:[%s2377 + $0x28] sm:$0xff]
  %v2384 = vld [vmem:[%s2377 + $0x30] sm:$0xff]
  %v2385 = vld [vmem:[%s2377 + $0x38] sm:$0xff]
  %v2386 = vld [vmem:[%s2377 + $0x40] sm:$0xff]
  %v2387 = vld [vmem:[%s2377 + $0x48] sm:$0xff]
  %v2388 = vld [vmem:[%s2377 + $0x50] sm:$0xff]
  %v2389 = vld [vmem:[%s2377 + $0x58] sm:$0xff]
  %v2390 = vld [vmem:[%s2377 + $0x60] sm:$0xff]
  %v2391 = vld [vmem:[%s2377 + $0x68] sm:$0xff]
  %v2392 = vld [vmem:[%s2377 + $0x70] sm:$0xff]
  %v2393 = vld [vmem:[%s2377 + $0x78] sm:$0xff]
  %v2394 = vld [vmem:[%s2377 + $0x80] sm:$0xff]
  %v2395 = vld [vmem:[%s2377 + $0x88] sm:$0xff]
  %v2396 = vld [vmem:[%s2377 + $0x90] sm:$0xff]
  %v2397 = vld [vmem:[%s2377 + $0x98] sm:$0xff]
  %v2398 = vld [vmem:[%s6 + $0x1] sm:$0x1]
  %v2399 = vmul.f32 %v2366, %v2366
  %v2400 = vmul.f32 %v2367, %v2367
  %v2401 = vmul.f32 %v2368, %v2368
  %v2402 = vmul.f32 %v2369, %v2369
  %v2403 = vmul.f32 %v2370, %v2370
  %v2404 = vmul.f32 %v2371, %v2371
  %v2405 = vsel %vm210, %v2399, 0.0
  %2406 = vadd.xlane.f32.xlu0 %v2405
  %v2407 = vpop.xlane.xlu0 %2406
  %v2408 = vsel %vm210, %v2400, 0.0
  %2409 = vadd.xlane.f32.xlu0 %v2408
  %v2410 = vpop.xlane.xlu0 %2409
  %v2411 = vsel %vm210, %v2401, 0.0
  %2412 = vadd.xlane.f32.xlu0 %v2411
  %v2413 = vpop.xlane.xlu0 %2412
  %v2414 = vsel %vm210, %v2402, 0.0
  %2415 = vadd.xlane.f32.xlu0 %v2414
  %v2416 = vpop.xlane.xlu0 %2415
  %v2417 = vsel %vm210, %v2403, 0.0
  %2418 = vadd.xlane.f32.xlu0 %v2417
  %v2419 = vpop.xlane.xlu0 %2418
  %v2420 = vsel %vm210, %v2404, 0.0
  %2421 = vadd.xlane.f32.xlu0 %v2420
  %v2422 = vpop.xlane.xlu0 %2421
  %v2423 = vmul.f32 %v2407, %v235
  %v2424 = vmul.f32 %v2410, %v235
  %v2425 = vmul.f32 %v2413, %v235
  %v2426 = vmul.f32 %v2416, %v235
  %v2427 = vmul.f32 %v2419, %v235
  %v2428 = vmul.f32 %v2422, %v235
  %v2429 = vadd.f32 %v2423, 1e-06
  %v2430 = vadd.f32 %v2424, 1e-06
  %v2431 = vadd.f32 %v2425, 1e-06
  %v2432 = vadd.f32 %v2426, 1e-06
  %v2433 = vadd.f32 %v2427, 1e-06
  %v2434 = vadd.f32 %v2428, 1e-06
  %v2435 = vrsqrt.pop %v2429
  %v2436 = vmul.f32 %v2435, %v2429
  %v2437 = vmul.f32 %v2436, %v2435
  %v2438 = vmul.f32 0.5, %v2437
  %v2439 = vsub.f32 1.5, %v2438
  %v2440 = vmul.f32 %v2435, %v2439
  %vm2441 = vweird.f32 %v2429
  %vm2442 = vweird.f32 %v2435
  %vm2443 = vmor %vm2441, %vm2442
  %v2444 = vsel %vm2443, %v2435, %v2440
  %v2445 = vrsqrt.pop %v2430
  %v2446 = vmul.f32 %v2445, %v2430
  %v2447 = vmul.f32 %v2446, %v2445
  %v2448 = vmul.f32 0.5, %v2447
  %v2449 = vsub.f32 1.5, %v2448
  %v2450 = vmul.f32 %v2445, %v2449
  %vm2451 = vweird.f32 %v2430
  %vm2452 = vweird.f32 %v2445
  %vm2453 = vmor %vm2451, %vm2452
  %v2454 = vsel %vm2453, %v2445, %v2450
  %v2455 = vrsqrt.pop %v2431
  %v2456 = vmul.f32 %v2455, %v2431
  %v2457 = vmul.f32 %v2456, %v2455
  %v2458 = vmul.f32 0.5, %v2457
  %v2459 = vsub.f32 1.5, %v2458
  %v2460 = vmul.f32 %v2455, %v2459
  %vm2461 = vweird.f32 %v2431
  %vm2462 = vweird.f32 %v2455
  %vm2463 = vmor %vm2461, %vm2462
  %v2464 = vsel %vm2463, %v2455, %v2460
  %v2465 = vrsqrt.pop %v2432
  %v2466 = vmul.f32 %v2465, %v2432
  %v2467 = vmul.f32 %v2466, %v2465
  %v2468 = vmul.f32 0.5, %v2467
  %v2469 = vsub.f32 1.5, %v2468
  %v2470 = vmul.f32 %v2465, %v2469
  %vm2471 = vweird.f32 %v2432
  %vm2472 = vweird.f32 %v2465
  %vm2473 = vmor %vm2471, %vm2472
  %v2474 = vsel %vm2473, %v2465, %v2470
  %v2475 = vrsqrt.pop %v2433
  %v2476 = vmul.f32 %v2475, %v2433
  %v2477 = vmul.f32 %v2476, %v2475
  %v2478 = vmul.f32 0.5, %v2477
  %v2479 = vsub.f32 1.5, %v2478
  %v2480 = vmul.f32 %v2475, %v2479
  %vm2481 = vweird.f32 %v2433
  %vm2482 = vweird.f32 %v2475
  %vm2483 = vmor %vm2481, %vm2482
  %v2484 = vsel %vm2483, %v2475, %v2480
  %v2485 = vrsqrt.pop %v2434
  %v2486 = vmul.f32 %v2485, %v2434
  %v2487 = vmul.f32 %v2486, %v2485
  %v2488 = vmul.f32 0.5, %v2487
  %v2489 = vsub.f32 1.5, %v2488
  %v2490 = vmul.f32 %v2485, %v2489
  %vm2491 = vweird.f32 %v2434
  %vm2492 = vweird.f32 %v2485
  %vm2493 = vmor %vm2491, %vm2492
  %v2494 = vsel %vm2493, %v2485, %v2490
  %v2495 = vmul.f32 %v2366, %v2444
  %v2496 = vmul.f32 %v2367, %v2454
  %v2497 = vmul.f32 %v2368, %v2464
  %v2498 = vmul.f32 %v2369, %v2474
  %v2499 = vmul.f32 %v2370, %v2484
  %v2500 = vmul.f32 %v2371, %v2494
  %v2501 = vperm.slane %v2398, 0
  %v2502 = vmul.f32 %v2495, %v2501
  %v2503 = vmul.f32 %v2496, %v2501
  %v2504 = vmul.f32 %v2497, %v2501
  %v2505 = vmul.f32 %v2498, %v2501
  %v2506 = vmul.f32 %v2499, %v2501
  %v2507 = vmul.f32 %v2500, %v2501
  %v2509 = vsel %vm210, %v2502, 0
  %v2512 = vsel %vm210, %v2503, 0
  %v2515 = vsel %vm210, %v2504, 0
  %v2518 = vsel %vm210, %v2505, 0
  %v2521 = vsel %vm210, %v2506, 0
  %v2524 = vsel %vm210, %v2507, 0
  %2526 = vmatpush.msra.mxu0 0.0
  %2527 = vmatpush.msra.mxu0 0.0
  %2528 = vmatpush.msra.mxu0 0.0
  %2529 = vmatpush.msra.mxu0 0.0
  %2530 = vmatpush.msra.mxu0 0.0
  %2531 = vmatpush.msra.mxu0 0.0
  %2532 = vmatpush.msra.mxu0 0.0
  %2533 = vmatpush.msra.mxu0 0.0
  %2534 = vmatpush.msra.mxu0 0.0
  %2535 = vmatpush.msra.mxu0 0.0
  %2536 = vmatpush.msra.mxu0 0.0
  %2537 = vmatpush.msra.mxu0 0.0
  %2538 = vmatpush.msra.mxu0 %v2376
  %2539 = vmatpush.msra.mxu0 %v2375
  %2540 = vmatpush.msra.mxu0 %v2374
  %2541 = vmatpush.msra.mxu0 %v2373
  %2542 = vmatmul.f32.gmra.mxu0 %v2509
  %v2543 = vpop.f32.mrf.mxu0
  %v2544 = vadd.f32 0.0, %v2543
  %2545 = vmatmul.f32.gmra.mxu0 %v2512
  %v2546 = vpop.f32.mrf.mxu0
  %v2547 = vadd.f32 0.0, %v2546
  %2548 = vmatmul.f32.gmra.mxu0 %v2515
  %v2549 = vpop.f32.mrf.mxu0
  %v2550 = vadd.f32 0.0, %v2549
  %2551 = vmatmul.f32.gmra.mxu0 %v2518
  %v2552 = vpop.f32.mrf.mxu0
  %v2553 = vadd.f32 0.0, %v2552
  %2554 = vmatmul.f32.gmra.mxu0 %v2521
  %v2555 = vpop.f32.mrf.mxu0
  %v2556 = vadd.f32 0.0, %v2555
  %2557 = vmatmul.f32.gmra.mxu0 %v2524
  %v2558 = vpop.f32.mrf.mxu0
  %v2559 = vadd.f32 0.0, %v2558
  %2560 = vdwg.mxu0
  %2562 = vrot.lane.b32.xlu0 %v2544, 96
  %v2563 = vpop.permute.xlu0 %2562
  %v2564 = vsel %vm377, %v2544, 0
  %v2566 = vsel %vm377, %v2563, 0
  %2568 = vmatpush.xpose.msra.mxu0 0.0
  %2569 = vmatpush.xpose.msra.mxu0 0.0
  %2570 = vmatpush.xpose.msra.mxu0 0.0
  %2571 = vmatpush.xpose.msra.mxu0 0.0
  %2572 = vmatpush.xpose.msra.mxu0 0.0
  %2573 = vmatpush.xpose.msra.mxu0 0.0
  %2574 = vmatpush.xpose.msra.mxu0 0.0
  %2575 = vmatpush.xpose.msra.mxu0 0.0
  %2576 = vmatpush.xpose.msra.mxu0 0.0
  %2577 = vmatpush.xpose.msra.mxu0 0.0
  %2578 = vmatpush.xpose.msra.mxu0 0.0
  %2579 = vmatpush.xpose.msra.mxu0 0.0
  %2580 = vmatpush.xpose.msra.mxu0 0.0
  %2581 = vmatpush.xpose.msra.mxu0 0.0
  %2582 = vmatpush.xpose.msra.mxu0 0.0
  %2583 = vmatpush.xpose.msra.mxu0 %v2566
  %2584 = vmatmul.f32.gmra.mxu0 %v2564
  %v2585 = vpop.f32.mrf.mxu0
  %v2586 = vadd.f32 %v155, %v2585
  %2587 = vdwg.mxu0
  %2589 = vrot.lane.b32.xlu0 %v2547, 96
  %v2590 = vpop.permute.xlu0 %2589
  %v2591 = vsel %vm377, %v2547, 0
  %v2593 = vsel %vm377, %v2590, 0
  %2595 = vmatpush.xpose.msra.mxu0 0.0
  %2596 = vmatpush.xpose.msra.mxu0 0.0
  %2597 = vmatpush.xpose.msra.mxu0 0.0
  %2598 = vmatpush.xpose.msra.mxu0 0.0
  %2599 = vmatpush.xpose.msra.mxu0 0.0
  %2600 = vmatpush.xpose.msra.mxu0 0.0
  %2601 = vmatpush.xpose.msra.mxu0 0.0
  %2602 = vmatpush.xpose.msra.mxu0 0.0
  %2603 = vmatpush.xpose.msra.mxu0 0.0
  %2604 = vmatpush.xpose.msra.mxu0 0.0
  %2605 = vmatpush.xpose.msra.mxu0 0.0
  %2606 = vmatpush.xpose.msra.mxu0 0.0
  %2607 = vmatpush.xpose.msra.mxu0 0.0
  %2608 = vmatpush.xpose.msra.mxu0 0.0
  %2609 = vmatpush.xpose.msra.mxu0 0.0
  %2610 = vmatpush.xpose.msra.mxu0 %v2593
  %2611 = vmatmul.f32.gmra.mxu0 %v2591
  %v2612 = vpop.f32.mrf.mxu0
  %v2613 = vadd.f32 %v156, %v2612
  %2614 = vdwg.mxu0
  %2616 = vrot.lane.b32.xlu0 %v2550, 96
  %v2617 = vpop.permute.xlu0 %2616
  %v2618 = vsel %vm377, %v2550, 0
  %v2620 = vsel %vm377, %v2617, 0
  %2622 = vmatpush.xpose.msra.mxu0 0.0
  %2623 = vmatpush.xpose.msra.mxu0 0.0
  %2624 = vmatpush.xpose.msra.mxu0 0.0
  %2625 = vmatpush.xpose.msra.mxu0 0.0
  %2626 = vmatpush.xpose.msra.mxu0 0.0
  %2627 = vmatpush.xpose.msra.mxu0 0.0
  %2628 = vmatpush.xpose.msra.mxu0 0.0
  %2629 = vmatpush.xpose.msra.mxu0 0.0
  %2630 = vmatpush.xpose.msra.mxu0 0.0
  %2631 = vmatpush.xpose.msra.mxu0 0.0
  %2632 = vmatpush.xpose.msra.mxu0 0.0
  %2633 = vmatpush.xpose.msra.mxu0 0.0
  %2634 = vmatpush.xpose.msra.mxu0 0.0
  %2635 = vmatpush.xpose.msra.mxu0 0.0
  %2636 = vmatpush.xpose.msra.mxu0 0.0
  %2637 = vmatpush.xpose.msra.mxu0 %v2620
  %2638 = vmatmul.f32.gmra.mxu0 %v2618
  %v2639 = vpop.f32.mrf.mxu0
  %v2640 = vadd.f32 %v157, %v2639
  %2641 = vdwg.mxu0
  %2643 = vrot.lane.b32.xlu0 %v2553, 96
  %v2644 = vpop.permute.xlu0 %2643
  %v2645 = vsel %vm377, %v2553, 0
  %v2647 = vsel %vm377, %v2644, 0
  %2649 = vmatpush.xpose.msra.mxu0 0.0
  %2650 = vmatpush.xpose.msra.mxu0 0.0
  %2651 = vmatpush.xpose.msra.mxu0 0.0
  %2652 = vmatpush.xpose.msra.mxu0 0.0
  %2653 = vmatpush.xpose.msra.mxu0 0.0
  %2654 = vmatpush.xpose.msra.mxu0 0.0
  %2655 = vmatpush.xpose.msra.mxu0 0.0
  %2656 = vmatpush.xpose.msra.mxu0 0.0
  %2657 = vmatpush.xpose.msra.mxu0 0.0
  %2658 = vmatpush.xpose.msra.mxu0 0.0
  %2659 = vmatpush.xpose.msra.mxu0 0.0
  %2660 = vmatpush.xpose.msra.mxu0 0.0
  %2661 = vmatpush.xpose.msra.mxu0 0.0
  %2662 = vmatpush.xpose.msra.mxu0 0.0
  %2663 = vmatpush.xpose.msra.mxu0 0.0
  %2664 = vmatpush.xpose.msra.mxu0 %v2647
  %2665 = vmatmul.f32.gmra.mxu0 %v2645
  %v2666 = vpop.f32.mrf.mxu0
  %v2667 = vadd.f32 %v158, %v2666
  %2668 = vdwg.mxu0
  %2670 = vrot.lane.b32.xlu0 %v2556, 96
  %v2671 = vpop.permute.xlu0 %2670
  %v2672 = vsel %vm377, %v2556, 0
  %v2674 = vsel %vm377, %v2671, 0
  %2676 = vmatpush.xpose.msra.mxu0 0.0
  %2677 = vmatpush.xpose.msra.mxu0 0.0
  %2678 = vmatpush.xpose.msra.mxu0 0.0
  %2679 = vmatpush.xpose.msra.mxu0 0.0
  %2680 = vmatpush.xpose.msra.mxu0 0.0
  %2681 = vmatpush.xpose.msra.mxu0 0.0
  %2682 = vmatpush.xpose.msra.mxu0 0.0
  %2683 = vmatpush.xpose.msra.mxu0 0.0
  %2684 = vmatpush.xpose.msra.mxu0 0.0
  %2685 = vmatpush.xpose.msra.mxu0 0.0
  %2686 = vmatpush.xpose.msra.mxu0 0.0
  %2687 = vmatpush.xpose.msra.mxu0 0.0
  %2688 = vmatpush.xpose.msra.mxu0 0.0
  %2689 = vmatpush.xpose.msra.mxu0 0.0
  %2690 = vmatpush.xpose.msra.mxu0 0.0
  %2691 = vmatpush.xpose.msra.mxu0 %v2674
  %2692 = vmatmul.f32.gmra.mxu0 %v2672
  %v2693 = vpop.f32.mrf.mxu0
  %v2694 = vadd.f32 %v159, %v2693
  %2695 = vdwg.mxu0
  %2697 = vrot.lane.b32.xlu0 %v2559, 96
  %v2698 = vpop.permute.xlu0 %2697
  %v2699 = vsel %vm377, %v2559, 0
  %v2701 = vsel %vm377, %v2698, 0
  %2703 = vmatpush.xpose.msra.mxu0 0.0
  %2704 = vmatpush.xpose.msra.mxu0 0.0
  %2705 = vmatpush.xpose.msra.mxu0 0.0
  %2706 = vmatpush.xpose.msra.mxu0 0.0
  %2707 = vmatpush.xpose.msra.mxu0 0.0
  %2708 = vmatpush.xpose.msra.mxu0 0.0
  %2709 = vmatpush.xpose.msra.mxu0 0.0
  %2710 = vmatpush.xpose.msra.mxu0 0.0
  %2711 = vmatpush.xpose.msra.mxu0 0.0
  %2712 = vmatpush.xpose.msra.mxu0 0.0
  %2713 = vmatpush.xpose.msra.mxu0 0.0
  %2714 = vmatpush.xpose.msra.mxu0 0.0
  %2715 = vmatpush.xpose.msra.mxu0 0.0
  %2716 = vmatpush.xpose.msra.mxu0 0.0
  %2717 = vmatpush.xpose.msra.mxu0 0.0
  %2718 = vmatpush.xpose.msra.mxu0 %v2701
  %2719 = vmatmul.f32.gmra.mxu0 %v2699
  %v2720 = vpop.f32.mrf.mxu0
  %v2721 = vadd.f32 %v160, %v2720
  %2722 = vdwg.mxu0
  %v2723 = vsel %vm377, %v2586, -inf
  %2724 = vmax.xlane.f32.xlu0 %v2723
  %v2725 = vpop.xlane.xlu0 %2724
  %v2726 = vsel %vm377, %v2613, -inf
  %2727 = vmax.xlane.f32.xlu0 %v2726
  %v2728 = vpop.xlane.xlu0 %2727
  %v2729 = vsel %vm377, %v2640, -inf
  %2730 = vmax.xlane.f32.xlu0 %v2729
  %v2731 = vpop.xlane.xlu0 %2730
  %v2732 = vsel %vm377, %v2667, -inf
  %2733 = vmax.xlane.f32.xlu0 %v2732
  %v2734 = vpop.xlane.xlu0 %2733
  %v2735 = vsel %vm377, %v2694, -inf
  %2736 = vmax.xlane.f32.xlu0 %v2735
  %v2737 = vpop.xlane.xlu0 %2736
  %v2738 = vsel %vm377, %v2721, -inf
  %2739 = vmax.xlane.f32.xlu0 %v2738
  %v2740 = vpop.xlane.xlu0 %2739
  %v2741 = vsub.f32 %v2586, %v2725
  %v2742 = vsub.f32 %v2613, %v2728
  %v2743 = vsub.f32 %v2640, %v2731
  %v2744 = vsub.f32 %v2667, %v2734
  %v2745 = vsub.f32 %v2694, %v2737
  %v2746 = vsub.f32 %v2721, %v2740
  %v2747 = vmul.f32 %v2741, 1.442695
  %v2748 = vpow.pop %v2747
  %v2749 = vmul.f32 %v2742, 1.442695
  %v2750 = vpow.pop %v2749
  %v2751 = vmul.f32 %v2743, 1.442695
  %v2752 = vpow.pop %v2751
  %v2753 = vmul.f32 %v2744, 1.442695
  %v2754 = vpow.pop %v2753
  %v2755 = vmul.f32 %v2745, 1.442695
  %v2756 = vpow.pop %v2755
  %v2757 = vmul.f32 %v2746, 1.442695
  %v2758 = vpow.pop %v2757
  %v2759 = vsel %vm377, %v2748, 0.0
  %2760 = vadd.xlane.f32.xlu0 %v2759
  %v2761 = vpop.xlane.xlu0 %2760
  %v2762 = vsel %vm377, %v2750, 0.0
  %2763 = vadd.xlane.f32.xlu0 %v2762
  %v2764 = vpop.xlane.xlu0 %2763
  %v2765 = vsel %vm377, %v2752, 0.0
  %2766 = vadd.xlane.f32.xlu0 %v2765
  %v2767 = vpop.xlane.xlu0 %2766
  %v2768 = vsel %vm377, %v2754, 0.0
  %2769 = vadd.xlane.f32.xlu0 %v2768
  %v2770 = vpop.xlane.xlu0 %2769
  %v2771 = vsel %vm377, %v2756, 0.0
  %2772 = vadd.xlane.f32.xlu0 %v2771
  %v2773 = vpop.xlane.xlu0 %2772
  %v2774 = vsel %vm377, %v2758, 0.0
  %2775 = vadd.xlane.f32.xlu0 %v2774
  %v2776 = vpop.xlane.xlu0 %2775
  %v2777 = vrcp.pop %v2761
  %v2778 = vrcp.pop %v2764
  %v2779 = vrcp.pop %v2767
  %v2780 = vrcp.pop %v2770
  %v2781 = vrcp.pop %v2773
  %v2782 = vrcp.pop %v2776
  %v2783 = vmul.f32 %v2748, %v2777
  %v2784 = vmul.f32 %v2750, %v2778
  %v2785 = vmul.f32 %v2752, %v2779
  %v2786 = vmul.f32 %v2754, %v2780
  %v2787 = vmul.f32 %v2756, %v2781
  %v2788 = vmul.f32 %v2758, %v2782
  %2789 = vrot.lane.b32.xlu0 %v2544, 64
  %v2790 = vpop.permute.xlu0 %2789
  %v2793 = vsel %vm377, %v2783, 0
  %2795 = vmatpush.msra.mxu0 0.0
  %2796 = vmatpush.msra.mxu0 0.0
  %2797 = vmatpush.msra.mxu0 0.0
  %2798 = vmatpush.msra.mxu0 0.0
  %2799 = vmatpush.msra.mxu0 0.0
  %2800 = vmatpush.msra.mxu0 0.0
  %2801 = vmatpush.msra.mxu0 0.0
  %2802 = vmatpush.msra.mxu0 0.0
  %2803 = vmatpush.msra.mxu0 0.0
  %2804 = vmatpush.msra.mxu0 0.0
  %2805 = vmatpush.msra.mxu0 0.0
  %2806 = vmatpush.msra.mxu0 0.0
  %2807 = vmatpush.msra.mxu0 0.0
  %2808 = vmatpush.msra.mxu0 0.0
  %2809 = vmatpush.msra.mxu0 0.0
  %2810 = vmatpush.msra.mxu0 %v2790
  %2811 = vmatmul.f32.gmra.mxu0 %v2793
  %v2812 = vpop.f32.mrf.mxu0
  %v2813 = vadd.f32 0.0, %v2812
  %2814 = vdwg.mxu0
  %2815 = vrot.lane.b32.xlu0 %v2547, 64
  %v2816 = vpop.permute.xlu0 %2815
  %v2819 = vsel %vm377, %v2784, 0
  %2821 = vmatpush.msra.mxu0 0.0
  %2822 = vmatpush.msra.mxu0 0.0
  %2823 = vmatpush.msra.mxu0 0.0
  %2824 = vmatpush.msra.mxu0 0.0
  %2825 = vmatpush.msra.mxu0 0.0
  %2826 = vmatpush.msra.mxu0 0.0
  %2827 = vmatpush.msra.mxu0 0.0
  %2828 = vmatpush.msra.mxu0 0.0
  %2829 = vmatpush.msra.mxu0 0.0
  %2830 = vmatpush.msra.mxu0 0.0
  %2831 = vmatpush.msra.mxu0 0.0
  %2832 = vmatpush.msra.mxu0 0.0
  %2833 = vmatpush.msra.mxu0 0.0
  %2834 = vmatpush.msra.mxu0 0.0
  %2835 = vmatpush.msra.mxu0 0.0
  %2836 = vmatpush.msra.mxu0 %v2816
  %2837 = vmatmul.f32.gmra.mxu0 %v2819
  %v2838 = vpop.f32.mrf.mxu0
  %v2839 = vadd.f32 0.0, %v2838
  %2840 = vdwg.mxu0
  %2841 = vrot.lane.b32.xlu0 %v2550, 64
  %v2842 = vpop.permute.xlu0 %2841
  %v2845 = vsel %vm377, %v2785, 0
  %2847 = vmatpush.msra.mxu0 0.0
  %2848 = vmatpush.msra.mxu0 0.0
  %2849 = vmatpush.msra.mxu0 0.0
  %2850 = vmatpush.msra.mxu0 0.0
  %2851 = vmatpush.msra.mxu0 0.0
  %2852 = vmatpush.msra.mxu0 0.0
  %2853 = vmatpush.msra.mxu0 0.0
  %2854 = vmatpush.msra.mxu0 0.0
  %2855 = vmatpush.msra.mxu0 0.0
  %2856 = vmatpush.msra.mxu0 0.0
  %2857 = vmatpush.msra.mxu0 0.0
  %2858 = vmatpush.msra.mxu0 0.0
  %2859 = vmatpush.msra.mxu0 0.0
  %2860 = vmatpush.msra.mxu0 0.0
  %2861 = vmatpush.msra.mxu0 0.0
  %2862 = vmatpush.msra.mxu0 %v2842
  %2863 = vmatmul.f32.gmra.mxu0 %v2845
  %v2864 = vpop.f32.mrf.mxu0
  %v2865 = vadd.f32 0.0, %v2864
  %2866 = vdwg.mxu0
  %2867 = vrot.lane.b32.xlu0 %v2553, 64
  %v2868 = vpop.permute.xlu0 %2867
  %v2871 = vsel %vm377, %v2786, 0
  %2873 = vmatpush.msra.mxu0 0.0
  %2874 = vmatpush.msra.mxu0 0.0
  %2875 = vmatpush.msra.mxu0 0.0
  %2876 = vmatpush.msra.mxu0 0.0
  %2877 = vmatpush.msra.mxu0 0.0
  %2878 = vmatpush.msra.mxu0 0.0
  %2879 = vmatpush.msra.mxu0 0.0
  %2880 = vmatpush.msra.mxu0 0.0
  %2881 = vmatpush.msra.mxu0 0.0
  %2882 = vmatpush.msra.mxu0 0.0
  %2883 = vmatpush.msra.mxu0 0.0
  %2884 = vmatpush.msra.mxu0 0.0
  %2885 = vmatpush.msra.mxu0 0.0
  %2886 = vmatpush.msra.mxu0 0.0
  %2887 = vmatpush.msra.mxu0 0.0
  %2888 = vmatpush.msra.mxu0 %v2868
  %2889 = vmatmul.f32.gmra.mxu0 %v2871
  %v2890 = vpop.f32.mrf.mxu0
  %v2891 = vadd.f32 0.0, %v2890
  %2892 = vdwg.mxu0
  %2893 = vrot.lane.b32.xlu0 %v2556, 64
  %v2894 = vpop.permute.xlu0 %2893
  %v2897 = vsel %vm377, %v2787, 0
  %2899 = vmatpush.msra.mxu0 0.0
  %2900 = vmatpush.msra.mxu0 0.0
  %2901 = vmatpush.msra.mxu0 0.0
  %2902 = vmatpush.msra.mxu0 0.0
  %2903 = vmatpush.msra.mxu0 0.0
  %2904 = vmatpush.msra.mxu0 0.0
  %2905 = vmatpush.msra.mxu0 0.0
  %2906 = vmatpush.msra.mxu0 0.0
  %2907 = vmatpush.msra.mxu0 0.0
  %2908 = vmatpush.msra.mxu0 0.0
  %2909 = vmatpush.msra.mxu0 0.0
  %2910 = vmatpush.msra.mxu0 0.0
  %2911 = vmatpush.msra.mxu0 0.0
  %2912 = vmatpush.msra.mxu0 0.0
  %2913 = vmatpush.msra.mxu0 0.0
  %2914 = vmatpush.msra.mxu0 %v2894
  %2915 = vmatmul.f32.gmra.mxu0 %v2897
  %v2916 = vpop.f32.mrf.mxu0
  %v2917 = vadd.f32 0.0, %v2916
  %2918 = vdwg.mxu0
  %2919 = vrot.lane.b32.xlu0 %v2559, 64
  %v2920 = vpop.permute.xlu0 %2919
  %v2923 = vsel %vm377, %v2788, 0
  %2925 = vmatpush.msra.mxu0 0.0
  %2926 = vmatpush.msra.mxu0 0.0
  %2927 = vmatpush.msra.mxu0 0.0
  %2928 = vmatpush.msra.mxu0 0.0
  %2929 = vmatpush.msra.mxu0 0.0
  %2930 = vmatpush.msra.mxu0 0.0
  %2931 = vmatpush.msra.mxu0 0.0
  %2932 = vmatpush.msra.mxu0 0.0
  %2933 = vmatpush.msra.mxu0 0.0
  %2934 = vmatpush.msra.mxu0 0.0
  %2935 = vmatpush.msra.mxu0 0.0
  %2936 = vmatpush.msra.mxu0 0.0
  %2937 = vmatpush.msra.mxu0 0.0
  %2938 = vmatpush.msra.mxu0 0.0
  %2939 = vmatpush.msra.mxu0 0.0
  %2940 = vmatpush.msra.mxu0 %v2920
  %2941 = vmatmul.f32.gmra.mxu0 %v2923
  %v2942 = vpop.f32.mrf.mxu0
  %v2943 = vadd.f32 0.0, %v2942
  %2944 = vdwg.mxu0
  %2945 = vrot.lane.b32.xlu0 %v2544, 120
  %v2946 = vpop.permute.xlu0 %2945
  %2947 = vrot.lane.b32.xlu0 %v2544, 88
  %v2948 = vpop.permute.xlu0 %2947
  %v2949 = vsel %vm377, %v2946, 0
  %v2951 = vsel %vm377, %v2948, 0
  %2953 = vmatpush.xpose.msra.mxu0 0.0
  %2954 = vmatpush.xpose.msra.mxu0 0.0
  %2955 = vmatpush.xpose.msra.mxu0 0.0
  %2956 = vmatpush.xpose.msra.mxu0 0.0
  %2957 = vmatpush.xpose.msra.mxu0 0.0
  %2958 = vmatpush.xpose.msra.mxu0 0.0
  %2959 = vmatpush.xpose.msra.mxu0 0.0
  %2960 = vmatpush.xpose.msra.mxu0 0.0
  %2961 = vmatpush.xpose.msra.mxu0 0.0
  %2962 = vmatpush.xpose.msra.mxu0 0.0
  %2963 = vmatpush.xpose.msra.mxu0 0.0
  %2964 = vmatpush.xpose.msra.mxu0 0.0
  %2965 = vmatpush.xpose.msra.mxu0 0.0
  %2966 = vmatpush.xpose.msra.mxu0 0.0
  %2967 = vmatpush.xpose.msra.mxu0 0.0
  %2968 = vmatpush.xpose.msra.mxu0 %v2951
  %2969 = vmatmul.f32.gmra.mxu0 %v2949
  %v2970 = vpop.f32.mrf.mxu0
  %v2971 = vadd.f32 %v161, %v2970
  %2972 = vdwg.mxu0
  %2973 = vrot.lane.b32.xlu0 %v2547, 120
  %v2974 = vpop.permute.xlu0 %2973
  %2975 = vrot.lane.b32.xlu0 %v2547, 88
  %v2976 = vpop.permute.xlu0 %2975
  %v2977 = vsel %vm377, %v2974, 0
  %v2979 = vsel %vm377, %v2976, 0
  %2981 = vmatpush.xpose.msra.mxu0 0.0
  %2982 = vmatpush.xpose.msra.mxu0 0.0
  %2983 = vmatpush.xpose.msra.mxu0 0.0
  %2984 = vmatpush.xpose.msra.mxu0 0.0
  %2985 = vmatpush.xpose.msra.mxu0 0.0
  %2986 = vmatpush.xpose.msra.mxu0 0.0
  %2987 = vmatpush.xpose.msra.mxu0 0.0
  %2988 = vmatpush.xpose.msra.mxu0 0.0
  %2989 = vmatpush.xpose.msra.mxu0 0.0
  %2990 = vmatpush.xpose.msra.mxu0 0.0
  %2991 = vmatpush.xpose.msra.mxu0 0.0
  %2992 = vmatpush.xpose.msra.mxu0 0.0
  %2993 = vmatpush.xpose.msra.mxu0 0.0
  %2994 = vmatpush.xpose.msra.mxu0 0.0
  %2995 = vmatpush.xpose.msra.mxu0 0.0
  %2996 = vmatpush.xpose.msra.mxu0 %v2979
  %2997 = vmatmul.f32.gmra.mxu0 %v2977
  %v2998 = vpop.f32.mrf.mxu0
  %v2999 = vadd.f32 %v162, %v2998
  %3000 = vdwg.mxu0
  %3001 = vrot.lane.b32.xlu0 %v2550, 120
  %v3002 = vpop.permute.xlu0 %3001
  %3003 = vrot.lane.b32.xlu0 %v2550, 88
  %v3004 = vpop.permute.xlu0 %3003
  %v3005 = vsel %vm377, %v3002, 0
  %v3007 = vsel %vm377, %v3004, 0
  %3009 = vmatpush.xpose.msra.mxu0 0.0
  %3010 = vmatpush.xpose.msra.mxu0 0.0
  %3011 = vmatpush.xpose.msra.mxu0 0.0
  %3012 = vmatpush.xpose.msra.mxu0 0.0
  %3013 = vmatpush.xpose.msra.mxu0 0.0
  %3014 = vmatpush.xpose.msra.mxu0 0.0
  %3015 = vmatpush.xpose.msra.mxu0 0.0
  %3016 = vmatpush.xpose.msra.mxu0 0.0
  %3017 = vmatpush.xpose.msra.mxu0 0.0
  %3018 = vmatpush.xpose.msra.mxu0 0.0
  %3019 = vmatpush.xpose.msra.mxu0 0.0
  %3020 = vmatpush.xpose.msra.mxu0 0.0
  %3021 = vmatpush.xpose.msra.mxu0 0.0
  %3022 = vmatpush.xpose.msra.mxu0 0.0
  %3023 = vmatpush.xpose.msra.mxu0 0.0
  %3024 = vmatpush.xpose.msra.mxu0 %v3007
  %3025 = vmatmul.f32.gmra.mxu0 %v3005
  %v3026 = vpop.f32.mrf.mxu0
  %v3027 = vadd.f32 %v163, %v3026
  %3028 = vdwg.mxu0
  %3029 = vrot.lane.b32.xlu0 %v2553, 120
  %v3030 = vpop.permute.xlu0 %3029
  %3031 = vrot.lane.b32.xlu0 %v2553, 88
  %v3032 = vpop.permute.xlu0 %3031
  %v3033 = vsel %vm377, %v3030, 0
  %v3035 = vsel %vm377, %v3032, 0
  %3037 = vmatpush.xpose.msra.mxu0 0.0
  %3038 = vmatpush.xpose.msra.mxu0 0.0
  %3039 = vmatpush.xpose.msra.mxu0 0.0
  %3040 = vmatpush.xpose.msra.mxu0 0.0
  %3041 = vmatpush.xpose.msra.mxu0 0.0
  %3042 = vmatpush.xpose.msra.mxu0 0.0
  %3043 = vmatpush.xpose.msra.mxu0 0.0
  %3044 = vmatpush.xpose.msra.mxu0 0.0
  %3045 = vmatpush.xpose.msra.mxu0 0.0
  %3046 = vmatpush.xpose.msra.mxu0 0.0
  %3047 = vmatpush.xpose.msra.mxu0 0.0
  %3048 = vmatpush.xpose.msra.mxu0 0.0
  %3049 = vmatpush.xpose.msra.mxu0 0.0
  %3050 = vmatpush.xpose.msra.mxu0 0.0
  %3051 = vmatpush.xpose.msra.mxu0 0.0
  %3052 = vmatpush.xpose.msra.mxu0 %v3035
  %3053 = vmatmul.f32.gmra.mxu0 %v3033
  %v3054 = vpop.f32.mrf.mxu0
  %v3055 = vadd.f32 %v164, %v3054
  %3056 = vdwg.mxu0
  %3057 = vrot.lane.b32.xlu0 %v2556, 120
  %v3058 = vpop.permute.xlu0 %3057
  %3059 = vrot.lane.b32.xlu0 %v2556, 88
  %v3060 = vpop.permute.xlu0 %3059
  %v3061 = vsel %vm377, %v3058, 0
  %v3063 = vsel %vm377, %v3060, 0
  %3065 = vmatpush.xpose.msra.mxu0 0.0
  %3066 = vmatpush.xpose.msra.mxu0 0.0
  %3067 = vmatpush.xpose.msra.mxu0 0.0
  %3068 = vmatpush.xpose.msra.mxu0 0.0
  %3069 = vmatpush.xpose.msra.mxu0 0.0
  %3070 = vmatpush.xpose.msra.mxu0 0.0
  %3071 = vmatpush.xpose.msra.mxu0 0.0
  %3072 = vmatpush.xpose.msra.mxu0 0.0
  %3073 = vmatpush.xpose.msra.mxu0 0.0
  %3074 = vmatpush.xpose.msra.mxu0 0.0
  %3075 = vmatpush.xpose.msra.mxu0 0.0
  %3076 = vmatpush.xpose.msra.mxu0 0.0
  %3077 = vmatpush.xpose.msra.mxu0 0.0
  %3078 = vmatpush.xpose.msra.mxu0 0.0
  %3079 = vmatpush.xpose.msra.mxu0 0.0
  %3080 = vmatpush.xpose.msra.mxu0 %v3063
  %3081 = vmatmul.f32.gmra.mxu0 %v3061
  %v3082 = vpop.f32.mrf.mxu0
  %v3083 = vadd.f32 %v165, %v3082
  %3084 = vdwg.mxu0
  %3085 = vrot.lane.b32.xlu0 %v2559, 120
  %v3086 = vpop.permute.xlu0 %3085
  %3087 = vrot.lane.b32.xlu0 %v2559, 88
  %v3088 = vpop.permute.xlu0 %3087
  %v3089 = vsel %vm377, %v3086, 0
  %v3091 = vsel %vm377, %v3088, 0
  %3093 = vmatpush.xpose.msra.mxu0 0.0
  %3094 = vmatpush.xpose.msra.mxu0 0.0
  %3095 = vmatpush.xpose.msra.mxu0 0.0
  %3096 = vmatpush.xpose.msra.mxu0 0.0
  %3097 = vmatpush.xpose.msra.mxu0 0.0
  %3098 = vmatpush.xpose.msra.mxu0 0.0
  %3099 = vmatpush.xpose.msra.mxu0 0.0
  %3100 = vmatpush.xpose.msra.mxu0 0.0
  %3101 = vmatpush.xpose.msra.mxu0 0.0
  %3102 = vmatpush.xpose.msra.mxu0 0.0
  %3103 = vmatpush.xpose.msra.mxu0 0.0
  %3104 = vmatpush.xpose.msra.mxu0 0.0
  %3105 = vmatpush.xpose.msra.mxu0 0.0
  %3106 = vmatpush.xpose.msra.mxu0 0.0
  %3107 = vmatpush.xpose.msra.mxu0 0.0
  %3108 = vmatpush.xpose.msra.mxu0 %v3091
  %3109 = vmatmul.f32.gmra.mxu0 %v3089
  %v3110 = vpop.f32.mrf.mxu0
  %v3111 = vadd.f32 %v166, %v3110
  %3112 = vdwg.mxu0
  %v3113 = vsel %vm377, %v2971, -inf
  %3114 = vmax.xlane.f32.xlu0 %v3113
  %v3115 = vpop.xlane.xlu0 %3114
  %v3116 = vsel %vm377, %v2999, -inf
  %3117 = vmax.xlane.f32.xlu0 %v3116
  %v3118 = vpop.xlane.xlu0 %3117
  %v3119 = vsel %vm377, %v3027, -inf
  %3120 = vmax.xlane.f32.xlu0 %v3119
  %v3121 = vpop.xlane.xlu0 %3120
  %v3122 = vsel %vm377, %v3055, -inf
  %3123 = vmax.xlane.f32.xlu0 %v3122
  %v3124 = vpop.xlane.xlu0 %3123
  %v3125 = vsel %vm377, %v3083, -inf
  %3126 = vmax.xlane.f32.xlu0 %v3125
  %v3127 = vpop.xlane.xlu0 %3126
  %v3128 = vsel %vm377, %v3111, -inf
  %3129 = vmax.xlane.f32.xlu0 %v3128
  %v3130 = vpop.xlane.xlu0 %3129
  %v3131 = vsub.f32 %v2971, %v3115
  %v3132 = vsub.f32 %v2999, %v3118
  %v3133 = vsub.f32 %v3027, %v3121
  %v3134 = vsub.f32 %v3055, %v3124
  %v3135 = vsub.f32 %v3083, %v3127
  %v3136 = vsub.f32 %v3111, %v3130
  %v3137 = vmul.f32 %v3131, 1.442695
  %v3138 = vpow.pop %v3137
  %v3139 = vmul.f32 %v3132, 1.442695
  %v3140 = vpow.pop %v3139
  %v3141 = vmul.f32 %v3133, 1.442695
  %v3142 = vpow.pop %v3141
  %v3143 = vmul.f32 %v3134, 1.442695
  %v3144 = vpow.pop %v3143
  %v3145 = vmul.f32 %v3135, 1.442695
  %v3146 = vpow.pop %v3145
  %v3147 = vmul.f32 %v3136, 1.442695
  %v3148 = vpow.pop %v3147
  %v3149 = vsel %vm377, %v3138, 0.0
  %3150 = vadd.xlane.f32.xlu0 %v3149
  %v3151 = vpop.xlane.xlu0 %3150
  %v3152 = vsel %vm377, %v3140, 0.0
  %3153 = vadd.xlane.f32.xlu0 %v3152
  %v3154 = vpop.xlane.xlu0 %3153
  %v3155 = vsel %vm377, %v3142, 0.0
  %3156 = vadd.xlane.f32.xlu0 %v3155
  %v3157 = vpop.xlane.xlu0 %3156
  %v3158 = vsel %vm377, %v3144, 0.0
  %3159 = vadd.xlane.f32.xlu0 %v3158
  %v3160 = vpop.xlane.xlu0 %3159
  %v3161 = vsel %vm377, %v3146, 0.0
  %3162 = vadd.xlane.f32.xlu0 %v3161
  %v3163 = vpop.xlane.xlu0 %3162
  %v3164 = vsel %vm377, %v3148, 0.0
  %3165 = vadd.xlane.f32.xlu0 %v3164
  %v3166 = vpop.xlane.xlu0 %3165
  %v3167 = vrcp.pop %v3151
  %v3168 = vrcp.pop %v3154
  %v3169 = vrcp.pop %v3157
  %v3170 = vrcp.pop %v3160
  %v3171 = vrcp.pop %v3163
  %v3172 = vrcp.pop %v3166
  %v3173 = vmul.f32 %v3138, %v3167
  %v3174 = vmul.f32 %v3140, %v3168
  %v3175 = vmul.f32 %v3142, %v3169
  %v3176 = vmul.f32 %v3144, %v3170
  %v3177 = vmul.f32 %v3146, %v3171
  %v3178 = vmul.f32 %v3148, %v3172
  %3179 = vrot.lane.b32.xlu0 %v2544, 56
  %v3180 = vpop.permute.xlu0 %3179
  %v3183 = vsel %vm377, %v3173, 0
  %3185 = vmatpush.msra.mxu0 0.0
  %3186 = vmatpush.msra.mxu0 0.0
  %3187 = vmatpush.msra.mxu0 0.0
  %3188 = vmatpush.msra.mxu0 0.0
  %3189 = vmatpush.msra.mxu0 0.0
  %3190 = vmatpush.msra.mxu0 0.0
  %3191 = vmatpush.msra.mxu0 0.0
  %3192 = vmatpush.msra.mxu0 0.0
  %3193 = vmatpush.msra.mxu0 0.0
  %3194 = vmatpush.msra.mxu0 0.0
  %3195 = vmatpush.msra.mxu0 0.0
  %3196 = vmatpush.msra.mxu0 0.0
  %3197 = vmatpush.msra.mxu0 0.0
  %3198 = vmatpush.msra.mxu0 0.0
  %3199 = vmatpush.msra.mxu0 0.0
  %3200 = vmatpush.msra.mxu0 %v3180
  %3201 = vmatmul.f32.gmra.mxu0 %v3183
  %v3202 = vpop.f32.mrf.mxu0
  %v3203 = vadd.f32 0.0, %v3202
  %3204 = vdwg.mxu0
  %3205 = vrot.lane.b32.xlu0 %v2547, 56
  %v3206 = vpop.permute.xlu0 %3205
  %v3209 = vsel %vm377, %v3174, 0
  %3211 = vmatpush.msra.mxu0 0.0
  %3212 = vmatpush.msra.mxu0 0.0
  %3213 = vmatpush.msra.mxu0 0.0
  %3214 = vmatpush.msra.mxu0 0.0
  %3215 = vmatpush.msra.mxu0 0.0
  %3216 = vmatpush.msra.mxu0 0.0
  %3217 = vmatpush.msra.mxu0 0.0
  %3218 = vmatpush.msra.mxu0 0.0
  %3219 = vmatpush.msra.mxu0 0.0
  %3220 = vmatpush.msra.mxu0 0.0
  %3221 = vmatpush.msra.mxu0 0.0
  %3222 = vmatpush.msra.mxu0 0.0
  %3223 = vmatpush.msra.mxu0 0.0
  %3224 = vmatpush.msra.mxu0 0.0
  %3225 = vmatpush.msra.mxu0 0.0
  %3226 = vmatpush.msra.mxu0 %v3206
  %3227 = vmatmul.f32.gmra.mxu0 %v3209
  %v3228 = vpop.f32.mrf.mxu0
  %v3229 = vadd.f32 0.0, %v3228
  %3230 = vdwg.mxu0
  %3231 = vrot.lane.b32.xlu0 %v2550, 56
  %v3232 = vpop.permute.xlu0 %3231
  %v3235 = vsel %vm377, %v3175, 0
  %3237 = vmatpush.msra.mxu0 0.0
  %3238 = vmatpush.msra.mxu0 0.0
  %3239 = vmatpush.msra.mxu0 0.0
  %3240 = vmatpush.msra.mxu0 0.0
  %3241 = vmatpush.msra.mxu0 0.0
  %3242 = vmatpush.msra.mxu0 0.0
  %3243 = vmatpush.msra.mxu0 0.0
  %3244 = vmatpush.msra.mxu0 0.0
  %3245 = vmatpush.msra.mxu0 0.0
  %3246 = vmatpush.msra.mxu0 0.0
  %3247 = vmatpush.msra.mxu0 0.0
  %3248 = vmatpush.msra.mxu0 0.0
  %3249 = vmatpush.msra.mxu0 0.0
  %3250 = vmatpush.msra.mxu0 0.0
  %3251 = vmatpush.msra.mxu0 0.0
  %3252 = vmatpush.msra.mxu0 %v3232
  %3253 = vmatmul.f32.gmra.mxu0 %v3235
  %v3254 = vpop.f32.mrf.mxu0
  %v3255 = vadd.f32 0.0, %v3254
  %3256 = vdwg.mxu0
  %3257 = vrot.lane.b32.xlu0 %v2553, 56
  %v3258 = vpop.permute.xlu0 %3257
  %v3261 = vsel %vm377, %v3176, 0
  %3263 = vmatpush.msra.mxu0 0.0
  %3264 = vmatpush.msra.mxu0 0.0
  %3265 = vmatpush.msra.mxu0 0.0
  %3266 = vmatpush.msra.mxu0 0.0
  %3267 = vmatpush.msra.mxu0 0.0
  %3268 = vmatpush.msra.mxu0 0.0
  %3269 = vmatpush.msra.mxu0 0.0
  %3270 = vmatpush.msra.mxu0 0.0
  %3271 = vmatpush.msra.mxu0 0.0
  %3272 = vmatpush.msra.mxu0 0.0
  %3273 = vmatpush.msra.mxu0 0.0
  %3274 = vmatpush.msra.mxu0 0.0
  %3275 = vmatpush.msra.mxu0 0.0
  %3276 = vmatpush.msra.mxu0 0.0
  %3277 = vmatpush.msra.mxu0 0.0
  %3278 = vmatpush.msra.mxu0 %v3258
  %3279 = vmatmul.f32.gmra.mxu0 %v3261
  %v3280 = vpop.f32.mrf.mxu0
  %v3281 = vadd.f32 0.0, %v3280
  %3282 = vdwg.mxu0
  %3283 = vrot.lane.b32.xlu0 %v2556, 56
  %v3284 = vpop.permute.xlu0 %3283
  %v3287 = vsel %vm377, %v3177, 0
  %3289 = vmatpush.msra.mxu0 0.0
  %3290 = vmatpush.msra.mxu0 0.0
  %3291 = vmatpush.msra.mxu0 0.0
  %3292 = vmatpush.msra.mxu0 0.0
  %3293 = vmatpush.msra.mxu0 0.0
  %3294 = vmatpush.msra.mxu0 0.0
  %3295 = vmatpush.msra.mxu0 0.0
  %3296 = vmatpush.msra.mxu0 0.0
  %3297 = vmatpush.msra.mxu0 0.0
  %3298 = vmatpush.msra.mxu0 0.0
  %3299 = vmatpush.msra.mxu0 0.0
  %3300 = vmatpush.msra.mxu0 0.0
  %3301 = vmatpush.msra.mxu0 0.0
  %3302 = vmatpush.msra.mxu0 0.0
  %3303 = vmatpush.msra.mxu0 0.0
  %3304 = vmatpush.msra.mxu0 %v3284
  %3305 = vmatmul.f32.gmra.mxu0 %v3287
  %v3306 = vpop.f32.mrf.mxu0
  %v3307 = vadd.f32 0.0, %v3306
  %3308 = vdwg.mxu0
  %3309 = vrot.lane.b32.xlu0 %v2559, 56
  %v3310 = vpop.permute.xlu0 %3309
  %v3313 = vsel %vm377, %v3178, 0
  %3315 = vmatpush.msra.mxu0 0.0
  %3316 = vmatpush.msra.mxu0 0.0
  %3317 = vmatpush.msra.mxu0 0.0
  %3318 = vmatpush.msra.mxu0 0.0
  %3319 = vmatpush.msra.mxu0 0.0
  %3320 = vmatpush.msra.mxu0 0.0
  %3321 = vmatpush.msra.mxu0 0.0
  %3322 = vmatpush.msra.mxu0 0.0
  %3323 = vmatpush.msra.mxu0 0.0
  %3324 = vmatpush.msra.mxu0 0.0
  %3325 = vmatpush.msra.mxu0 0.0
  %3326 = vmatpush.msra.mxu0 0.0
  %3327 = vmatpush.msra.mxu0 0.0
  %3328 = vmatpush.msra.mxu0 0.0
  %3329 = vmatpush.msra.mxu0 0.0
  %3330 = vmatpush.msra.mxu0 %v3310
  %3331 = vmatmul.f32.gmra.mxu0 %v3313
  %v3332 = vpop.f32.mrf.mxu0
  %v3333 = vadd.f32 0.0, %v3332
  %3334 = vdwg.mxu0
  %3335 = vrot.lane.b32.xlu0 %v2544, 112
  %v3336 = vpop.permute.xlu0 %3335
  %3337 = vrot.lane.b32.xlu0 %v2544, 80
  %v3338 = vpop.permute.xlu0 %3337
  %v3339 = vsel %vm377, %v3336, 0
  %v3341 = vsel %vm377, %v3338, 0
  %3343 = vmatpush.xpose.msra.mxu0 0.0
  %3344 = vmatpush.xpose.msra.mxu0 0.0
  %3345 = vmatpush.xpose.msra.mxu0 0.0
  %3346 = vmatpush.xpose.msra.mxu0 0.0
  %3347 = vmatpush.xpose.msra.mxu0 0.0
  %3348 = vmatpush.xpose.msra.mxu0 0.0
  %3349 = vmatpush.xpose.msra.mxu0 0.0
  %3350 = vmatpush.xpose.msra.mxu0 0.0
  %3351 = vmatpush.xpose.msra.mxu0 0.0
  %3352 = vmatpush.xpose.msra.mxu0 0.0
  %3353 = vmatpush.xpose.msra.mxu0 0.0
  %3354 = vmatpush.xpose.msra.mxu0 0.0
  %3355 = vmatpush.xpose.msra.mxu0 0.0
  %3356 = vmatpush.xpose.msra.mxu0 0.0
  %3357 = vmatpush.xpose.msra.mxu0 0.0
  %3358 = vmatpush.xpose.msra.mxu0 %v3341
  %3359 = vmatmul.f32.gmra.mxu0 %v3339
  %v3360 = vpop.f32.mrf.mxu0
  %v3361 = vadd.f32 %v167, %v3360
  %3362 = vdwg.mxu0
  %3363 = vrot.lane.b32.xlu0 %v2547, 112
  %v3364 = vpop.permute.xlu0 %3363
  %3365 = vrot.lane.b32.xlu0 %v2547, 80
  %v3366 = vpop.permute.xlu0 %3365
  %v3367 = vsel %vm377, %v3364, 0
  %v3369 = vsel %vm377, %v3366, 0
  %3371 = vmatpush.xpose.msra.mxu0 0.0
  %3372 = vmatpush.xpose.msra.mxu0 0.0
  %3373 = vmatpush.xpose.msra.mxu0 0.0
  %3374 = vmatpush.xpose.msra.mxu0 0.0
  %3375 = vmatpush.xpose.msra.mxu0 0.0
  %3376 = vmatpush.xpose.msra.mxu0 0.0
  %3377 = vmatpush.xpose.msra.mxu0 0.0
  %3378 = vmatpush.xpose.msra.mxu0 0.0
  %3379 = vmatpush.xpose.msra.mxu0 0.0
  %3380 = vmatpush.xpose.msra.mxu0 0.0
  %3381 = vmatpush.xpose.msra.mxu0 0.0
  %3382 = vmatpush.xpose.msra.mxu0 0.0
  %3383 = vmatpush.xpose.msra.mxu0 0.0
  %3384 = vmatpush.xpose.msra.mxu0 0.0
  %3385 = vmatpush.xpose.msra.mxu0 0.0
  %3386 = vmatpush.xpose.msra.mxu0 %v3369
  %3387 = vmatmul.f32.gmra.mxu0 %v3367
  %v3388 = vpop.f32.mrf.mxu0
  %v3389 = vadd.f32 %v168, %v3388
  %3390 = vdwg.mxu0
  %3391 = vrot.lane.b32.xlu0 %v2550, 112
  %v3392 = vpop.permute.xlu0 %3391
  %3393 = vrot.lane.b32.xlu0 %v2550, 80
  %v3394 = vpop.permute.xlu0 %3393
  %v3395 = vsel %vm377, %v3392, 0
  %v3397 = vsel %vm377, %v3394, 0
  %3399 = vmatpush.xpose.msra.mxu0 0.0
  %3400 = vmatpush.xpose.msra.mxu0 0.0
  %3401 = vmatpush.xpose.msra.mxu0 0.0
  %3402 = vmatpush.xpose.msra.mxu0 0.0
  %3403 = vmatpush.xpose.msra.mxu0 0.0
  %3404 = vmatpush.xpose.msra.mxu0 0.0
  %3405 = vmatpush.xpose.msra.mxu0 0.0
  %3406 = vmatpush.xpose.msra.mxu0 0.0
  %3407 = vmatpush.xpose.msra.mxu0 0.0
  %3408 = vmatpush.xpose.msra.mxu0 0.0
  %3409 = vmatpush.xpose.msra.mxu0 0.0
  %3410 = vmatpush.xpose.msra.mxu0 0.0
  %3411 = vmatpush.xpose.msra.mxu0 0.0
  %3412 = vmatpush.xpose.msra.mxu0 0.0
  %3413 = vmatpush.xpose.msra.mxu0 0.0
  %3414 = vmatpush.xpose.msra.mxu0 %v3397
  %3415 = vmatmul.f32.gmra.mxu0 %v3395
  %v3416 = vpop.f32.mrf.mxu0
  %v3417 = vadd.f32 %v169, %v3416
  %3418 = vdwg.mxu0
  %3419 = vrot.lane.b32.xlu0 %v2553, 112
  %v3420 = vpop.permute.xlu0 %3419
  %3421 = vrot.lane.b32.xlu0 %v2553, 80
  %v3422 = vpop.permute.xlu0 %3421
  %v3423 = vsel %vm377, %v3420, 0
  %v3425 = vsel %vm377, %v3422, 0
  %3427 = vmatpush.xpose.msra.mxu0 0.0
  %3428 = vmatpush.xpose.msra.mxu0 0.0
  %3429 = vmatpush.xpose.msra.mxu0 0.0
  %3430 = vmatpush.xpose.msra.mxu0 0.0
  %3431 = vmatpush.xpose.msra.mxu0 0.0
  %3432 = vmatpush.xpose.msra.mxu0 0.0
  %3433 = vmatpush.xpose.msra.mxu0 0.0
  %3434 = vmatpush.xpose.msra.mxu0 0.0
  %3435 = vmatpush.xpose.msra.mxu0 0.0
  %3436 = vmatpush.xpose.msra.mxu0 0.0
  %3437 = vmatpush.xpose.msra.mxu0 0.0
  %3438 = vmatpush.xpose.msra.mxu0 0.0
  %3439 = vmatpush.xpose.msra.mxu0 0.0
  %3440 = vmatpush.xpose.msra.mxu0 0.0
  %3441 = vmatpush.xpose.msra.mxu0 0.0
  %3442 = vmatpush.xpose.msra.mxu0 %v3425
  %3443 = vmatmul.f32.gmra.mxu0 %v3423
  %v3444 = vpop.f32.mrf.mxu0
  %v3445 = vadd.f32 %v170, %v3444
  %3446 = vdwg.mxu0
  %3447 = vrot.lane.b32.xlu0 %v2556, 112
  %v3448 = vpop.permute.xlu0 %3447
  %3449 = vrot.lane.b32.xlu0 %v2556, 80
  %v3450 = vpop.permute.xlu0 %3449
  %v3451 = vsel %vm377, %v3448, 0
  %v3453 = vsel %vm377, %v3450, 0
  %3455 = vmatpush.xpose.msra.mxu0 0.0
  %3456 = vmatpush.xpose.msra.mxu0 0.0
  %3457 = vmatpush.xpose.msra.mxu0 0.0
  %3458 = vmatpush.xpose.msra.mxu0 0.0
  %3459 = vmatpush.xpose.msra.mxu0 0.0
  %3460 = vmatpush.xpose.msra.mxu0 0.0
  %3461 = vmatpush.xpose.msra.mxu0 0.0
  %3462 = vmatpush.xpose.msra.mxu0 0.0
  %3463 = vmatpush.xpose.msra.mxu0 0.0
  %3464 = vmatpush.xpose.msra.mxu0 0.0
  %3465 = vmatpush.xpose.msra.mxu0 0.0
  %3466 = vmatpush.xpose.msra.mxu0 0.0
  %3467 = vmatpush.xpose.msra.mxu0 0.0
  %3468 = vmatpush.xpose.msra.mxu0 0.0
  %3469 = vmatpush.xpose.msra.mxu0 0.0
  %3470 = vmatpush.xpose.msra.mxu0 %v3453
  %3471 = vmatmul.f32.gmra.mxu0 %v3451
  %v3472 = vpop.f32.mrf.mxu0
  %v3473 = vadd.f32 %v171, %v3472
  %3474 = vdwg.mxu0
  %3475 = vrot.lane.b32.xlu0 %v2559, 112
  %v3476 = vpop.permute.xlu0 %3475
  %3477 = vrot.lane.b32.xlu0 %v2559, 80
  %v3478 = vpop.permute.xlu0 %3477
  %v3479 = vsel %vm377, %v3476, 0
  %v3481 = vsel %vm377, %v3478, 0
  %3483 = vmatpush.xpose.msra.mxu0 0.0
  %3484 = vmatpush.xpose.msra.mxu0 0.0
  %3485 = vmatpush.xpose.msra.mxu0 0.0
  %3486 = vmatpush.xpose.msra.mxu0 0.0
  %3487 = vmatpush.xpose.msra.mxu0 0.0
  %3488 = vmatpush.xpose.msra.mxu0 0.0
  %3489 = vmatpush.xpose.msra.mxu0 0.0
  %3490 = vmatpush.xpose.msra.mxu0 0.0
  %3491 = vmatpush.xpose.msra.mxu0 0.0
  %3492 = vmatpush.xpose.msra.mxu0 0.0
  %3493 = vmatpush.xpose.msra.mxu0 0.0
  %3494 = vmatpush.xpose.msra.mxu0 0.0
  %3495 = vmatpush.xpose.msra.mxu0 0.0
  %3496 = vmatpush.xpose.msra.mxu0 0.0
  %3497 = vmatpush.xpose.msra.mxu0 0.0
  %3498 = vmatpush.xpose.msra.mxu0 %v3481
  %3499 = vmatmul.f32.gmra.mxu0 %v3479
  %v3500 = vpop.f32.mrf.mxu0
  %v3501 = vadd.f32 %v172, %v3500
  %3502 = vdwg.mxu0
  %v3503 = vsel %vm377, %v3361, -inf
  %3504 = vmax.xlane.f32.xlu0 %v3503
  %v3505 = vpop.xlane.xlu0 %3504
  %v3506 = vsel %vm377, %v3389, -inf
  %3507 = vmax.xlane.f32.xlu0 %v3506
  %v3508 = vpop.xlane.xlu0 %3507
  %v3509 = vsel %vm377, %v3417, -inf
  %3510 = vmax.xlane.f32.xlu0 %v3509
  %v3511 = vpop.xlane.xlu0 %3510
  %v3512 = vsel %vm377, %v3445, -inf
  %3513 = vmax.xlane.f32.xlu0 %v3512
  %v3514 = vpop.xlane.xlu0 %3513
  %v3515 = vsel %vm377, %v3473, -inf
  %3516 = vmax.xlane.f32.xlu0 %v3515
  %v3517 = vpop.xlane.xlu0 %3516
  %v3518 = vsel %vm377, %v3501, -inf
  %3519 = vmax.xlane.f32.xlu0 %v3518
  %v3520 = vpop.xlane.xlu0 %3519
  %v3521 = vsub.f32 %v3361, %v3505
  %v3522 = vsub.f32 %v3389, %v3508
  %v3523 = vsub.f32 %v3417, %v3511
  %v3524 = vsub.f32 %v3445, %v3514
  %v3525 = vsub.f32 %v3473, %v3517
  %v3526 = vsub.f32 %v3501, %v3520
  %v3527 = vmul.f32 %v3521, 1.442695
  %v3528 = vpow.pop %v3527
  %v3529 = vmul.f32 %v3522, 1.442695
  %v3530 = vpow.pop %v3529
  %v3531 = vmul.f32 %v3523, 1.442695
  %v3532 = vpow.pop %v3531
  %v3533 = vmul.f32 %v3524, 1.442695
  %v3534 = vpow.pop %v3533
  %v3535 = vmul.f32 %v3525, 1.442695
  %v3536 = vpow.pop %v3535
  %v3537 = vmul.f32 %v3526, 1.442695
  %v3538 = vpow.pop %v3537
  %v3539 = vsel %vm377, %v3528, 0.0
  %3540 = vadd.xlane.f32.xlu0 %v3539
  %v3541 = vpop.xlane.xlu0 %3540
  %v3542 = vsel %vm377, %v3530, 0.0
  %3543 = vadd.xlane.f32.xlu0 %v3542
  %v3544 = vpop.xlane.xlu0 %3543
  %v3545 = vsel %vm377, %v3532, 0.0
  %3546 = vadd.xlane.f32.xlu0 %v3545
  %v3547 = vpop.xlane.xlu0 %3546
  %v3548 = vsel %vm377, %v3534, 0.0
  %3549 = vadd.xlane.f32.xlu0 %v3548
  %v3550 = vpop.xlane.xlu0 %3549
  %v3551 = vsel %vm377, %v3536, 0.0
  %3552 = vadd.xlane.f32.xlu0 %v3551
  %v3553 = vpop.xlane.xlu0 %3552
  %v3554 = vsel %vm377, %v3538, 0.0
  %3555 = vadd.xlane.f32.xlu0 %v3554
  %v3556 = vpop.xlane.xlu0 %3555
  %v3557 = vrcp.pop %v3541
  %v3558 = vrcp.pop %v3544
  %v3559 = vrcp.pop %v3547
  %v3560 = vrcp.pop %v3550
  %v3561 = vrcp.pop %v3553
  %v3562 = vrcp.pop %v3556
  %v3563 = vmul.f32 %v3528, %v3557
  %v3564 = vmul.f32 %v3530, %v3558
  %v3565 = vmul.f32 %v3532, %v3559
  %v3566 = vmul.f32 %v3534, %v3560
  %v3567 = vmul.f32 %v3536, %v3561
  %v3568 = vmul.f32 %v3538, %v3562
  %3569 = vrot.lane.b32.xlu0 %v2544, 48
  %v3570 = vpop.permute.xlu0 %3569
  %v3573 = vsel %vm377, %v3563, 0
  %3575 = vmatpush.msra.mxu0 0.0
  %3576 = vmatpush.msra.mxu0 0.0
  %3577 = vmatpush.msra.mxu0 0.0
  %3578 = vmatpush.msra.mxu0 0.0
  %3579 = vmatpush.msra.mxu0 0.0
  %3580 = vmatpush.msra.mxu0 0.0
  %3581 = vmatpush.msra.mxu0 0.0
  %3582 = vmatpush.msra.mxu0 0.0
  %3583 = vmatpush.msra.mxu0 0.0
  %3584 = vmatpush.msra.mxu0 0.0
  %3585 = vmatpush.msra.mxu0 0.0
  %3586 = vmatpush.msra.mxu0 0.0
  %3587 = vmatpush.msra.mxu0 0.0
  %3588 = vmatpush.msra.mxu0 0.0
  %3589 = vmatpush.msra.mxu0 0.0
  %3590 = vmatpush.msra.mxu0 %v3570
  %3591 = vmatmul.f32.gmra.mxu0 %v3573
  %v3592 = vpop.f32.mrf.mxu0
  %v3593 = vadd.f32 0.0, %v3592
  %3594 = vdwg.mxu0
  %3595 = vrot.lane.b32.xlu0 %v2547, 48
  %v3596 = vpop.permute.xlu0 %3595
  %v3599 = vsel %vm377, %v3564, 0
  %3601 = vmatpush.msra.mxu0 0.0
  %3602 = vmatpush.msra.mxu0 0.0
  %3603 = vmatpush.msra.mxu0 0.0
  %3604 = vmatpush.msra.mxu0 0.0
  %3605 = vmatpush.msra.mxu0 0.0
  %3606 = vmatpush.msra.mxu0 0.0
  %3607 = vmatpush.msra.mxu0 0.0
  %3608 = vmatpush.msra.mxu0 0.0
  %3609 = vmatpush.msra.mxu0 0.0
  %3610 = vmatpush.msra.mxu0 0.0
  %3611 = vmatpush.msra.mxu0 0.0
  %3612 = vmatpush.msra.mxu0 0.0
  %3613 = vmatpush.msra.mxu0 0.0
  %3614 = vmatpush.msra.mxu0 0.0
  %3615 = vmatpush.msra.mxu0 0.0
  %3616 = vmatpush.msra.mxu0 %v3596
  %3617 = vmatmul.f32.gmra.mxu0 %v3599
  %v3618 = vpop.f32.mrf.mxu0
  %v3619 = vadd.f32 0.0, %v3618
  %3620 = vdwg.mxu0
  %3621 = vrot.lane.b32.xlu0 %v2550, 48
  %v3622 = vpop.permute.xlu0 %3621
  %v3625 = vsel %vm377, %v3565, 0
  %3627 = vmatpush.msra.mxu0 0.0
  %3628 = vmatpush.msra.mxu0 0.0
  %3629 = vmatpush.msra.mxu0 0.0
  %3630 = vmatpush.msra.mxu0 0.0
  %3631 = vmatpush.msra.mxu0 0.0
  %3632 = vmatpush.msra.mxu0 0.0
  %3633 = vmatpush.msra.mxu0 0.0
  %3634 = vmatpush.msra.mxu0 0.0
  %3635 = vmatpush.msra.mxu0 0.0
  %3636 = vmatpush.msra.mxu0 0.0
  %3637 = vmatpush.msra.mxu0 0.0
  %3638 = vmatpush.msra.mxu0 0.0
  %3639 = vmatpush.msra.mxu0 0.0
  %3640 = vmatpush.msra.mxu0 0.0
  %3641 = vmatpush.msra.mxu0 0.0
  %3642 = vmatpush.msra.mxu0 %v3622
  %3643 = vmatmul.f32.gmra.mxu0 %v3625
  %v3644 = vpop.f32.mrf.mxu0
  %v3645 = vadd.f32 0.0, %v3644
  %3646 = vdwg.mxu0
  %3647 = vrot.lane.b32.xlu0 %v2553, 48
  %v3648 = vpop.permute.xlu0 %3647
  %v3651 = vsel %vm377, %v3566, 0
  %3653 = vmatpush.msra.mxu0 0.0
  %3654 = vmatpush.msra.mxu0 0.0
  %3655 = vmatpush.msra.mxu0 0.0
  %3656 = vmatpush.msra.mxu0 0.0
  %3657 = vmatpush.msra.mxu0 0.0
  %3658 = vmatpush.msra.mxu0 0.0
  %3659 = vmatpush.msra.mxu0 0.0
  %3660 = vmatpush.msra.mxu0 0.0
  %3661 = vmatpush.msra.mxu0 0.0
  %3662 = vmatpush.msra.mxu0 0.0
  %3663 = vmatpush.msra.mxu0 0.0
  %3664 = vmatpush.msra.mxu0 0.0
  %3665 = vmatpush.msra.mxu0 0.0
  %3666 = vmatpush.msra.mxu0 0.0
  %3667 = vmatpush.msra.mxu0 0.0
  %3668 = vmatpush.msra.mxu0 %v3648
  %3669 = vmatmul.f32.gmra.mxu0 %v3651
  %v3670 = vpop.f32.mrf.mxu0
  %v3671 = vadd.f32 0.0, %v3670
  %3672 = vdwg.mxu0
  %3673 = vrot.lane.b32.xlu0 %v2556, 48
  %v3674 = vpop.permute.xlu0 %3673
  %v3677 = vsel %vm377, %v3567, 0
  %3679 = vmatpush.msra.mxu0 0.0
  %3680 = vmatpush.msra.mxu0 0.0
  %3681 = vmatpush.msra.mxu0 0.0
  %3682 = vmatpush.msra.mxu0 0.0
  %3683 = vmatpush.msra.mxu0 0.0
  %3684 = vmatpush.msra.mxu0 0.0
  %3685 = vmatpush.msra.mxu0 0.0
  %3686 = vmatpush.msra.mxu0 0.0
  %3687 = vmatpush.msra.mxu0 0.0
  %3688 = vmatpush.msra.mxu0 0.0
  %3689 = vmatpush.msra.mxu0 0.0
  %3690 = vmatpush.msra.mxu0 0.0
  %3691 = vmatpush.msra.mxu0 0.0
  %3692 = vmatpush.msra.mxu0 0.0
  %3693 = vmatpush.msra.mxu0 0.0
  %3694 = vmatpush.msra.mxu0 %v3674
  %3695 = vmatmul.f32.gmra.mxu0 %v3677
  %v3696 = vpop.f32.mrf.mxu0
  %v3697 = vadd.f32 0.0, %v3696
  %3698 = vdwg.mxu0
  %3699 = vrot.lane.b32.xlu0 %v2559, 48
  %v3700 = vpop.permute.xlu0 %3699
  %v3703 = vsel %vm377, %v3568, 0
  %3705 = vmatpush.msra.mxu0 0.0
  %3706 = vmatpush.msra.mxu0 0.0
  %3707 = vmatpush.msra.mxu0 0.0
  %3708 = vmatpush.msra.mxu0 0.0
  %3709 = vmatpush.msra.mxu0 0.0
  %3710 = vmatpush.msra.mxu0 0.0
  %3711 = vmatpush.msra.mxu0 0.0
  %3712 = vmatpush.msra.mxu0 0.0
  %3713 = vmatpush.msra.mxu0 0.0
  %3714 = vmatpush.msra.mxu0 0.0
  %3715 = vmatpush.msra.mxu0 0.0
  %3716 = vmatpush.msra.mxu0 0.0
  %3717 = vmatpush.msra.mxu0 0.0
  %3718 = vmatpush.msra.mxu0 0.0
  %3719 = vmatpush.msra.mxu0 0.0
  %3720 = vmatpush.msra.mxu0 %v3700
  %3721 = vmatmul.f32.gmra.mxu0 %v3703
  %v3722 = vpop.f32.mrf.mxu0
  %v3723 = vadd.f32 0.0, %v3722
  %3724 = vdwg.mxu0
  %3725 = vrot.lane.b32.xlu0 %v2544, 104
  %v3726 = vpop.permute.xlu0 %3725
  %3727 = vrot.lane.b32.xlu0 %v2544, 72
  %v3728 = vpop.permute.xlu0 %3727
  %v3729 = vsel %vm377, %v3726, 0
  %v3731 = vsel %vm377, %v3728, 0
  %3733 = vmatpush.xpose.msra.mxu0 0.0
  %3734 = vmatpush.xpose.msra.mxu0 0.0
  %3735 = vmatpush.xpose.msra.mxu0 0.0
  %3736 = vmatpush.xpose.msra.mxu0 0.0
  %3737 = vmatpush.xpose.msra.mxu0 0.0
  %3738 = vmatpush.xpose.msra.mxu0 0.0
  %3739 = vmatpush.xpose.msra.mxu0 0.0
  %3740 = vmatpush.xpose.msra.mxu0 0.0
  %3741 = vmatpush.xpose.msra.mxu0 0.0
  %3742 = vmatpush.xpose.msra.mxu0 0.0
  %3743 = vmatpush.xpose.msra.mxu0 0.0
  %3744 = vmatpush.xpose.msra.mxu0 0.0
  %3745 = vmatpush.xpose.msra.mxu0 0.0
  %3746 = vmatpush.xpose.msra.mxu0 0.0
  %3747 = vmatpush.xpose.msra.mxu0 0.0
  %3748 = vmatpush.xpose.msra.mxu0 %v3731
  %3749 = vmatmul.f32.gmra.mxu0 %v3729
  %v3750 = vpop.f32.mrf.mxu0
  %v3751 = vadd.f32 %v173, %v3750
  %3752 = vdwg.mxu0
  %3753 = vrot.lane.b32.xlu0 %v2547, 104
  %v3754 = vpop.permute.xlu0 %3753
  %3755 = vrot.lane.b32.xlu0 %v2547, 72
  %v3756 = vpop.permute.xlu0 %3755
  %v3757 = vsel %vm377, %v3754, 0
  %v3759 = vsel %vm377, %v3756, 0
  %3761 = vmatpush.xpose.msra.mxu0 0.0
  %3762 = vmatpush.xpose.msra.mxu0 0.0
  %3763 = vmatpush.xpose.msra.mxu0 0.0
  %3764 = vmatpush.xpose.msra.mxu0 0.0
  %3765 = vmatpush.xpose.msra.mxu0 0.0
  %3766 = vmatpush.xpose.msra.mxu0 0.0
  %3767 = vmatpush.xpose.msra.mxu0 0.0
  %3768 = vmatpush.xpose.msra.mxu0 0.0
  %3769 = vmatpush.xpose.msra.mxu0 0.0
  %3770 = vmatpush.xpose.msra.mxu0 0.0
  %3771 = vmatpush.xpose.msra.mxu0 0.0
  %3772 = vmatpush.xpose.msra.mxu0 0.0
  %3773 = vmatpush.xpose.msra.mxu0 0.0
  %3774 = vmatpush.xpose.msra.mxu0 0.0
  %3775 = vmatpush.xpose.msra.mxu0 0.0
  %3776 = vmatpush.xpose.msra.mxu0 %v3759
  %3777 = vmatmul.f32.gmra.mxu0 %v3757
  %v3778 = vpop.f32.mrf.mxu0
  %v3779 = vadd.f32 %v174, %v3778
  %3780 = vdwg.mxu0
  %3781 = vrot.lane.b32.xlu0 %v2550, 104
  %v3782 = vpop.permute.xlu0 %3781
  %3783 = vrot.lane.b32.xlu0 %v2550, 72
  %v3784 = vpop.permute.xlu0 %3783
  %v3785 = vsel %vm377, %v3782, 0
  %v3787 = vsel %vm377, %v3784, 0
  %3789 = vmatpush.xpose.msra.mxu0 0.0
  %3790 = vmatpush.xpose.msra.mxu0 0.0
  %3791 = vmatpush.xpose.msra.mxu0 0.0
  %3792 = vmatpush.xpose.msra.mxu0 0.0
  %3793 = vmatpush.xpose.msra.mxu0 0.0
  %3794 = vmatpush.xpose.msra.mxu0 0.0
  %3795 = vmatpush.xpose.msra.mxu0 0.0
  %3796 = vmatpush.xpose.msra.mxu0 0.0
  %3797 = vmatpush.xpose.msra.mxu0 0.0
  %3798 = vmatpush.xpose.msra.mxu0 0.0
  %3799 = vmatpush.xpose.msra.mxu0 0.0
  %3800 = vmatpush.xpose.msra.mxu0 0.0
  %3801 = vmatpush.xpose.msra.mxu0 0.0
  %3802 = vmatpush.xpose.msra.mxu0 0.0
  %3803 = vmatpush.xpose.msra.mxu0 0.0
  %3804 = vmatpush.xpose.msra.mxu0 %v3787
  %3805 = vmatmul.f32.gmra.mxu0 %v3785
  %v3806 = vpop.f32.mrf.mxu0
  %v3807 = vadd.f32 %v175, %v3806
  %3808 = vdwg.mxu0
  %3809 = vrot.lane.b32.xlu0 %v2553, 104
  %v3810 = vpop.permute.xlu0 %3809
  %3811 = vrot.lane.b32.xlu0 %v2553, 72
  %v3812 = vpop.permute.xlu0 %3811
  %v3813 = vsel %vm377, %v3810, 0
  %v3815 = vsel %vm377, %v3812, 0
  %3817 = vmatpush.xpose.msra.mxu0 0.0
  %3818 = vmatpush.xpose.msra.mxu0 0.0
  %3819 = vmatpush.xpose.msra.mxu0 0.0
  %3820 = vmatpush.xpose.msra.mxu0 0.0
  %3821 = vmatpush.xpose.msra.mxu0 0.0
  %3822 = vmatpush.xpose.msra.mxu0 0.0
  %3823 = vmatpush.xpose.msra.mxu0 0.0
  %3824 = vmatpush.xpose.msra.mxu0 0.0
  %3825 = vmatpush.xpose.msra.mxu0 0.0
  %3826 = vmatpush.xpose.msra.mxu0 0.0
  %3827 = vmatpush.xpose.msra.mxu0 0.0
  %3828 = vmatpush.xpose.msra.mxu0 0.0
  %3829 = vmatpush.xpose.msra.mxu0 0.0
  %3830 = vmatpush.xpose.msra.mxu0 0.0
  %3831 = vmatpush.xpose.msra.mxu0 0.0
  %3832 = vmatpush.xpose.msra.mxu0 %v3815
  %3833 = vmatmul.f32.gmra.mxu0 %v3813
  %v3834 = vpop.f32.mrf.mxu0
  %v3835 = vadd.f32 %v176, %v3834
  %3836 = vdwg.mxu0
  %3837 = vrot.lane.b32.xlu0 %v2556, 104
  %v3838 = vpop.permute.xlu0 %3837
  %3839 = vrot.lane.b32.xlu0 %v2556, 72
  %v3840 = vpop.permute.xlu0 %3839
  %v3841 = vsel %vm377, %v3838, 0
  %v3843 = vsel %vm377, %v3840, 0
  %3845 = vmatpush.xpose.msra.mxu0 0.0
  %3846 = vmatpush.xpose.msra.mxu0 0.0
  %3847 = vmatpush.xpose.msra.mxu0 0.0
  %3848 = vmatpush.xpose.msra.mxu0 0.0
  %3849 = vmatpush.xpose.msra.mxu0 0.0
  %3850 = vmatpush.xpose.msra.mxu0 0.0
  %3851 = vmatpush.xpose.msra.mxu0 0.0
  %3852 = vmatpush.xpose.msra.mxu0 0.0
  %3853 = vmatpush.xpose.msra.mxu0 0.0
  %3854 = vmatpush.xpose.msra.mxu0 0.0
  %3855 = vmatpush.xpose.msra.mxu0 0.0
  %3856 = vmatpush.xpose.msra.mxu0 0.0
  %3857 = vmatpush.xpose.msra.mxu0 0.0
  %3858 = vmatpush.xpose.msra.mxu0 0.0
  %3859 = vmatpush.xpose.msra.mxu0 0.0
  %3860 = vmatpush.xpose.msra.mxu0 %v3843
  %3861 = vmatmul.f32.gmra.mxu0 %v3841
  %v3862 = vpop.f32.mrf.mxu0
  %v3863 = vadd.f32 %v177, %v3862
  %3864 = vdwg.mxu0
  %3865 = vrot.lane.b32.xlu0 %v2559, 104
  %v3866 = vpop.permute.xlu0 %3865
  %3867 = vrot.lane.b32.xlu0 %v2559, 72
  %v3868 = vpop.permute.xlu0 %3867
  %v3869 = vsel %vm377, %v3866, 0
  %v3871 = vsel %vm377, %v3868, 0
  %3873 = vmatpush.xpose.msra.mxu0 0.0
  %3874 = vmatpush.xpose.msra.mxu0 0.0
  %3875 = vmatpush.xpose.msra.mxu0 0.0
  %3876 = vmatpush.xpose.msra.mxu0 0.0
  %3877 = vmatpush.xpose.msra.mxu0 0.0
  %3878 = vmatpush.xpose.msra.mxu0 0.0
  %3879 = vmatpush.xpose.msra.mxu0 0.0
  %3880 = vmatpush.xpose.msra.mxu0 0.0
  %3881 = vmatpush.xpose.msra.mxu0 0.0
  %3882 = vmatpush.xpose.msra.mxu0 0.0
  %3883 = vmatpush.xpose.msra.mxu0 0.0
  %3884 = vmatpush.xpose.msra.mxu0 0.0
  %3885 = vmatpush.xpose.msra.mxu0 0.0
  %3886 = vmatpush.xpose.msra.mxu0 0.0
  %3887 = vmatpush.xpose.msra.mxu0 0.0
  %3888 = vmatpush.xpose.msra.mxu0 %v3871
  %3889 = vmatmul.f32.gmra.mxu0 %v3869
  %v3890 = vpop.f32.mrf.mxu0
  %v3891 = vadd.f32 %v178, %v3890
  %3892 = vdwg.mxu0
  %v3893 = vsel %vm377, %v3751, -inf
  %3894 = vmax.xlane.f32.xlu0 %v3893
  %v3895 = vpop.xlane.xlu0 %3894
  %v3896 = vsel %vm377, %v3779, -inf
  %3897 = vmax.xlane.f32.xlu0 %v3896
  %v3898 = vpop.xlane.xlu0 %3897
  %v3899 = vsel %vm377, %v3807, -inf
  %3900 = vmax.xlane.f32.xlu0 %v3899
  %v3901 = vpop.xlane.xlu0 %3900
  %v3902 = vsel %vm377, %v3835, -inf
  %3903 = vmax.xlane.f32.xlu0 %v3902
  %v3904 = vpop.xlane.xlu0 %3903
  %v3905 = vsel %vm377, %v3863, -inf
  %3906 = vmax.xlane.f32.xlu0 %v3905
  %v3907 = vpop.xlane.xlu0 %3906
  %v3908 = vsel %vm377, %v3891, -inf
  %3909 = vmax.xlane.f32.xlu0 %v3908
  %v3910 = vpop.xlane.xlu0 %3909
  %v3911 = vsub.f32 %v3751, %v3895
  %v3912 = vsub.f32 %v3779, %v3898
  %v3913 = vsub.f32 %v3807, %v3901
  %v3914 = vsub.f32 %v3835, %v3904
  %v3915 = vsub.f32 %v3863, %v3907
  %v3916 = vsub.f32 %v3891, %v3910
  %v3917 = vmul.f32 %v3911, 1.442695
  %v3918 = vpow.pop %v3917
  %v3919 = vmul.f32 %v3912, 1.442695
  %v3920 = vpow.pop %v3919
  %v3921 = vmul.f32 %v3913, 1.442695
  %v3922 = vpow.pop %v3921
  %v3923 = vmul.f32 %v3914, 1.442695
  %v3924 = vpow.pop %v3923
  %v3925 = vmul.f32 %v3915, 1.442695
  %v3926 = vpow.pop %v3925
  %v3927 = vmul.f32 %v3916, 1.442695
  %v3928 = vpow.pop %v3927
  %v3929 = vsel %vm377, %v3918, 0.0
  %3930 = vadd.xlane.f32.xlu0 %v3929
  %v3931 = vpop.xlane.xlu0 %3930
  %v3932 = vsel %vm377, %v3920, 0.0
  %3933 = vadd.xlane.f32.xlu0 %v3932
  %v3934 = vpop.xlane.xlu0 %3933
  %v3935 = vsel %vm377, %v3922, 0.0
  %3936 = vadd.xlane.f32.xlu0 %v3935
  %v3937 = vpop.xlane.xlu0 %3936
  %v3938 = vsel %vm377, %v3924, 0.0
  %3939 = vadd.xlane.f32.xlu0 %v3938
  %v3940 = vpop.xlane.xlu0 %3939
  %v3941 = vsel %vm377, %v3926, 0.0
  %3942 = vadd.xlane.f32.xlu0 %v3941
  %v3943 = vpop.xlane.xlu0 %3942
  %v3944 = vsel %vm377, %v3928, 0.0
  %3945 = vadd.xlane.f32.xlu0 %v3944
  %v3946 = vpop.xlane.xlu0 %3945
  %v3947 = vrcp.pop %v3931
  %v3948 = vrcp.pop %v3934
  %v3949 = vrcp.pop %v3937
  %v3950 = vrcp.pop %v3940
  %v3951 = vrcp.pop %v3943
  %v3952 = vrcp.pop %v3946
  %v3953 = vmul.f32 %v3918, %v3947
  %v3954 = vmul.f32 %v3920, %v3948
  %v3955 = vmul.f32 %v3922, %v3949
  %v3956 = vmul.f32 %v3924, %v3950
  %v3957 = vmul.f32 %v3926, %v3951
  %v3958 = vmul.f32 %v3928, %v3952
  %3959 = vrot.lane.b32.xlu0 %v2544, 40
  %v3960 = vpop.permute.xlu0 %3959
  %v3963 = vsel %vm377, %v3953, 0
  %3965 = vmatpush.msra.mxu0 0.0
  %3966 = vmatpush.msra.mxu0 0.0
  %3967 = vmatpush.msra.mxu0 0.0
  %3968 = vmatpush.msra.mxu0 0.0
  %3969 = vmatpush.msra.mxu0 0.0
  %3970 = vmatpush.msra.mxu0 0.0
  %3971 = vmatpush.msra.mxu0 0.0
  %3972 = vmatpush.msra.mxu0 0.0
  %3973 = vmatpush.msra.mxu0 0.0
  %3974 = vmatpush.msra.mxu0 0.0
  %3975 = vmatpush.msra.mxu0 0.0
  %3976 = vmatpush.msra.mxu0 0.0
  %3977 = vmatpush.msra.mxu0 0.0
  %3978 = vmatpush.msra.mxu0 0.0
  %3979 = vmatpush.msra.mxu0 0.0
  %3980 = vmatpush.msra.mxu0 %v3960
  %3981 = vmatmul.f32.gmra.mxu0 %v3963
  %v3982 = vpop.f32.mrf.mxu0
  %v3983 = vadd.f32 0.0, %v3982
  %3984 = vdwg.mxu0
  %3985 = vrot.lane.b32.xlu0 %v2547, 40
  %v3986 = vpop.permute.xlu0 %3985
  %v3989 = vsel %vm377, %v3954, 0
  %3991 = vmatpush.msra.mxu0 0.0
  %3992 = vmatpush.msra.mxu0 0.0
  %3993 = vmatpush.msra.mxu0 0.0
  %3994 = vmatpush.msra.mxu0 0.0
  %3995 = vmatpush.msra.mxu0 0.0
  %3996 = vmatpush.msra.mxu0 0.0
  %3997 = vmatpush.msra.mxu0 0.0
  %3998 = vmatpush.msra.mxu0 0.0
  %3999 = vmatpush.msra.mxu0 0.0
  %4000 = vmatpush.msra.mxu0 0.0
  %4001 = vmatpush.msra.mxu0 0.0
  %4002 = vmatpush.msra.mxu0 0.0
  %4003 = vmatpush.msra.mxu0 0.0
  %4004 = vmatpush.msra.mxu0 0.0
  %4005 = vmatpush.msra.mxu0 0.0
  %4006 = vmatpush.msra.mxu0 %v3986
  %4007 = vmatmul.f32.gmra.mxu0 %v3989
  %v4008 = vpop.f32.mrf.mxu0
  %v4009 = vadd.f32 0.0, %v4008
  %4010 = vdwg.mxu0
  %4011 = vrot.lane.b32.xlu0 %v2550, 40
  %v4012 = vpop.permute.xlu0 %4011
  %v4015 = vsel %vm377, %v3955, 0
  %4017 = vmatpush.msra.mxu0 0.0
  %4018 = vmatpush.msra.mxu0 0.0
  %4019 = vmatpush.msra.mxu0 0.0
  %4020 = vmatpush.msra.mxu0 0.0
  %4021 = vmatpush.msra.mxu0 0.0
  %4022 = vmatpush.msra.mxu0 0.0
  %4023 = vmatpush.msra.mxu0 0.0
  %4024 = vmatpush.msra.mxu0 0.0
  %4025 = vmatpush.msra.mxu0 0.0
  %4026 = vmatpush.msra.mxu0 0.0
  %4027 = vmatpush.msra.mxu0 0.0
  %4028 = vmatpush.msra.mxu0 0.0
  %4029 = vmatpush.msra.mxu0 0.0
  %4030 = vmatpush.msra.mxu0 0.0
  %4031 = vmatpush.msra.mxu0 0.0
  %4032 = vmatpush.msra.mxu0 %v4012
  %4033 = vmatmul.f32.gmra.mxu0 %v4015
  %v4034 = vpop.f32.mrf.mxu0
  %v4035 = vadd.f32 0.0, %v4034
  %4036 = vdwg.mxu0
  %4037 = vrot.lane.b32.xlu0 %v2553, 40
  %v4038 = vpop.permute.xlu0 %4037
  %v4041 = vsel %vm377, %v3956, 0
  %4043 = vmatpush.msra.mxu0 0.0
  %4044 = vmatpush.msra.mxu0 0.0
  %4045 = vmatpush.msra.mxu0 0.0
  %4046 = vmatpush.msra.mxu0 0.0
  %4047 = vmatpush.msra.mxu0 0.0
  %4048 = vmatpush.msra.mxu0 0.0
  %4049 = vmatpush.msra.mxu0 0.0
  %4050 = vmatpush.msra.mxu0 0.0
  %4051 = vmatpush.msra.mxu0 0.0
  %4052 = vmatpush.msra.mxu0 0.0
  %4053 = vmatpush.msra.mxu0 0.0
  %4054 = vmatpush.msra.mxu0 0.0
  %4055 = vmatpush.msra.mxu0 0.0
  %4056 = vmatpush.msra.mxu0 0.0
  %4057 = vmatpush.msra.mxu0 0.0
  %4058 = vmatpush.msra.mxu0 %v4038
  %4059 = vmatmul.f32.gmra.mxu0 %v4041
  %v4060 = vpop.f32.mrf.mxu0
  %v4061 = vadd.f32 0.0, %v4060
  %4062 = vdwg.mxu0
  %4063 = vrot.lane.b32.xlu0 %v2556, 40
  %v4064 = vpop.permute.xlu0 %4063
  %v4067 = vsel %vm377, %v3957, 0
  %4069 = vmatpush.msra.mxu0 0.0
  %4070 = vmatpush.msra.mxu0 0.0
  %4071 = vmatpush.msra.mxu0 0.0
  %4072 = vmatpush.msra.mxu0 0.0
  %4073 = vmatpush.msra.mxu0 0.0
  %4074 = vmatpush.msra.mxu0 0.0
  %4075 = vmatpush.msra.mxu0 0.0
  %4076 = vmatpush.msra.mxu0 0.0
  %4077 = vmatpush.msra.mxu0 0.0
  %4078 = vmatpush.msra.mxu0 0.0
  %4079 = vmatpush.msra.mxu0 0.0
  %4080 = vmatpush.msra.mxu0 0.0
  %4081 = vmatpush.msra.mxu0 0.0
  %4082 = vmatpush.msra.mxu0 0.0
  %4083 = vmatpush.msra.mxu0 0.0
  %4084 = vmatpush.msra.mxu0 %v4064
  %4085 = vmatmul.f32.gmra.mxu0 %v4067
  %v4086 = vpop.f32.mrf.mxu0
  %v4087 = vadd.f32 0.0, %v4086
  %4088 = vdwg.mxu0
  %4089 = vrot.lane.b32.xlu0 %v2559, 40
  %v4090 = vpop.permute.xlu0 %4089
  %v4093 = vsel %vm377, %v3958, 0
  %4095 = vmatpush.msra.mxu0 0.0
  %4096 = vmatpush.msra.mxu0 0.0
  %4097 = vmatpush.msra.mxu0 0.0
  %4098 = vmatpush.msra.mxu0 0.0
  %4099 = vmatpush.msra.mxu0 0.0
  %4100 = vmatpush.msra.mxu0 0.0
  %4101 = vmatpush.msra.mxu0 0.0
  %4102 = vmatpush.msra.mxu0 0.0
  %4103 = vmatpush.msra.mxu0 0.0
  %4104 = vmatpush.msra.mxu0 0.0
  %4105 = vmatpush.msra.mxu0 0.0
  %4106 = vmatpush.msra.mxu0 0.0
  %4107 = vmatpush.msra.mxu0 0.0
  %4108 = vmatpush.msra.mxu0 0.0
  %4109 = vmatpush.msra.mxu0 0.0
  %4110 = vmatpush.msra.mxu0 %v4090
  %4111 = vmatmul.f32.gmra.mxu0 %v4093
  %v4112 = vpop.f32.mrf.mxu0
  %v4113 = vadd.f32 0.0, %v4112
  %4114 = vdwg.mxu0
  %4121 = vrot.lane.b32.xlu0 %v3203, 8
  %v4122 = vpop.permute.xlu0 %4121
  %4123 = vrot.lane.b32.xlu0 %v3229, 8
  %v4124 = vpop.permute.xlu0 %4123
  %4125 = vrot.lane.b32.xlu0 %v3255, 8
  %v4126 = vpop.permute.xlu0 %4125
  %4127 = vrot.lane.b32.xlu0 %v3281, 8
  %v4128 = vpop.permute.xlu0 %4127
  %4129 = vrot.lane.b32.xlu0 %v3307, 8
  %v4130 = vpop.permute.xlu0 %4129
  %4131 = vrot.lane.b32.xlu0 %v3333, 8
  %v4132 = vpop.permute.xlu0 %4131
  %4145 = vrot.lane.b32.xlu0 %v3593, 16
  %v4146 = vpop.permute.xlu0 %4145
  %4147 = vrot.lane.b32.xlu0 %v3619, 16
  %v4148 = vpop.permute.xlu0 %4147
  %4149 = vrot.lane.b32.xlu0 %v3645, 16
  %v4150 = vpop.permute.xlu0 %4149
  %4151 = vrot.lane.b32.xlu0 %v3671, 16
  %v4152 = vpop.permute.xlu0 %4151
  %4153 = vrot.lane.b32.xlu0 %v3697, 16
  %v4154 = vpop.permute.xlu0 %4153
  %4155 = vrot.lane.b32.xlu0 %v3723, 16
  %v4156 = vpop.permute.xlu0 %4155
  %4169 = vrot.lane.b32.xlu0 %v3983, 24
  %v4170 = vpop.permute.xlu0 %4169
  %4171 = vrot.lane.b32.xlu0 %v4009, 24
  %v4172 = vpop.permute.xlu0 %4171
  %4173 = vrot.lane.b32.xlu0 %v4035, 24
  %v4174 = vpop.permute.xlu0 %4173
  %4175 = vrot.lane.b32.xlu0 %v4061, 24
  %v4176 = vpop.permute.xlu0 %4175
  %4177 = vrot.lane.b32.xlu0 %v4087, 24
  %v4178 = vpop.permute.xlu0 %4177
  %4179 = vrot.lane.b32.xlu0 %v4113, 24
  %v4180 = vpop.permute.xlu0 %4179
  %v4187 = vsel %vm377, %v2813, %v4122
  %v4188 = vsel %vm377, %v2839, %v4124
  %v4189 = vsel %vm377, %v2865, %v4126
  %v4190 = vsel %vm377, %v2891, %v4128
  %v4191 = vsel %vm377, %v2917, %v4130
  %v4192 = vsel %vm377, %v2943, %v4132
  %v4193 = vsel %vm2007, %v4187, %v4146
  %v4194 = vsel %vm2007, %v4188, %v4148
  %v4195 = vsel %vm2007, %v4189, %v4150
  %v4196 = vsel %vm2007, %v4190, %v4152
  %v4197 = vsel %vm2007, %v4191, %v4154
  %v4198 = vsel %vm2007, %v4192, %v4156
  %v4199 = vsel %vm2014, %v4193, %v4170
  %v4200 = vsel %vm2014, %v4194, %v4172
  %v4201 = vsel %vm2014, %v4195, %v4174
  %v4202 = vsel %vm2014, %v4196, %v4176
  %v4203 = vsel %vm2014, %v4197, %v4178
  %v4204 = vsel %vm2014, %v4198, %v4180
  %4209 = vrot.lane.b32.xlu0 %v2373, 32
  %v4210 = vpop.permute.xlu0 %4209
  %4211 = vrot.lane.b32.xlu0 %v2374, 32
  %v4212 = vpop.permute.xlu0 %4211
  %4213 = vrot.lane.b32.xlu0 %v2375, 32
  %v4214 = vpop.permute.xlu0 %4213
  %4215 = vrot.lane.b32.xlu0 %v2376, 32
  %v4216 = vpop.permute.xlu0 %4215
  %v4222 = vsel %vm210, %v4199, 0
  %v4225 = vsel %vm210, %v4200, 0
  %v4228 = vsel %vm210, %v4201, 0
  %v4231 = vsel %vm210, %v4202, 0
  %v4234 = vsel %vm210, %v4203, 0
  %v4237 = vsel %vm210, %v4204, 0
  %4239 = vmatpush.msra.mxu0 0.0
  %4240 = vmatpush.msra.mxu0 0.0
  %4241 = vmatpush.msra.mxu0 0.0
  %4242 = vmatpush.msra.mxu0 0.0
  %4243 = vmatpush.msra.mxu0 0.0
  %4244 = vmatpush.msra.mxu0 0.0
  %4245 = vmatpush.msra.mxu0 0.0
  %4246 = vmatpush.msra.mxu0 0.0
  %4247 = vmatpush.msra.mxu0 0.0
  %4248 = vmatpush.msra.mxu0 0.0
  %4249 = vmatpush.msra.mxu0 0.0
  %4250 = vmatpush.msra.mxu0 0.0
  %4251 = vmatpush.msra.mxu0 %v4216
  %4252 = vmatpush.msra.mxu0 %v4214
  %4253 = vmatpush.msra.mxu0 %v4212
  %4254 = vmatpush.msra.mxu0 %v4210
  %4255 = vmatmul.f32.gmra.mxu0 %v4222
  %v4256 = vpop.f32.mrf.mxu0
  %v4257 = vadd.f32 0.0, %v4256
  %4258 = vmatmul.f32.gmra.mxu0 %v4225
  %v4259 = vpop.f32.mrf.mxu0
  %v4260 = vadd.f32 0.0, %v4259
  %4261 = vmatmul.f32.gmra.mxu0 %v4228
  %v4262 = vpop.f32.mrf.mxu0
  %v4263 = vadd.f32 0.0, %v4262
  %4264 = vmatmul.f32.gmra.mxu0 %v4231
  %v4265 = vpop.f32.mrf.mxu0
  %v4266 = vadd.f32 0.0, %v4265
  %4267 = vmatmul.f32.gmra.mxu0 %v4234
  %v4268 = vpop.f32.mrf.mxu0
  %v4269 = vadd.f32 0.0, %v4268
  %4270 = vmatmul.f32.gmra.mxu0 %v4237
  %v4271 = vpop.f32.mrf.mxu0
  %v4272 = vadd.f32 0.0, %v4271
  %4273 = vdwg.mxu0
  %v4274 = vadd.f32 %v2366, %v4257
  %v4275 = vadd.f32 %v2367, %v4260
  %v4276 = vadd.f32 %v2368, %v4263
  %v4277 = vadd.f32 %v2369, %v4266
  %v4278 = vadd.f32 %v2370, %v4269
  %v4279 = vadd.f32 %v2371, %v4272
  %v4280 = vld [vmem:[%s6 + $0x3] sm:$0x1]
  %v4281 = vmul.f32 %v4274, %v4274
  %v4282 = vmul.f32 %v4275, %v4275
  %v4283 = vmul.f32 %v4276, %v4276
  %v4284 = vmul.f32 %v4277, %v4277
  %v4285 = vmul.f32 %v4278, %v4278
  %v4286 = vmul.f32 %v4279, %v4279
  %v4287 = vsel %vm210, %v4281, 0.0
  %4288 = vadd.xlane.f32.xlu0 %v4287
  %v4289 = vpop.xlane.xlu0 %4288
  %v4290 = vsel %vm210, %v4282, 0.0
  %4291 = vadd.xlane.f32.xlu0 %v4290
  %v4292 = vpop.xlane.xlu0 %4291
  %v4293 = vsel %vm210, %v4283, 0.0
  %4294 = vadd.xlane.f32.xlu0 %v4293
  %v4295 = vpop.xlane.xlu0 %4294
  %v4296 = vsel %vm210, %v4284, 0.0
  %4297 = vadd.xlane.f32.xlu0 %v4296
  %v4298 = vpop.xlane.xlu0 %4297
  %v4299 = vsel %vm210, %v4285, 0.0
  %4300 = vadd.xlane.f32.xlu0 %v4299
  %v4301 = vpop.xlane.xlu0 %4300
  %v4302 = vsel %vm210, %v4286, 0.0
  %4303 = vadd.xlane.f32.xlu0 %v4302
  %v4304 = vpop.xlane.xlu0 %4303
  %v4305 = vmul.f32 %v4289, %v235
  %v4306 = vmul.f32 %v4292, %v235
  %v4307 = vmul.f32 %v4295, %v235
  %v4308 = vmul.f32 %v4298, %v235
  %v4309 = vmul.f32 %v4301, %v235
  %v4310 = vmul.f32 %v4304, %v235
  %v4311 = vadd.f32 %v4305, 1e-06
  %v4312 = vadd.f32 %v4306, 1e-06
  %v4313 = vadd.f32 %v4307, 1e-06
  %v4314 = vadd.f32 %v4308, 1e-06
  %v4315 = vadd.f32 %v4309, 1e-06
  %v4316 = vadd.f32 %v4310, 1e-06
  %v4317 = vrsqrt.pop %v4311
  %v4318 = vmul.f32 %v4317, %v4311
  %v4319 = vmul.f32 %v4318, %v4317
  %v4320 = vmul.f32 0.5, %v4319
  %v4321 = vsub.f32 1.5, %v4320
  %v4322 = vmul.f32 %v4317, %v4321
  %vm4323 = vweird.f32 %v4311
  %vm4324 = vweird.f32 %v4317
  %vm4325 = vmor %vm4323, %vm4324
  %v4326 = vsel %vm4325, %v4317, %v4322
  %v4327 = vrsqrt.pop %v4312
  %v4328 = vmul.f32 %v4327, %v4312
  %v4329 = vmul.f32 %v4328, %v4327
  %v4330 = vmul.f32 0.5, %v4329
  %v4331 = vsub.f32 1.5, %v4330
  %v4332 = vmul.f32 %v4327, %v4331
  %vm4333 = vweird.f32 %v4312
  %vm4334 = vweird.f32 %v4327
  %vm4335 = vmor %vm4333, %vm4334
  %v4336 = vsel %vm4335, %v4327, %v4332
  %v4337 = vrsqrt.pop %v4313
  %v4338 = vmul.f32 %v4337, %v4313
  %v4339 = vmul.f32 %v4338, %v4337
  %v4340 = vmul.f32 0.5, %v4339
  %v4341 = vsub.f32 1.5, %v4340
  %v4342 = vmul.f32 %v4337, %v4341
  %vm4343 = vweird.f32 %v4313
  %vm4344 = vweird.f32 %v4337
  %vm4345 = vmor %vm4343, %vm4344
  %v4346 = vsel %vm4345, %v4337, %v4342
  %v4347 = vrsqrt.pop %v4314
  %v4348 = vmul.f32 %v4347, %v4314
  %v4349 = vmul.f32 %v4348, %v4347
  %v4350 = vmul.f32 0.5, %v4349
  %v4351 = vsub.f32 1.5, %v4350
  %v4352 = vmul.f32 %v4347, %v4351
  %vm4353 = vweird.f32 %v4314
  %vm4354 = vweird.f32 %v4347
  %vm4355 = vmor %vm4353, %vm4354
  %v4356 = vsel %vm4355, %v4347, %v4352
  %v4357 = vrsqrt.pop %v4315
  %v4358 = vmul.f32 %v4357, %v4315
  %v4359 = vmul.f32 %v4358, %v4357
  %v4360 = vmul.f32 0.5, %v4359
  %v4361 = vsub.f32 1.5, %v4360
  %v4362 = vmul.f32 %v4357, %v4361
  %vm4363 = vweird.f32 %v4315
  %vm4364 = vweird.f32 %v4357
  %vm4365 = vmor %vm4363, %vm4364
  %v4366 = vsel %vm4365, %v4357, %v4362
  %v4367 = vrsqrt.pop %v4316
  %v4368 = vmul.f32 %v4367, %v4316
  %v4369 = vmul.f32 %v4368, %v4367
  %v4370 = vmul.f32 0.5, %v4369
  %v4371 = vsub.f32 1.5, %v4370
  %v4372 = vmul.f32 %v4367, %v4371
  %vm4373 = vweird.f32 %v4316
  %vm4374 = vweird.f32 %v4367
  %vm4375 = vmor %vm4373, %vm4374
  %v4376 = vsel %vm4375, %v4367, %v4372
  %v4377 = vmul.f32 %v4274, %v4326
  %v4378 = vmul.f32 %v4275, %v4336
  %v4379 = vmul.f32 %v4276, %v4346
  %v4380 = vmul.f32 %v4277, %v4356
  %v4381 = vmul.f32 %v4278, %v4366
  %v4382 = vmul.f32 %v4279, %v4376
  %v4383 = vperm.slane %v4280, 0
  %v4384 = vmul.f32 %v4377, %v4383
  %v4385 = vmul.f32 %v4378, %v4383
  %v4386 = vmul.f32 %v4379, %v4383
  %v4387 = vmul.f32 %v4380, %v4383
  %v4388 = vmul.f32 %v4381, %v4383
  %v4389 = vmul.f32 %v4382, %v4383
  %v4391 = vsel %vm210, %v4384, 0
  %v4394 = vsel %vm210, %v4385, 0
  %v4397 = vsel %vm210, %v4386, 0
  %v4400 = vsel %vm210, %v4387, 0
  %v4403 = vsel %vm210, %v4388, 0
  %v4406 = vsel %vm210, %v4389, 0
  %4408 = vmatpush.msra.mxu0 0.0
  %4409 = vmatpush.msra.mxu0 0.0
  %4410 = vmatpush.msra.mxu0 0.0
  %4411 = vmatpush.msra.mxu0 0.0
  %4412 = vmatpush.msra.mxu0 0.0
  %4413 = vmatpush.msra.mxu0 0.0
  %4414 = vmatpush.msra.mxu0 0.0
  %4415 = vmatpush.msra.mxu0 0.0
  %4416 = vmatpush.msra.mxu0 0.0
  %4417 = vmatpush.msra.mxu0 0.0
  %4418 = vmatpush.msra.mxu0 0.0
  %4419 = vmatpush.msra.mxu0 0.0
  %4420 = vmatpush.msra.mxu0 %v2381
  %4421 = vmatpush.msra.mxu0 %v2380
  %4422 = vmatpush.msra.mxu0 %v2379
  %4423 = vmatpush.msra.mxu0 %v2378
  %4424 = vmatmul.f32.gmra.mxu0 %v4391
  %v4425 = vpop.f32.mrf.mxu0
  %v4426 = vadd.f32 0.0, %v4425
  %4427 = vmatmul.f32.gmra.mxu0 %v4394
  %v4428 = vpop.f32.mrf.mxu0
  %v4429 = vadd.f32 0.0, %v4428
  %4430 = vmatmul.f32.gmra.mxu0 %v4397
  %v4431 = vpop.f32.mrf.mxu0
  %v4432 = vadd.f32 0.0, %v4431
  %4433 = vmatmul.f32.gmra.mxu0 %v4400
  %v4434 = vpop.f32.mrf.mxu0
  %v4435 = vadd.f32 0.0, %v4434
  %4436 = vmatmul.f32.gmra.mxu0 %v4403
  %v4437 = vpop.f32.mrf.mxu0
  %v4438 = vadd.f32 0.0, %v4437
  %4439 = vmatmul.f32.gmra.mxu0 %v4406
  %v4440 = vpop.f32.mrf.mxu0
  %v4441 = vadd.f32 0.0, %v4440
  %4442 = vdwg.mxu0
  %v4443 = vmul.f32 %v4426, %v4426
  %v4444 = vmul.f32 %v4429, %v4429
  %v4445 = vmul.f32 %v4432, %v4432
  %v4446 = vmul.f32 %v4435, %v4435
  %v4447 = vmul.f32 %v4438, %v4438
  %v4448 = vmul.f32 %v4441, %v4441
  %v4449 = vmul.f32 %v4426, %v4443
  %v4450 = vmul.f32 %v4429, %v4444
  %v4451 = vmul.f32 %v4432, %v4445
  %v4452 = vmul.f32 %v4435, %v4446
  %v4453 = vmul.f32 %v4438, %v4447
  %v4454 = vmul.f32 %v4441, %v4448
  %v4455 = vmul.f32 %v4449, 0.044715
  %v4456 = vmul.f32 %v4450, 0.044715
  %v4457 = vmul.f32 %v4451, 0.044715
  %v4458 = vmul.f32 %v4452, 0.044715
  %v4459 = vmul.f32 %v4453, 0.044715
  %v4460 = vmul.f32 %v4454, 0.044715
  %v4461 = vadd.f32 %v4426, %v4455
  %v4462 = vadd.f32 %v4429, %v4456
  %v4463 = vadd.f32 %v4432, %v4457
  %v4464 = vadd.f32 %v4435, %v4458
  %v4465 = vadd.f32 %v4438, %v4459
  %v4466 = vadd.f32 %v4441, %v4460
  %v4467 = vmul.f32 %v4461, 0.7978846
  %v4468 = vmul.f32 %v4462, 0.7978846
  %v4469 = vmul.f32 %v4463, 0.7978846
  %v4470 = vmul.f32 %v4464, 0.7978846
  %v4471 = vmul.f32 %v4465, 0.7978846
  %v4472 = vmul.f32 %v4466, 0.7978846
  %v4473 = vtanh.pop %v4467
  %v4474 = vtanh.pop %v4468
  %v4475 = vtanh.pop %v4469
  %v4476 = vtanh.pop %v4470
  %v4477 = vtanh.pop %v4471
  %v4478 = vtanh.pop %v4472
  %v4479 = vadd.f32 %v4473, 1.0
  %v4480 = vadd.f32 %v4474, 1.0
  %v4481 = vadd.f32 %v4475, 1.0
  %v4482 = vadd.f32 %v4476, 1.0
  %v4483 = vadd.f32 %v4477, 1.0
  %v4484 = vadd.f32 %v4478, 1.0
  %v4485 = vmul.f32 %v4479, 0.5
  %v4486 = vmul.f32 %v4480, 0.5
  %v4487 = vmul.f32 %v4481, 0.5
  %v4488 = vmul.f32 %v4482, 0.5
  %v4489 = vmul.f32 %v4483, 0.5
  %v4490 = vmul.f32 %v4484, 0.5
  %v4491 = vmul.f32 %v4426, %v4485
  %v4492 = vmul.f32 %v4429, %v4486
  %v4493 = vmul.f32 %v4432, %v4487
  %v4494 = vmul.f32 %v4435, %v4488
  %v4495 = vmul.f32 %v4438, %v4489
  %v4496 = vmul.f32 %v4441, %v4490
  %4497 = vrot.lane.b32.xlu0 %v4426, 64
  %v4498 = vpop.permute.xlu0 %4497
  %4499 = vrot.lane.b32.xlu0 %v4429, 64
  %v4500 = vpop.permute.xlu0 %4499
  %4501 = vrot.lane.b32.xlu0 %v4432, 64
  %v4502 = vpop.permute.xlu0 %4501
  %4503 = vrot.lane.b32.xlu0 %v4435, 64
  %v4504 = vpop.permute.xlu0 %4503
  %4505 = vrot.lane.b32.xlu0 %v4438, 64
  %v4506 = vpop.permute.xlu0 %4505
  %4507 = vrot.lane.b32.xlu0 %v4441, 64
  %v4508 = vpop.permute.xlu0 %4507
  %v4509 = vmul.f32 %v4491, %v4498
  %v4510 = vmul.f32 %v4492, %v4500
  %v4511 = vmul.f32 %v4493, %v4502
  %v4512 = vmul.f32 %v4494, %v4504
  %v4513 = vmul.f32 %v4495, %v4506
  %v4514 = vmul.f32 %v4496, %v4508
  %4515 = vmatpush.msra.mxu0 %v2397
  %4516 = vmatpush.msra.mxu0 %v2396
  %4517 = vmatpush.msra.mxu0 %v2395
  %4518 = vmatpush.msra.mxu0 %v2394
  %4519 = vmatpush.msra.mxu0 %v2393
  %4520 = vmatpush.msra.mxu0 %v2392
  %4521 = vmatpush.msra.mxu0 %v2391
  %4522 = vmatpush.msra.mxu0 %v2390
  %4523 = vmatpush.msra.mxu0 %v2389
  %4524 = vmatpush.msra.mxu0 %v2388
  %4525 = vmatpush.msra.mxu0 %v2387
  %4526 = vmatpush.msra.mxu0 %v2386
  %4527 = vmatpush.msra.mxu0 %v2385
  %4528 = vmatpush.msra.mxu0 %v2384
  %4529 = vmatpush.msra.mxu0 %v2383
  %4530 = vmatpush.msra.mxu0 %v2382
  %4531 = vmatmul.f32.gmra.mxu0 %v4509
  %v4532 = vpop.f32.mrf.mxu0
  %v4533 = vadd.f32 0.0, %v4532
  %4534 = vmatmul.f32.gmra.mxu0 %v4510
  %v4535 = vpop.f32.mrf.mxu0
  %v4536 = vadd.f32 0.0, %v4535
  %4537 = vmatmul.f32.gmra.mxu0 %v4511
  %v4538 = vpop.f32.mrf.mxu0
  %v4539 = vadd.f32 0.0, %v4538
  %4540 = vmatmul.f32.gmra.mxu0 %v4512
  %v4541 = vpop.f32.mrf.mxu0
  %v4542 = vadd.f32 0.0, %v4541
  %4543 = vmatmul.f32.gmra.mxu0 %v4513
  %v4544 = vpop.f32.mrf.mxu0
  %v4545 = vadd.f32 0.0, %v4544
  %4546 = vmatmul.f32.gmra.mxu0 %v4514
  %v4547 = vpop.f32.mrf.mxu0
  %v4548 = vadd.f32 0.0, %v4547
  %4549 = vdwg.mxu0
  %v4550 = vadd.f32 %v4274, %v4533
  %v4551 = vadd.f32 %v4275, %v4536
  %v4552 = vadd.f32 %v4276, %v4539
  %v4553 = vadd.f32 %v4277, %v4542
  %v4554 = vadd.f32 %v4278, %v4545
  %v4555 = vadd.f32 %v4279, %v4548
  %v4556 = vld [vmem:[%s6 + $0x4] sm:$0x1]
  %v4557 = vmul.f32 %v4550, %v4550
  %v4558 = vmul.f32 %v4551, %v4551
  %v4559 = vmul.f32 %v4552, %v4552
  %v4560 = vmul.f32 %v4553, %v4553
  %v4561 = vmul.f32 %v4554, %v4554
  %v4562 = vmul.f32 %v4555, %v4555
  %v4563 = vsel %vm210, %v4557, 0.0
  %4564 = vadd.xlane.f32.xlu0 %v4563
  %v4565 = vpop.xlane.xlu0 %4564
  %v4566 = vsel %vm210, %v4558, 0.0
  %4567 = vadd.xlane.f32.xlu0 %v4566
  %v4568 = vpop.xlane.xlu0 %4567
  %v4569 = vsel %vm210, %v4559, 0.0
  %4570 = vadd.xlane.f32.xlu0 %v4569
  %v4571 = vpop.xlane.xlu0 %4570
  %v4572 = vsel %vm210, %v4560, 0.0
  %4573 = vadd.xlane.f32.xlu0 %v4572
  %v4574 = vpop.xlane.xlu0 %4573
  %v4575 = vsel %vm210, %v4561, 0.0
  %4576 = vadd.xlane.f32.xlu0 %v4575
  %v4577 = vpop.xlane.xlu0 %4576
  %v4578 = vsel %vm210, %v4562, 0.0
  %4579 = vadd.xlane.f32.xlu0 %v4578
  %v4580 = vpop.xlane.xlu0 %4579
  %v4581 = vmul.f32 %v4565, %v235
  %v4582 = vmul.f32 %v4568, %v235
  %v4583 = vmul.f32 %v4571, %v235
  %v4584 = vmul.f32 %v4574, %v235
  %v4585 = vmul.f32 %v4577, %v235
  %v4586 = vmul.f32 %v4580, %v235
  %v4587 = vadd.f32 %v4581, 1e-06
  %v4588 = vadd.f32 %v4582, 1e-06
  %v4589 = vadd.f32 %v4583, 1e-06
  %v4590 = vadd.f32 %v4584, 1e-06
  %v4591 = vadd.f32 %v4585, 1e-06
  %v4592 = vadd.f32 %v4586, 1e-06
  %v4593 = vrsqrt.pop %v4587
  %v4594 = vmul.f32 %v4593, %v4587
  %v4595 = vmul.f32 %v4594, %v4593
  %v4596 = vmul.f32 0.5, %v4595
  %v4597 = vsub.f32 1.5, %v4596
  %v4598 = vmul.f32 %v4593, %v4597
  %vm4599 = vweird.f32 %v4587
  %vm4600 = vweird.f32 %v4593
  %vm4601 = vmor %vm4599, %vm4600
  %v4602 = vsel %vm4601, %v4593, %v4598
  %v4603 = vrsqrt.pop %v4588
  %v4604 = vmul.f32 %v4603, %v4588
  %v4605 = vmul.f32 %v4604, %v4603
  %v4606 = vmul.f32 0.5, %v4605
  %v4607 = vsub.f32 1.5, %v4606
  %v4608 = vmul.f32 %v4603, %v4607
  %vm4609 = vweird.f32 %v4588
  %vm4610 = vweird.f32 %v4603
  %vm4611 = vmor %vm4609, %vm4610
  %v4612 = vsel %vm4611, %v4603, %v4608
  %v4613 = vrsqrt.pop %v4589
  %v4614 = vmul.f32 %v4613, %v4589
  %v4615 = vmul.f32 %v4614, %v4613
  %v4616 = vmul.f32 0.5, %v4615
  %v4617 = vsub.f32 1.5, %v4616
  %v4618 = vmul.f32 %v4613, %v4617
  %vm4619 = vweird.f32 %v4589
  %vm4620 = vweird.f32 %v4613
  %vm4621 = vmor %vm4619, %vm4620
  %v4622 = vsel %vm4621, %v4613, %v4618
  %v4623 = vrsqrt.pop %v4590
  %v4624 = vmul.f32 %v4623, %v4590
  %v4625 = vmul.f32 %v4624, %v4623
  %v4626 = vmul.f32 0.5, %v4625
  %v4627 = vsub.f32 1.5, %v4626
  %v4628 = vmul.f32 %v4623, %v4627
  %vm4629 = vweird.f32 %v4590
  %vm4630 = vweird.f32 %v4623
  %vm4631 = vmor %vm4629, %vm4630
  %v4632 = vsel %vm4631, %v4623, %v4628
  %v4633 = vrsqrt.pop %v4591
  %v4634 = vmul.f32 %v4633, %v4591
  %v4635 = vmul.f32 %v4634, %v4633
  %v4636 = vmul.f32 0.5, %v4635
  %v4637 = vsub.f32 1.5, %v4636
  %v4638 = vmul.f32 %v4633, %v4637
  %vm4639 = vweird.f32 %v4591
  %vm4640 = vweird.f32 %v4633
  %vm4641 = vmor %vm4639, %vm4640
  %v4642 = vsel %vm4641, %v4633, %v4638
  %v4643 = vrsqrt.pop %v4592
  %v4644 = vmul.f32 %v4643, %v4592
  %v4645 = vmul.f32 %v4644, %v4643
  %v4646 = vmul.f32 0.5, %v4645
  %v4647 = vsub.f32 1.5, %v4646
  %v4648 = vmul.f32 %v4643, %v4647
  %vm4649 = vweird.f32 %v4592
  %vm4650 = vweird.f32 %v4643
  %vm4651 = vmor %vm4649, %vm4650
  %v4652 = vsel %vm4651, %v4643, %v4648
  %v4653 = vmul.f32 %v4550, %v4602
  %v4654 = vmul.f32 %v4551, %v4612
  %v4655 = vmul.f32 %v4552, %v4622
  %v4656 = vmul.f32 %v4553, %v4632
  %v4657 = vmul.f32 %v4554, %v4642
  %v4658 = vmul.f32 %v4555, %v4652
  %v4659 = vperm.slane %v4556, 0
  %v4660 = vmul.f32 %v4653, %v4659
  %v4661 = vmul.f32 %v4654, %v4659
  %v4662 = vmul.f32 %v4655, %v4659
  %v4663 = vmul.f32 %v4656, %v4659
  %v4664 = vmul.f32 %v4657, %v4659
  %v4665 = vmul.f32 %v4658, %v4659
  %v4666 = vsel %vm210, %v4660, 0.0
  %v4667 = vrot.slane %v4666, 4
  %v4668 = vadd.f32 %v4666, %v4667
  %v4669 = vrot.slane %v4668, 2
  %v4670 = vadd.f32 %v4668, %v4669
  %v4671 = vrot.slane %v4670, 1
  %v4672 = vadd.f32 %v4670, %v4671
  %v4673 = vsel %vm210, %v4661, 0.0
  %v4674 = vrot.slane %v4673, 4
  %v4675 = vadd.f32 %v4673, %v4674
  %v4676 = vrot.slane %v4675, 2
  %v4677 = vadd.f32 %v4675, %v4676
  %v4678 = vrot.slane %v4677, 1
  %v4679 = vadd.f32 %v4677, %v4678
  %v4680 = vsel %vm210, %v4662, 0.0
  %v4681 = vrot.slane %v4680, 4
  %v4682 = vadd.f32 %v4680, %v4681
  %v4683 = vrot.slane %v4682, 2
  %v4684 = vadd.f32 %v4682, %v4683
  %v4685 = vrot.slane %v4684, 1
  %v4686 = vadd.f32 %v4684, %v4685
  %v4687 = vsel %vm210, %v4663, 0.0
  %v4688 = vrot.slane %v4687, 4
  %v4689 = vadd.f32 %v4687, %v4688
  %v4690 = vrot.slane %v4689, 2
  %v4691 = vadd.f32 %v4689, %v4690
  %v4692 = vrot.slane %v4691, 1
  %v4693 = vadd.f32 %v4691, %v4692
  %v4694 = vsel %vm210, %v4664, 0.0
  %v4695 = vrot.slane %v4694, 4
  %v4696 = vadd.f32 %v4694, %v4695
  %v4697 = vrot.slane %v4696, 2
  %v4698 = vadd.f32 %v4696, %v4697
  %v4699 = vrot.slane %v4698, 1
  %v4700 = vadd.f32 %v4698, %v4699
  %v4701 = vsel %vm210, %v4665, 0.0
  %v4702 = vrot.slane %v4701, 4
  %v4703 = vadd.f32 %v4701, %v4702
  %v4704 = vrot.slane %v4703, 2
  %v4705 = vadd.f32 %v4703, %v4704
  %v4706 = vrot.slane %v4705, 1
  %v4707 = vadd.f32 %v4705, %v4706
  %v4708 = vrcp.pop 8.0
  %v4709 = vmul.f32 8.0, %v4708
  %v4710 = vsub.f32 1.0, %v4709
  %v4711 = vmul.f32 %v4708, %v4710
  %v4712 = vadd.f32 %v4708, %v4711
  %vm4713 = vweird.f32 %v4708
  %v4714 = vsel %vm4713, %v4708, %v4712
  %v4715 = vmul.f32 %v4672, %v4714
  %v4716 = vmul.f32 %v4679, %v4714
  %v4717 = vmul.f32 %v4686, %v4714
  %v4718 = vmul.f32 %v4693, %v4714
  %v4719 = vmul.f32 %v4700, %v4714
  %v4720 = vmul.f32 %v4707, %v4714
  %v4721 = vld [vmem:[%s6 + $0x5] sm:$0x1]
  %v4722 = vperm.slane %v4721, 0
  %v4723 = vmul.f32 %v4715, %v4722
  %v4724 = vmul.f32 %v4716, %v4722
  %v4727 = vrot.slane %v4724, 7
  %vm4728 = vcmask 1041409
  %v4729 = vsel %vm4728, %v4727, %v4723
  %vm4731 = vcmask 254976
  %v4732 = vsel %vm4731, %v4729, 0.0
  %4733 = vadd.xlane.f32.xlu0 %v4732
  %v4734 = vpop.xlane.xlu0 %4733
  %v4735 = vld [vmem:[%s6 + $0x6] sm:$0x1]
  %v4736 = vperm.slane %v4735, 0
  %v4737 = vmul.f32 %v4717, %v4736
  %v4738 = vmul.f32 %v4718, %v4736
  %v4741 = vrot.slane %v4738, 7
  %v4742 = vsel %vm4728, %v4741, %v4737
  %v4744 = vsel %vm4731, %v4742, 0.0
  %4745 = vadd.xlane.f32.xlu0 %v4744
  %v4746 = vpop.xlane.xlu0 %4745
  %v4747 = vld [vmem:[%s6 + $0x7] sm:$0x1]
  %v4748 = vperm.slane %v4747, 0
  %v4749 = vmul.f32 %v4719, %v4748
  %v4750 = vmul.f32 %v4720, %v4748
  %v4753 = vrot.slane %v4750, 7
  %v4754 = vsel %vm4728, %v4753, %v4749
  %v4756 = vsel %vm4731, %v4754, 0.0
  %4757 = vadd.xlane.f32.xlu0 %v4756
  %v4758 = vpop.xlane.xlu0 %4757
  %v4759 = vadd.f32 %v4734, %v4746
  %v4760 = vadd.f32 %v4759, %v4758
  %v4761 = vld [vmem:[%s6 + $0x8] sm:$0x1]
  %v4762 = vperm.slane %v4761, 0
  %v4763 = vadd.f32 %v4760, %v4762
  %vm4764 = vcmask 1024
  %4765 = vst.msk [vmem:[%s7] sm:$0x3] %vm4764, %v4763
  // Predicated region
  $region30: #{preference_model.1} parent=0 // pred_check
    _
  $region31: #{preference_model.1} parent=0 // pred_check_branch
    %4767 = sbr.rel (0) target = $region33
  $region32: #{preference_model.1} parent=0 // pred_region
    _
  $region33: #{preference_model.1} parent=0 // pred_fallthru
    _
  // Predicated region
  $region34: #{preference_model.1} parent=0 // pred_check
    _
  $region35: #{preference_model.1} parent=0 // pred_check_branch
    %4769 = sbr.rel (0) target = $region37
  $region36: #{preference_model.1} parent=0 // pred_region
    _
  $region37: #{preference_model.1} parent=0 // pred_fallthru
    _

</llo_original>
